<compile_context>
chip_gen: v6e
topology: v6e:2x2x1
jax: 0.10.0
libtpu: 0.0.40
codegen_flags: <defaults>
</compile_context>

<pallas_src>
import functools

import jax
import jax.numpy as jnp
from jax.experimental import pallas as pl
from jax.experimental.pallas import tpu as pltpu

BN_EPS = 1e-5  # torch BatchNorm default


def _full_spec(shape):
    # Whole-array block, grid-less single invocation (everything fits VMEM).
    return pl.BlockSpec(shape, lambda: tuple(0 for _ in shape))


def _batchnorm(acc, gamma, beta):
    """Training-mode BatchNorm over rows (axis 0), per-channel (lanes).

    Centered two-pass variance instead of E[x^2]-E[x]^2 to avoid catastrophic
    cancellation on post-ReLU (nonzero-mean) activations."""
    m = acc.shape[0]
    mean = jnp.sum(acc, axis=0, keepdims=True) * (1.0 / m)
    d = acc - mean
    var = jnp.sum(d * d, axis=0, keepdims=True) * (1.0 / m)
    inv = jax.lax.rsqrt(var + BN_EPS)
    return d * (gamma * inv) + beta


# ---------------------------------------------------------------------------
# Fully fused network kernel.
# Activation representations inside the kernel:
#   'A': zero-padded plane  [B, H+2, W+2, C]
#   'B': parity planes of the zero-padded plane
#        [4, B, (H+2)//2, (W+2)//2, C],  plane (pi, pj) holds padded[2r+pi, 2s+pj]
# A layer that feeds a stride-2 conv (directly or through stride-1 layers)
# produces rep 'B' so all loads/stores are contiguous windows.
# ---------------------------------------------------------------------------


def _make_fused_kernel(B, channels, strides, hs, ws, rep, n_fc):
    n_conv = len(strides)
    n_in = 1 + 3 * (n_conv + n_fc)

    def kernel(*refs):
        in_refs = refs[:n_in]
        out_ref = refs[n_in]
        scratches = refs[n_in + 1:]

        # ---- halo-only zeroing of intermediate activation scratches --------
        # (interiors are fully overwritten by the producing layer's stores)
        for li, scr in enumerate(scratches):
            C = channels[li + 1]
            if rep[li + 1] == 'B':
                PH, PW = scr.shape[2], scr.shape[3]
                for pi in (0, 1):
                    for pj in (0, 1):
                        p = pi * 2 + pj
                        rb = 0 if pi == 0 else PH - 1
                        cb = 0 if pj == 0 else PW - 1
                        scr[p, :, rb:rb + 1, :, :] = jnp.zeros(
                            (B, 1, PW, C), scr.dtype)
                        scr[p, :, :, cb:cb + 1, :] = jnp.zeros(
                            (B, PH, 1, C), scr.dtype)
            else:
                Hp, Wp = scr.shape[1], scr.shape[2]
                scr[:, 0:1, :, :] = jnp.zeros((B, 1, Wp, C), scr.dtype)
                scr[:, Hp - 1:Hp, :, :] = jnp.zeros((B, 1, Wp, C), scr.dtype)
                scr[:, :, 0:1, :] = jnp.zeros((B, Hp, 1, C), scr.dtype)
                scr[:, :, Wp - 1:Wp, :] = jnp.zeros((B, Hp, 1, C), scr.dtype)

        # ---- conv stack: each layer is ONE im2col matmul --------------------
        cur = in_refs[0]
        conv_out = None
        for li in range(n_conv):
            w_ref = in_refs[1 + 3 * li]          # [9*Cin, Cout] bf16 (K-folded)
            g_ref = in_refs[2 + 3 * li]          # [1, Cout] f32
            b_ref = in_refs[3 + 3 * li]          # [1, Cout] f32
            Cin, Cout = channels[li], channels[li + 1]
            Ho, Wo = hs[li + 1], ws[li + 1]
            irep, orep = rep[li], rep[li + 1]
            last = li == n_conv - 1

            if orep == 'B':
                groups = [(0, 0), (0, 1), (1, 0), (1, 1)]
                GH, GW = Ho // 2, Wo // 2
            else:
                groups = [None]
                GH, GW = Ho, Wo
            Mg = B * GH * GW

            # im2col: 9 shifted windows concatenated along K (lanes) so the
            # 3x3 taps fold into the contraction; output-parity groups are
            # stacked along M so the whole layer is a single MXU call.
            group_patches = []
            for grp in groups:
                windows = []
                for ti in range(3):
                    for tj in range(3):
                        if irep == 'A':
                            # rep-'A' input implies stride 1 and rep-'A' output
                            win = cur[:, ti:ti + GH, tj:tj + GW, :]
                        else:
                            if grp is None:            # this layer has stride 2
                                ai, aj = ti, tj
                            else:                      # stride-1, per out-parity
                                ai, aj = grp[0] + ti, grp[1] + tj
                            pidx = (ai % 2) * 2 + (aj % 2)
                            r0, c0 = ai // 2, aj // 2
                            win = cur[pidx, :, r0:r0 + GH, c0:c0 + GW, :]
                        windows.append(win)
                group_patches.append(
                    jnp.concatenate(windows, axis=-1).reshape(Mg, 9 * Cin))
            patch = (group_patches[0] if len(group_patches) == 1
                     else jnp.concatenate(group_patches, axis=0))

            acc = jnp.dot(patch.astype(jnp.bfloat16), w_ref[...],
                          preferred_element_type=jnp.float32)
            y = _batchnorm(acc, g_ref[...], b_ref[...])   # rows == B*Ho*Wo

            if last:
                conv_out = y                              # [B*Ho*Wo, Cout] f32
            else:
                h = jnp.maximum(y, 0.0)
                dst = scratches[li]
                if orep == 'A':
                    dst[:, 1:Ho + 1, 1:Wo + 1, :] = h.reshape(B, Ho, Wo, Cout)
                else:
                    h5 = h.reshape(len(groups), B, GH, GW, Cout)
                    for gi, (ph, pw) in enumerate(groups):
                        pidx = ((ph + 1) % 2) * 2 + ((pw + 1) % 2)
                        r0, c0 = (ph + 1) // 2, (pw + 1) // 2
                        dst[pidx, :, r0:r0 + GH, c0:c0 + GW, :] = h5[gi]
                cur = dst

        # ---- conv -> FC handoff: in-VMEM lane-dense flatten (no HBM trip) ---
        OHn, OWn, Cn = hs[n_conv], ws[n_conv], channels[n_conv]
        P = OHn * OWn
        feat3 = conv_out.reshape(B, P, Cn)                # rows were (b, oh, ow)
        feat = jnp.concatenate([feat3[:, p, :] for p in range(P)], axis=-1)
        h = feat.astype(jnp.bfloat16)                     # [B, P*Cn]

        # ---- FC stack -------------------------------------------------------
        base = 1 + 3 * n_conv
        for i in range(n_fc):
            w = in_refs[base + 3 * i][...]                # [d_in, d_out] bf16
            g = in_refs[base + 3 * i + 1][...]            # [1, d_out] f32
            b = in_refs[base + 3 * i + 2][...]
            y = jnp.dot(h, w, preferred_element_type=jnp.float32)
            y = _batchnorm(y, g, b)
            if i < n_fc - 1:
                h = jnp.maximum(y, 0.0).astype(jnp.bfloat16)
            else:
                out_ref[...] = y

    return kernel


def network_forward(x_nchw, conv_params, fc_params, channels, strides):
    B, C0, H, W = x_nchw.shape
    n_conv = len(strides)
    n_fc = len(fc_params)
    assert len(channels) == n_conv + 1 and channels[0] == C0

    hs, ws = [H], [W]
    for st in strides:
        assert st in (1, 2)
        if st == 2:
            assert hs[-1] % 2 == 0 and ws[-1] % 2 == 0
        hs.append(hs[-1] // st)
        ws.append(ws[-1] // st)

    # Activation representations (rep[n_conv] is the flat kernel output).
    rep = ['A'] * (n_conv + 1)
    for i in range(n_conv - 1, -1, -1):
        rep[i] = 'B' if (strides[i] == 2 or rep[i + 1] == 'B') else 'A'
    for i in range(n_conv):
        assert not (strides[i] == 2 and rep[i + 1] == 'B'), \
            "at most one subsample (stride-2) point per fused conv stack"

    # Input prep (cheap, size-preserving): NCHW->NHWC, zero pad, parity split.
    x = jnp.transpose(x_nchw, (0, 2, 3, 1)).astype(jnp.float32)
    xpad = jnp.pad(x, ((0, 0), (1, 1), (1, 1), (0, 0)))
    if rep[0] == 'B':
        x_in = jnp.stack([xpad[:, pi::2, pj::2, :]
                          for pi in (0, 1) for pj in (0, 1)], axis=0)
    else:
        x_in = xpad

    inputs = [x_in]
    for (wp, g, b) in conv_params:
        inputs += [wp, g, b]
    for (wp, g, b) in fc_params:
        inputs += [wp, g, b]

    def _nbytes(shape, dtype):
        n = 1
        for s in shape:
            n *= int(s)
        return n * jnp.dtype(dtype).itemsize

    scratch_shapes = []
    scr_bytes = 0
    for i in range(n_conv - 1):
        Hp, Wp, C = hs[i + 1] + 2, ws[i + 1] + 2, channels[i + 1]
        if rep[i + 1] == 'A':
            shape = (B, Hp, Wp, C)
        else:
            shape = (4, B, Hp // 2, Wp // 2, C)
        scr_bytes += _nbytes(shape, jnp.float32)
        scratch_shapes.append(pltpu.VMEM(shape, jnp.float32))

    d_out = fc_params[-1][0].shape[1]
    out_shape = jax.ShapeDtypeStruct((B, d_out), jnp.float32)

    # Explicit VMEM budget (v7x: 64 MiB physical, 32 MiB default scoped limit).
    io_bytes = sum(_nbytes(a.shape, a.dtype) for a in inputs)
    io_bytes += _nbytes(out_shape.shape, out_shape.dtype)
    vmem_limit = int(min(64 * 2 ** 20,
                         max(32 * 2 ** 20, 4 * (2 * io_bytes + scr_bytes))))

    kernel = _make_fused_kernel(B, tuple(channels), tuple(strides),
                                tuple(hs), tuple(ws), tuple(rep), n_fc)
    return pl.pallas_call(
        kernel,
        out_shape=out_shape,
        in_specs=[_full_spec(a.shape) for a in inputs],
        out_specs=_full_spec(out_shape.shape),
        scratch_shapes=scratch_shapes,
        compiler_params=pltpu.CompilerParams(vmem_limit_bytes=vmem_limit),
    )(*inputs)


# ---------------------------------------------------------------------------
# Parameters: raw init (torch-equivalent layouts) + one-time layout prep
# ---------------------------------------------------------------------------


def init_params(key, num_channels, sizes_fc):
    params = {"conv_w": [], "conv_bn": [], "fc_w": [], "fc_bn": []}
    n_conv = len(num_channels) - 1
    n_fc = len(sizes_fc) - 1
    keys = jax.random.split(key, n_conv + n_fc)
    k = 0
    for i in range(n_conv):
        cin, cout = num_channels[i], num_channels[i + 1]
        w = jax.random.normal(keys[k], (cout, cin, 3, 3), jnp.float32)
        params["conv_w"].append(w * (2.0 / (cin * 9)) ** 0.5)
        # Conv bias omitted: BN's mean subtraction cancels a per-channel bias.
        params["conv_bn"].append((jnp.ones((cout,), jnp.float32),
                                  jnp.zeros((cout,), jnp.float32)))
        k += 1
    for i in range(n_fc):
        din, dout = sizes_fc[i], sizes_fc[i + 1]
        w = jax.random.normal(keys[k], (din, dout), jnp.float32)
        params["fc_w"].append(w * (2.0 / din) ** 0.5)  # MSALinearLayer: no bias
        params["fc_bn"].append((jnp.ones((dout,), jnp.float32),
                                jnp.zeros((dout,), jnp.float32)))
        k += 1
    return params


def prepare_params(params, num_channels, conv_out_hw, sizes_fc):
    """One-time layout work (hoisted out of forward):
       * conv weights -> K-folded [9*Cin, Cout] bf16 (taps along contraction)
       * BN params -> [1, C] f32
       * FC weights -> bf16; the FIRST FC weight's rows are permuted from the
         PyTorch NCHW flatten order (c*P + p) to the kernel's NHWC flatten
         order (p*C + c) so no activation transpose is needed per forward."""
    oh, ow = conv_out_hw
    c_last = num_channels[-1]
    p = oh * ow
    assert sizes_fc[0] == c_last * p

    conv_prep = []
    for w, (g, b) in zip(params["conv_w"], params["conv_bn"]):
        cout, cin = w.shape[0], w.shape[1]
        # [Cout, Cin, 3, 3] -> [ti, tj, Cin, Cout] -> [9*Cin, Cout]
        wk = jnp.transpose(w, (2, 3, 1, 0)).reshape(9 * cin, cout)
        conv_prep.append((wk.astype(jnp.bfloat16),
                          g.reshape(1, cout), b.reshape(1, cout)))

    fc_prep = []
    for i, (w, (g, b)) in enumerate(zip(params["fc_w"], params["fc_bn"])):
        if i == 0:
            dout = w.shape[1]
            w = jnp.transpose(w.reshape(c_last, p, dout),
                              (1, 0, 2)).reshape(p * c_last, dout)
        fc_prep.append((w.astype(jnp.bfloat16),
                        g.reshape(1, -1), b.reshape(1, -1)))
    return {"conv": conv_prep, "fc": fc_prep}


def forward(prep, x_nchw, channels, strides):
    return network_forward(x_nchw, prep["conv"], prep["fc"], channels, strides)


if __name__ == "__main__":
    # Config consistent with BasicVarConvNet.__init__:
    #   num_conv=2, num_channels=[4, 8, 16], subsample_points=[1],
    #   num_fc=2, sizes_fc=[16*8*8, 32, 10], batchnorm=True
    num_channels = [4, 8, 16]
    subsample_points = (1,)
    sizes_fc = [16 * 8 * 8, 32, 10]
    B, H, W = 2, 16, 16
    n_conv = len(num_channels) - 1
    strides = tuple(2 if i in subsample_points else 1 for i in range(n_conv))

    key = jax.random.PRNGKey(0)
    k_par, k_x = jax.random.split(key)
    params = init_params(k_par, num_channels, sizes_fc)

    oh, ow = H, W
    for st in strides:
        oh, ow = oh // st, ow // st
    prep = prepare_params(params, num_channels, (oh, ow), sizes_fc)

    x = jax.random.normal(k_x, (B, num_channels[0], H, W), jnp.float32)  # NCHW

    fwd = jax.jit(functools.partial(forward,
                                    channels=tuple(num_channels),
                                    strides=strides))
    out = jax.block_until_ready(fwd(prep, x))
    assert out.shape == (B, sizes_fc[-1]), out.shape
    print("KERNEL_OK")
</pallas_src>

<mosaic_0001>
module attributes {stable_mosaic.version = 11 : i64} {
  func.func @kernel(%arg0: memref<4x2x9x9x4xf32, #tpu.memory_space<vmem>>, %arg1: memref<36x8xbf16, #tpu.memory_space<vmem>>, %arg2: memref<1x8xf32, #tpu.memory_space<vmem>>, %arg3: memref<1x8xf32, #tpu.memory_space<vmem>>, %arg4: memref<72x16xbf16, #tpu.memory_space<vmem>>, %arg5: memref<1x16xf32, #tpu.memory_space<vmem>>, %arg6: memref<1x16xf32, #tpu.memory_space<vmem>>, %arg7: memref<1024x32xbf16, #tpu.memory_space<vmem>>, %arg8: memref<1x32xf32, #tpu.memory_space<vmem>>, %arg9: memref<1x32xf32, #tpu.memory_space<vmem>>, %arg10: memref<32x10xbf16, #tpu.memory_space<vmem>>, %arg11: memref<1x10xf32, #tpu.memory_space<vmem>>, %arg12: memref<1x10xf32, #tpu.memory_space<vmem>>, %arg13: memref<2x10xf32, #tpu.memory_space<vmem>>, %arg14: memref<4x2x9x9x8xf32, #tpu.memory_space<vmem>>) attributes {dimension_semantics = [], scalar_prefetch = 0 : i64, scratch_operands = 1 : i64, tpu.core_type = #tpu.core_type<tc>} {
    %cst = arith.constant 0.000000e+00 : f32
    %0 = vector.broadcast %cst : f32 to vector<2x1x9x8xf32>
    %c0 = arith.constant 0 : index
    %c0_0 = arith.constant 0 : index
    %c0_1 = arith.constant 0 : index
    %c0_2 = arith.constant 0 : index
    %c0_3 = arith.constant 0 : index
    %1 = vector.load %arg14[%c0, %c0_0, %c0_1, %c0_2, %c0_3] : memref<4x2x9x9x8xf32, #tpu.memory_space<vmem>>, vector<1x2x1x9x8xf32>
    %2 = vector.shape_cast %1 : vector<1x2x1x9x8xf32> to vector<2x1x9x8xf32>
    %3 = vector.shape_cast %0 : vector<2x1x9x8xf32> to vector<1x2x1x9x8xf32>
    tpu.vector_store %arg14[%c0, %c0_0, %c0_1, %c0_2, %c0_3], %3 {strides = array<i32>} : memref<4x2x9x9x8xf32, #tpu.memory_space<vmem>>, vector<1x2x1x9x8xf32>,
    %cst_4 = arith.constant 0.000000e+00 : f32
    %4 = vector.broadcast %cst_4 : f32 to vector<2x9x1x8xf32>
    %c0_5 = arith.constant 0 : index
    %c0_6 = arith.constant 0 : index
    %c0_7 = arith.constant 0 : index
    %c0_8 = arith.constant 0 : index
    %c0_9 = arith.constant 0 : index
    %5 = vector.load %arg14[%c0_5, %c0_6, %c0_7, %c0_8, %c0_9] : memref<4x2x9x9x8xf32, #tpu.memory_space<vmem>>, vector<1x2x9x1x8xf32>
    %6 = vector.shape_cast %5 : vector<1x2x9x1x8xf32> to vector<2x9x1x8xf32>
    %7 = vector.shape_cast %4 : vector<2x9x1x8xf32> to vector<1x2x9x1x8xf32>
    tpu.vector_store %arg14[%c0_5, %c0_6, %c0_7, %c0_8, %c0_9], %7 {strides = array<i32>} : memref<4x2x9x9x8xf32, #tpu.memory_space<vmem>>, vector<1x2x9x1x8xf32>,
    %cst_10 = arith.constant 0.000000e+00 : f32
    %8 = vector.broadcast %cst_10 : f32 to vector<2x1x9x8xf32>
    %c1 = arith.constant 1 : index
    %c0_11 = arith.constant 0 : index
    %c0_12 = arith.constant 0 : index
    %c0_13 = arith.constant 0 : index
    %c0_14 = arith.constant 0 : index
    %9 = vector.load %arg14[%c1, %c0_11, %c0_12, %c0_13, %c0_14] : memref<4x2x9x9x8xf32, #tpu.memory_space<vmem>>, vector<1x2x1x9x8xf32>
    %10 = vector.shape_cast %9 : vector<1x2x1x9x8xf32> to vector<2x1x9x8xf32>
    %11 = vector.shape_cast %8 : vector<2x1x9x8xf32> to vector<1x2x1x9x8xf32>
    tpu.vector_store %arg14[%c1, %c0_11, %c0_12, %c0_13, %c0_14], %11 {strides = array<i32>} : memref<4x2x9x9x8xf32, #tpu.memory_space<vmem>>, vector<1x2x1x9x8xf32>,
    %cst_15 = arith.constant 0.000000e+00 : f32
    %12 = vector.broadcast %cst_15 : f32 to vector<2x9x1x8xf32>
    %c1_16 = arith.constant 1 : index
    %c0_17 = arith.constant 0 : index
    %c0_18 = arith.constant 0 : index
    %c8 = arith.constant 8 : index
    %c0_19 = arith.constant 0 : index
    %13 = vector.load %arg14[%c1_16, %c0_17, %c0_18, %c8, %c0_19] : memref<4x2x9x9x8xf32, #tpu.memory_space<vmem>>, vector<1x2x9x1x8xf32>
    %14 = vector.shape_cast %13 : vector<1x2x9x1x8xf32> to vector<2x9x1x8xf32>
    %15 = vector.shape_cast %12 : vector<2x9x1x8xf32> to vector<1x2x9x1x8xf32>
    tpu.vector_store %arg14[%c1_16, %c0_17, %c0_18, %c8, %c0_19], %15 {strides = array<i32>} : memref<4x2x9x9x8xf32, #tpu.memory_space<vmem>>, vector<1x2x9x1x8xf32>,
    %cst_20 = arith.constant 0.000000e+00 : f32
    %16 = vector.broadcast %cst_20 : f32 to vector<2x1x9x8xf32>
    %c2 = arith.constant 2 : index
    %c0_21 = arith.constant 0 : index
    %c8_22 = arith.constant 8 : index
    %c0_23 = arith.constant 0 : index
    %c0_24 = arith.constant 0 : index
    %17 = vector.load %arg14[%c2, %c0_21, %c8_22, %c0_23, %c0_24] : memref<4x2x9x9x8xf32, #tpu.memory_space<vmem>>, vector<1x2x1x9x8xf32>
    %18 = vector.shape_cast %17 : vector<1x2x1x9x8xf32> to vector<2x1x9x8xf32>
    %19 = vector.shape_cast %16 : vector<2x1x9x8xf32> to vector<1x2x1x9x8xf32>
    tpu.vector_store %arg14[%c2, %c0_21, %c8_22, %c0_23, %c0_24], %19 {strides = array<i32>} : memref<4x2x9x9x8xf32, #tpu.memory_space<vmem>>, vector<1x2x1x9x8xf32>,
    %cst_25 = arith.constant 0.000000e+00 : f32
    %20 = vector.broadcast %cst_25 : f32 to vector<2x9x1x8xf32>
    %c2_26 = arith.constant 2 : index
    %c0_27 = arith.constant 0 : index
    %c0_28 = arith.constant 0 : index
    %c0_29 = arith.constant 0 : index
    %c0_30 = arith.constant 0 : index
    %21 = vector.load %arg14[%c2_26, %c0_27, %c0_28, %c0_29, %c0_30] : memref<4x2x9x9x8xf32, #tpu.memory_space<vmem>>, vector<1x2x9x1x8xf32>
    %22 = vector.shape_cast %21 : vector<1x2x9x1x8xf32> to vector<2x9x1x8xf32>
    %23 = vector.shape_cast %20 : vector<2x9x1x8xf32> to vector<1x2x9x1x8xf32>
    tpu.vector_store %arg14[%c2_26, %c0_27, %c0_28, %c0_29, %c0_30], %23 {strides = array<i32>} : memref<4x2x9x9x8xf32, #tpu.memory_space<vmem>>, vector<1x2x9x1x8xf32>,
    %cst_31 = arith.constant 0.000000e+00 : f32
    %24 = vector.broadcast %cst_31 : f32 to vector<2x1x9x8xf32>
    %c3 = arith.constant 3 : index
    %c0_32 = arith.constant 0 : index
    %c8_33 = arith.constant 8 : index
    %c0_34 = arith.constant 0 : index
    %c0_35 = arith.constant 0 : index
    %25 = vector.load %arg14[%c3, %c0_32, %c8_33, %c0_34, %c0_35] : memref<4x2x9x9x8xf32, #tpu.memory_space<vmem>>, vector<1x2x1x9x8xf32>
    %26 = vector.shape_cast %25 : vector<1x2x1x9x8xf32> to vector<2x1x9x8xf32>
    %27 = vector.shape_cast %24 : vector<2x1x9x8xf32> to vector<1x2x1x9x8xf32>
    tpu.vector_store %arg14[%c3, %c0_32, %c8_33, %c0_34, %c0_35], %27 {strides = array<i32>} : memref<4x2x9x9x8xf32, #tpu.memory_space<vmem>>, vector<1x2x1x9x8xf32>,
    %cst_36 = arith.constant 0.000000e+00 : f32
    %28 = vector.broadcast %cst_36 : f32 to vector<2x9x1x8xf32>
    %c3_37 = arith.constant 3 : index
    %c0_38 = arith.constant 0 : index
    %c0_39 = arith.constant 0 : index
    %c8_40 = arith.constant 8 : index
    %c0_41 = arith.constant 0 : index
    %29 = vector.load %arg14[%c3_37, %c0_38, %c0_39, %c8_40, %c0_41] : memref<4x2x9x9x8xf32, #tpu.memory_space<vmem>>, vector<1x2x9x1x8xf32>
    %30 = vector.shape_cast %29 : vector<1x2x9x1x8xf32> to vector<2x9x1x8xf32>
    %31 = vector.shape_cast %28 : vector<2x9x1x8xf32> to vector<1x2x9x1x8xf32>
    tpu.vector_store %arg14[%c3_37, %c0_38, %c0_39, %c8_40, %c0_41], %31 {strides = array<i32>} : memref<4x2x9x9x8xf32, #tpu.memory_space<vmem>>, vector<1x2x9x1x8xf32>,
    %c0_42 = arith.constant 0 : index
    %c0_43 = arith.constant 0 : index
    %c0_44 = arith.constant 0 : index
    %c0_45 = arith.constant 0 : index
    %c0_46 = arith.constant 0 : index
    %32 = vector.load %arg0[%c0_42, %c0_43, %c0_44, %c0_45, %c0_46] : memref<4x2x9x9x4xf32, #tpu.memory_space<vmem>>, vector<1x2x8x8x4xf32>
    %33 = vector.shape_cast %32 : vector<1x2x8x8x4xf32> to vector<2x8x8x4xf32>
    %c1_47 = arith.constant 1 : index
    %c0_48 = arith.constant 0 : index
    %c0_49 = arith.constant 0 : index
    %c0_50 = arith.constant 0 : index
    %c0_51 = arith.constant 0 : index
    %34 = vector.load %arg0[%c1_47, %c0_48, %c0_49, %c0_50, %c0_51] : memref<4x2x9x9x4xf32, #tpu.memory_space<vmem>>, vector<1x2x8x8x4xf32>
    %35 = vector.shape_cast %34 : vector<1x2x8x8x4xf32> to vector<2x8x8x4xf32>
    %c0_52 = arith.constant 0 : index
    %c0_53 = arith.constant 0 : index
    %c0_54 = arith.constant 0 : index
    %c1_55 = arith.constant 1 : index
    %c0_56 = arith.constant 0 : index
    %36 = vector.load %arg0[%c0_52, %c0_53, %c0_54, %c1_55, %c0_56] : memref<4x2x9x9x4xf32, #tpu.memory_space<vmem>>, vector<1x2x8x8x4xf32>
    %37 = vector.shape_cast %36 : vector<1x2x8x8x4xf32> to vector<2x8x8x4xf32>
    %c2_57 = arith.constant 2 : index
    %c0_58 = arith.constant 0 : index
    %c0_59 = arith.constant 0 : index
    %c0_60 = arith.constant 0 : index
    %c0_61 = arith.constant 0 : index
    %38 = vector.load %arg0[%c2_57, %c0_58, %c0_59, %c0_60, %c0_61] : memref<4x2x9x9x4xf32, #tpu.memory_space<vmem>>, vector<1x2x8x8x4xf32>
    %39 = vector.shape_cast %38 : vector<1x2x8x8x4xf32> to vector<2x8x8x4xf32>
    %c3_62 = arith.constant 3 : index
    %c0_63 = arith.constant 0 : index
    %c0_64 = arith.constant 0 : index
    %c0_65 = arith.constant 0 : index
    %c0_66 = arith.constant 0 : index
    %40 = vector.load %arg0[%c3_62, %c0_63, %c0_64, %c0_65, %c0_66] : memref<4x2x9x9x4xf32, #tpu.memory_space<vmem>>, vector<1x2x8x8x4xf32>
    %41 = vector.shape_cast %40 : vector<1x2x8x8x4xf32> to vector<2x8x8x4xf32>
    %c2_67 = arith.constant 2 : index
    %c0_68 = arith.constant 0 : index
    %c0_69 = arith.constant 0 : index
    %c1_70 = arith.constant 1 : index
    %c0_71 = arith.constant 0 : index
    %42 = vector.load %arg0[%c2_67, %c0_68, %c0_69, %c1_70, %c0_71] : memref<4x2x9x9x4xf32, #tpu.memory_space<vmem>>, vector<1x2x8x8x4xf32>
    %43 = vector.shape_cast %42 : vector<1x2x8x8x4xf32> to vector<2x8x8x4xf32>
    %c0_72 = arith.constant 0 : index
    %c0_73 = arith.constant 0 : index
    %c1_74 = arith.constant 1 : index
    %c0_75 = arith.constant 0 : index
    %c0_76 = arith.constant 0 : index
    %44 = vector.load %arg0[%c0_72, %c0_73, %c1_74, %c0_75, %c0_76] : memref<4x2x9x9x4xf32, #tpu.memory_space<vmem>>, vector<1x2x8x8x4xf32>
    %45 = vector.shape_cast %44 : vector<1x2x8x8x4xf32> to vector<2x8x8x4xf32>
    %c1_77 = arith.constant 1 : index
    %c0_78 = arith.constant 0 : index
    %c1_79 = arith.constant 1 : index
    %c0_80 = arith.constant 0 : index
    %c0_81 = arith.constant 0 : index
    %46 = vector.load %arg0[%c1_77, %c0_78, %c1_79, %c0_80, %c0_81] : memref<4x2x9x9x4xf32, #tpu.memory_space<vmem>>, vector<1x2x8x8x4xf32>
    %47 = vector.shape_cast %46 : vector<1x2x8x8x4xf32> to vector<2x8x8x4xf32>
    %c0_82 = arith.constant 0 : index
    %c0_83 = arith.constant 0 : index
    %c1_84 = arith.constant 1 : index
    %c1_85 = arith.constant 1 : index
    %c0_86 = arith.constant 0 : index
    %48 = vector.load %arg0[%c0_82, %c0_83, %c1_84, %c1_85, %c0_86] : memref<4x2x9x9x4xf32, #tpu.memory_space<vmem>>, vector<1x2x8x8x4xf32>
    %49 = vector.shape_cast %48 : vector<1x2x8x8x4xf32> to vector<2x8x8x4xf32>
    %50 = tpu.concatenate %33, %35, %37, %39, %41, %43, %45, %47, %49 in 3 : vector<2x8x8x4xf32>, vector<2x8x8x4xf32>, vector<2x8x8x4xf32>, vector<2x8x8x4xf32>, vector<2x8x8x4xf32>, vector<2x8x8x4xf32>, vector<2x8x8x4xf32>, vector<2x8x8x4xf32>, vector<2x8x8x4xf32> -> vector<2x8x8x36xf32>
    %51 = vector.shape_cast %50 : vector<2x8x8x36xf32> to vector<128x36xf32>
    %c1_87 = arith.constant 1 : index
    %c0_88 = arith.constant 0 : index
    %c0_89 = arith.constant 0 : index
    %c0_90 = arith.constant 0 : index
    %c0_91 = arith.constant 0 : index
    %52 = vector.load %arg0[%c1_87, %c0_88, %c0_89, %c0_90, %c0_91] : memref<4x2x9x9x4xf32, #tpu.memory_space<vmem>>, vector<1x2x8x8x4xf32>
    %53 = vector.shape_cast %52 : vector<1x2x8x8x4xf32> to vector<2x8x8x4xf32>
    %c0_92 = arith.constant 0 : index
    %c0_93 = arith.constant 0 : index
    %c0_94 = arith.constant 0 : index
    %c1_95 = arith.constant 1 : index
    %c0_96 = arith.constant 0 : index
    %54 = vector.load %arg0[%c0_92, %c0_93, %c0_94, %c1_95, %c0_96] : memref<4x2x9x9x4xf32, #tpu.memory_space<vmem>>, vector<1x2x8x8x4xf32>
    %55 = vector.shape_cast %54 : vector<1x2x8x8x4xf32> to vector<2x8x8x4xf32>
    %c1_97 = arith.constant 1 : index
    %c0_98 = arith.constant 0 : index
    %c0_99 = arith.constant 0 : index
    %c1_100 = arith.constant 1 : index
    %c0_101 = arith.constant 0 : index
    %56 = vector.load %arg0[%c1_97, %c0_98, %c0_99, %c1_100, %c0_101] : memref<4x2x9x9x4xf32, #tpu.memory_space<vmem>>, vector<1x2x8x8x4xf32>
    %57 = vector.shape_cast %56 : vector<1x2x8x8x4xf32> to vector<2x8x8x4xf32>
    %c3_102 = arith.constant 3 : index
    %c0_103 = arith.constant 0 : index
    %c0_104 = arith.constant 0 : index
    %c0_105 = arith.constant 0 : index
    %c0_106 = arith.constant 0 : index
    %58 = vector.load %arg0[%c3_102, %c0_103, %c0_104, %c0_105, %c0_106] : memref<4x2x9x9x4xf32, #tpu.memory_space<vmem>>, vector<1x2x8x8x4xf32>
    %59 = vector.shape_cast %58 : vector<1x2x8x8x4xf32> to vector<2x8x8x4xf32>
    %c2_107 = arith.constant 2 : index
    %c0_108 = arith.constant 0 : index
    %c0_109 = arith.constant 0 : index
    %c1_110 = arith.constant 1 : index
    %c0_111 = arith.constant 0 : index
    %60 = vector.load %arg0[%c2_107, %c0_108, %c0_109, %c1_110, %c0_111] : memref<4x2x9x9x4xf32, #tpu.memory_space<vmem>>, vector<1x2x8x8x4xf32>
    %61 = vector.shape_cast %60 : vector<1x2x8x8x4xf32> to vector<2x8x8x4xf32>
    %c3_112 = arith.constant 3 : index
    %c0_113 = arith.constant 0 : index
    %c0_114 = arith.constant 0 : index
    %c1_115 = arith.constant 1 : index
    %c0_116 = arith.constant 0 : index
    %62 = vector.load %arg0[%c3_112, %c0_113, %c0_114, %c1_115, %c0_116] : memref<4x2x9x9x4xf32, #tpu.memory_space<vmem>>, vector<1x2x8x8x4xf32>
    %63 = vector.shape_cast %62 : vector<1x2x8x8x4xf32> to vector<2x8x8x4xf32>
    %c1_117 = arith.constant 1 : index
    %c0_118 = arith.constant 0 : index
    %c1_119 = arith.constant 1 : index
    %c0_120 = arith.constant 0 : index
    %c0_121 = arith.constant 0 : index
    %64 = vector.load %arg0[%c1_117, %c0_118, %c1_119, %c0_120, %c0_121] : memref<4x2x9x9x4xf32, #tpu.memory_space<vmem>>, vector<1x2x8x8x4xf32>
    %65 = vector.shape_cast %64 : vector<1x2x8x8x4xf32> to vector<2x8x8x4xf32>
    %c0_122 = arith.constant 0 : index
    %c0_123 = arith.constant 0 : index
    %c1_124 = arith.constant 1 : index
    %c1_125 = arith.constant 1 : index
    %c0_126 = arith.constant 0 : index
    %66 = vector.load %arg0[%c0_122, %c0_123, %c1_124, %c1_125, %c0_126] : memref<4x2x9x9x4xf32, #tpu.memory_space<vmem>>, vector<1x2x8x8x4xf32>
    %67 = vector.shape_cast %66 : vector<1x2x8x8x4xf32> to vector<2x8x8x4xf32>
    %c1_127 = arith.constant 1 : index
    %c0_128 = arith.constant 0 : index
    %c1_129 = arith.constant 1 : index
    %c1_130 = arith.constant 1 : index
    %c0_131 = arith.constant 0 : index
    %68 = vector.load %arg0[%c1_127, %c0_128, %c1_129, %c1_130, %c0_131] : memref<4x2x9x9x4xf32, #tpu.memory_space<vmem>>, vector<1x2x8x8x4xf32>
    %69 = vector.shape_cast %68 : vector<1x2x8x8x4xf32> to vector<2x8x8x4xf32>
    %70 = tpu.concatenate %53, %55, %57, %59, %61, %63, %65, %67, %69 in 3 : vector<2x8x8x4xf32>, vector<2x8x8x4xf32>, vector<2x8x8x4xf32>, vector<2x8x8x4xf32>, vector<2x8x8x4xf32>, vector<2x8x8x4xf32>, vector<2x8x8x4xf32>, vector<2x8x8x4xf32>, vector<2x8x8x4xf32> -> vector<2x8x8x36xf32>
    %71 = vector.shape_cast %70 : vector<2x8x8x36xf32> to vector<128x36xf32>
    %c2_132 = arith.constant 2 : index
    %c0_133 = arith.constant 0 : index
    %c0_134 = arith.constant 0 : index
    %c0_135 = arith.constant 0 : index
    %c0_136 = arith.constant 0 : index
    %72 = vector.load %arg0[%c2_132, %c0_133, %c0_134, %c0_135, %c0_136] : memref<4x2x9x9x4xf32, #tpu.memory_space<vmem>>, vector<1x2x8x8x4xf32>
    %73 = vector.shape_cast %72 : vector<1x2x8x8x4xf32> to vector<2x8x8x4xf32>
    %c3_137 = arith.constant 3 : index
    %c0_138 = arith.constant 0 : index
    %c0_139 = arith.constant 0 : index
    %c0_140 = arith.constant 0 : index
    %c0_141 = arith.constant 0 : index
    %74 = vector.load %arg0[%c3_137, %c0_138, %c0_139, %c0_140, %c0_141] : memref<4x2x9x9x4xf32, #tpu.memory_space<vmem>>, vector<1x2x8x8x4xf32>
    %75 = vector.shape_cast %74 : vector<1x2x8x8x4xf32> to vector<2x8x8x4xf32>
    %c2_142 = arith.constant 2 : index
    %c0_143 = arith.constant 0 : index
    %c0_144 = arith.constant 0 : index
    %c1_145 = arith.constant 1 : index
    %c0_146 = arith.constant 0 : index
    %76 = vector.load %arg0[%c2_142, %c0_143, %c0_144, %c1_145, %c0_146] : memref<4x2x9x9x4xf32, #tpu.memory_space<vmem>>, vector<1x2x8x8x4xf32>
    %77 = vector.shape_cast %76 : vector<1x2x8x8x4xf32> to vector<2x8x8x4xf32>
    %c0_147 = arith.constant 0 : index
    %c0_148 = arith.constant 0 : index
    %c1_149 = arith.constant 1 : index
    %c0_150 = arith.constant 0 : index
    %c0_151 = arith.constant 0 : index
    %78 = vector.load %arg0[%c0_147, %c0_148, %c1_149, %c0_150, %c0_151] : memref<4x2x9x9x4xf32, #tpu.memory_space<vmem>>, vector<1x2x8x8x4xf32>
    %79 = vector.shape_cast %78 : vector<1x2x8x8x4xf32> to vector<2x8x8x4xf32>
    %c1_152 = arith.constant 1 : index
    %c0_153 = arith.constant 0 : index
    %c1_154 = arith.constant 1 : index
    %c0_155 = arith.constant 0 : index
    %c0_156 = arith.constant 0 : index
    %80 = vector.load %arg0[%c1_152, %c0_153, %c1_154, %c0_155, %c0_156] : memref<4x2x9x9x4xf32, #tpu.memory_space<vmem>>, vector<1x2x8x8x4xf32>
    %81 = vector.shape_cast %80 : vector<1x2x8x8x4xf32> to vector<2x8x8x4xf32>
    %c0_157 = arith.constant 0 : index
    %c0_158 = arith.constant 0 : index
    %c1_159 = arith.constant 1 : index
    %c1_160 = arith.constant 1 : index
    %c0_161 = arith.constant 0 : index
    %82 = vector.load %arg0[%c0_157, %c0_158, %c1_159, %c1_160, %c0_161] : memref<4x2x9x9x4xf32, #tpu.memory_space<vmem>>, vector<1x2x8x8x4xf32>
    %83 = vector.shape_cast %82 : vector<1x2x8x8x4xf32> to vector<2x8x8x4xf32>
    %c2_162 = arith.constant 2 : index
    %c0_163 = arith.constant 0 : index
    %c1_164 = arith.constant 1 : index
    %c0_165 = arith.constant 0 : index
    %c0_166 = arith.constant 0 : index
    %84 = vector.load %arg0[%c2_162, %c0_163, %c1_164, %c0_165, %c0_166] : memref<4x2x9x9x4xf32, #tpu.memory_space<vmem>>, vector<1x2x8x8x4xf32>
    %85 = vector.shape_cast %84 : vector<1x2x8x8x4xf32> to vector<2x8x8x4xf32>
    %c3_167 = arith.constant 3 : index
    %c0_168 = arith.constant 0 : index
    %c1_169 = arith.constant 1 : index
    %c0_170 = arith.constant 0 : index
    %c0_171 = arith.constant 0 : index
    %86 = vector.load %arg0[%c3_167, %c0_168, %c1_169, %c0_170, %c0_171] : memref<4x2x9x9x4xf32, #tpu.memory_space<vmem>>, vector<1x2x8x8x4xf32>
    %87 = vector.shape_cast %86 : vector<1x2x8x8x4xf32> to vector<2x8x8x4xf32>
    %c2_172 = arith.constant 2 : index
    %c0_173 = arith.constant 0 : index
    %c1_174 = arith.constant 1 : index
    %c1_175 = arith.constant 1 : index
    %c0_176 = arith.constant 0 : index
    %88 = vector.load %arg0[%c2_172, %c0_173, %c1_174, %c1_175, %c0_176] : memref<4x2x9x9x4xf32, #tpu.memory_space<vmem>>, vector<1x2x8x8x4xf32>
    %89 = vector.shape_cast %88 : vector<1x2x8x8x4xf32> to vector<2x8x8x4xf32>
    %90 = tpu.concatenate %73, %75, %77, %79, %81, %83, %85, %87, %89 in 3 : vector<2x8x8x4xf32>, vector<2x8x8x4xf32>, vector<2x8x8x4xf32>, vector<2x8x8x4xf32>, vector<2x8x8x4xf32>, vector<2x8x8x4xf32>, vector<2x8x8x4xf32>, vector<2x8x8x4xf32>, vector<2x8x8x4xf32> -> vector<2x8x8x36xf32>
    %91 = vector.shape_cast %90 : vector<2x8x8x36xf32> to vector<128x36xf32>
    %c3_177 = arith.constant 3 : index
    %c0_178 = arith.constant 0 : index
    %c0_179 = arith.constant 0 : index
    %c0_180 = arith.constant 0 : index
    %c0_181 = arith.constant 0 : index
    %92 = vector.load %arg0[%c3_177, %c0_178, %c0_179, %c0_180, %c0_181] : memref<4x2x9x9x4xf32, #tpu.memory_space<vmem>>, vector<1x2x8x8x4xf32>
    %93 = vector.shape_cast %92 : vector<1x2x8x8x4xf32> to vector<2x8x8x4xf32>
    %c2_182 = arith.constant 2 : index
    %c0_183 = arith.constant 0 : index
    %c0_184 = arith.constant 0 : index
    %c1_185 = arith.constant 1 : index
    %c0_186 = arith.constant 0 : index
    %94 = vector.load %arg0[%c2_182, %c0_183, %c0_184, %c1_185, %c0_186] : memref<4x2x9x9x4xf32, #tpu.memory_space<vmem>>, vector<1x2x8x8x4xf32>
    %95 = vector.shape_cast %94 : vector<1x2x8x8x4xf32> to vector<2x8x8x4xf32>
    %c3_187 = arith.constant 3 : index
    %c0_188 = arith.constant 0 : index
    %c0_189 = arith.constant 0 : index
    %c1_190 = arith.constant 1 : index
    %c0_191 = arith.constant 0 : index
    %96 = vector.load %arg0[%c3_187, %c0_188, %c0_189, %c1_190, %c0_191] : memref<4x2x9x9x4xf32, #tpu.memory_space<vmem>>, vector<1x2x8x8x4xf32>
    %97 = vector.shape_cast %96 : vector<1x2x8x8x4xf32> to vector<2x8x8x4xf32>
    %c1_192 = arith.constant 1 : index
    %c0_193 = arith.constant 0 : index
    %c1_194 = arith.constant 1 : index
    %c0_195 = arith.constant 0 : index
    %c0_196 = arith.constant 0 : index
    %98 = vector.load %arg0[%c1_192, %c0_193, %c1_194, %c0_195, %c0_196] : memref<4x2x9x9x4xf32, #tpu.memory_space<vmem>>, vector<1x2x8x8x4xf32>
    %99 = vector.shape_cast %98 : vector<1x2x8x8x4xf32> to vector<2x8x8x4xf32>
    %c0_197 = arith.constant 0 : index
    %c0_198 = arith.constant 0 : index
    %c1_199 = arith.constant 1 : index
    %c1_200 = arith.constant 1 : index
    %c0_201 = arith.constant 0 : index
    %100 = vector.load %arg0[%c0_197, %c0_198, %c1_199, %c1_200, %c0_201] : memref<4x2x9x9x4xf32, #tpu.memory_space<vmem>>, vector<1x2x8x8x4xf32>
    %101 = vector.shape_cast %100 : vector<1x2x8x8x4xf32> to vector<2x8x8x4xf32>
    %c1_202 = arith.constant 1 : index
    %c0_203 = arith.constant 0 : index
    %c1_204 = arith.constant 1 : index
    %c1_205 = arith.constant 1 : index
    %c0_206 = arith.constant 0 : index
    %102 = vector.load %arg0[%c1_202, %c0_203, %c1_204, %c1_205, %c0_206] : memref<4x2x9x9x4xf32, #tpu.memory_space<vmem>>, vector<1x2x8x8x4xf32>
    %103 = vector.shape_cast %102 : vector<1x2x8x8x4xf32> to vector<2x8x8x4xf32>
    %c3_207 = arith.constant 3 : index
    %c0_208 = arith.constant 0 : index
    %c1_209 = arith.constant 1 : index
    %c0_210 = arith.constant 0 : index
    %c0_211 = arith.constant 0 : index
    %104 = vector.load %arg0[%c3_207, %c0_208, %c1_209, %c0_210, %c0_211] : memref<4x2x9x9x4xf32, #tpu.memory_space<vmem>>, vector<1x2x8x8x4xf32>
    %105 = vector.shape_cast %104 : vector<1x2x8x8x4xf32> to vector<2x8x8x4xf32>
    %c2_212 = arith.constant 2 : index
    %c0_213 = arith.constant 0 : index
    %c1_214 = arith.constant 1 : index
    %c1_215 = arith.constant 1 : index
    %c0_216 = arith.constant 0 : index
    %106 = vector.load %arg0[%c2_212, %c0_213, %c1_214, %c1_215, %c0_216] : memref<4x2x9x9x4xf32, #tpu.memory_space<vmem>>, vector<1x2x8x8x4xf32>
    %107 = vector.shape_cast %106 : vector<1x2x8x8x4xf32> to vector<2x8x8x4xf32>
    %c3_217 = arith.constant 3 : index
    %c0_218 = arith.constant 0 : index
    %c1_219 = arith.constant 1 : index
    %c1_220 = arith.constant 1 : index
    %c0_221 = arith.constant 0 : index
    %108 = vector.load %arg0[%c3_217, %c0_218, %c1_219, %c1_220, %c0_221] : memref<4x2x9x9x4xf32, #tpu.memory_space<vmem>>, vector<1x2x8x8x4xf32>
    %109 = vector.shape_cast %108 : vector<1x2x8x8x4xf32> to vector<2x8x8x4xf32>
    %110 = tpu.concatenate %93, %95, %97, %99, %101, %103, %105, %107, %109 in 3 : vector<2x8x8x4xf32>, vector<2x8x8x4xf32>, vector<2x8x8x4xf32>, vector<2x8x8x4xf32>, vector<2x8x8x4xf32>, vector<2x8x8x4xf32>, vector<2x8x8x4xf32>, vector<2x8x8x4xf32>, vector<2x8x8x4xf32> -> vector<2x8x8x36xf32>
    %111 = vector.shape_cast %110 : vector<2x8x8x36xf32> to vector<128x36xf32>
    %112 = tpu.concatenate %51, %71, %91, %111 in 0 : vector<128x36xf32>, vector<128x36xf32>, vector<128x36xf32>, vector<128x36xf32> -> vector<512x36xf32>
    %113 = arith.truncf %112 : vector<512x36xf32> to vector<512x36xbf16>
    %c0_222 = arith.constant 0 : index
    %c0_223 = arith.constant 0 : index
    %114 = vector.load %arg1[%c0_222, %c0_223] : memref<36x8xbf16, #tpu.memory_space<vmem>>, vector<36x8xbf16>
    %cst_224 = arith.constant dense<0.000000e+00> : vector<512x8xf32>
    %115 = tpu.matmul %113, %114, %cst_224 {dimension_numbers = #tpu.dot_dimension_numbers<[1], [0], [0], [1], [0, 0, 1, 1], [], []>} : vector<512x36xbf16>, vector<36x8xbf16>, vector<512x8xf32> -> vector<512x8xf32>
    %c0_225 = arith.constant 0 : index
    %c0_226 = arith.constant 0 : index
    %116 = vector.load %arg2[%c0_225, %c0_226] : memref<1x8xf32, #tpu.memory_space<vmem>>, vector<1x8xf32>
    %c0_227 = arith.constant 0 : index
    %c0_228 = arith.constant 0 : index
    %117 = vector.load %arg3[%c0_227, %c0_228] : memref<1x8xf32, #tpu.memory_space<vmem>>, vector<1x8xf32>
    %cst_229 = arith.constant dense<0.000000e+00> : vector<8xf32>
    %118 = vector.multi_reduction <add>, %115, %cst_229 [0] : vector<512x8xf32> to vector<8xf32>
    %119 = vector.shape_cast %118 : vector<8xf32> to vector<1x8xf32>
    %cst_230 = arith.constant 0.001953125 : f32
    %120 = vector.broadcast %cst_230 : f32 to vector<1x8xf32>
    %121 = arith.mulf %119, %120 : vector<1x8xf32>
    %122 = vector.broadcast %121 : vector<1x8xf32> to vector<512x8xf32>
    %123 = arith.subf %115, %122 : vector<512x8xf32>
    %124 = arith.mulf %123, %123 : vector<512x8xf32>
    %cst_231 = arith.constant dense<0.000000e+00> : vector<8xf32>
    %125 = vector.multi_reduction <add>, %124, %cst_231 [0] : vector<512x8xf32> to vector<8xf32>
    %126 = vector.shape_cast %125 : vector<8xf32> to vector<1x8xf32>
    %cst_232 = arith.constant 0.001953125 : f32
    %127 = vector.broadcast %cst_232 : f32 to vector<1x8xf32>
    %128 = arith.mulf %126, %127 : vector<1x8xf32>
    %cst_233 = arith.constant 9.99999974E-6 : f32
    %129 = vector.broadcast %cst_233 : f32 to vector<1x8xf32>
    %130 = arith.addf %128, %129 : vector<1x8xf32>
    %131 = math.rsqrt %130 : vector<1x8xf32>
    %132 = arith.mulf %116, %131 : vector<1x8xf32>
    %133 = vector.broadcast %132 : vector<1x8xf32> to vector<512x8xf32>
    %134 = arith.mulf %123, %133 : vector<512x8xf32>
    %135 = vector.broadcast %117 : vector<1x8xf32> to vector<512x8xf32>
    %136 = arith.addf %134, %135 : vector<512x8xf32>
    %cst_234 = arith.constant 0.000000e+00 : f32
    %137 = vector.broadcast %cst_234 : f32 to vector<512x8xf32>
    %138 = arith.maximumf %136, %137 : vector<512x8xf32>
    %139 = vector.shape_cast %138 : vector<512x8xf32> to vector<4x2x8x8x8xf32>
    %140 = vector.extract_strided_slice %139 {offsets = [0, 0, 0, 0, 0], sizes = [1, 2, 8, 8, 8], strides = [1, 1, 1, 1, 1]} : vector<4x2x8x8x8xf32> to vector<1x2x8x8x8xf32>
    %141 = vector.shape_cast %140 : vector<1x2x8x8x8xf32> to vector<2x8x8x8xf32>
    %c3_235 = arith.constant 3 : index
    %c0_236 = arith.constant 0 : index
    %c0_237 = arith.constant 0 : index
    %c0_238 = arith.constant 0 : index
    %c0_239 = arith.constant 0 : index
    %142 = vector.load %arg14[%c3_235, %c0_236, %c0_237, %c0_238, %c0_239] : memref<4x2x9x9x8xf32, #tpu.memory_space<vmem>>, vector<1x2x8x8x8xf32>
    %143 = vector.shape_cast %142 : vector<1x2x8x8x8xf32> to vector<2x8x8x8xf32>
    %144 = vector.shape_cast %141 : vector<2x8x8x8xf32> to vector<1x2x8x8x8xf32>
    tpu.vector_store %arg14[%c3_235, %c0_236, %c0_237, %c0_238, %c0_239], %144 {strides = array<i32>} : memref<4x2x9x9x8xf32, #tpu.memory_space<vmem>>, vector<1x2x8x8x8xf32>,
    %145 = vector.extract_strided_slice %139 {offsets = [1, 0, 0, 0, 0], sizes = [1, 2, 8, 8, 8], strides = [1, 1, 1, 1, 1]} : vector<4x2x8x8x8xf32> to vector<1x2x8x8x8xf32>
    %146 = vector.shape_cast %145 : vector<1x2x8x8x8xf32> to vector<2x8x8x8xf32>
    %c2_240 = arith.constant 2 : index
    %c0_241 = arith.constant 0 : index
    %c0_242 = arith.constant 0 : index
    %c1_243 = arith.constant 1 : index
    %c0_244 = arith.constant 0 : index
    %147 = vector.load %arg14[%c2_240, %c0_241, %c0_242, %c1_243, %c0_244] : memref<4x2x9x9x8xf32, #tpu.memory_space<vmem>>, vector<1x2x8x8x8xf32>
    %148 = vector.shape_cast %147 : vector<1x2x8x8x8xf32> to vector<2x8x8x8xf32>
    %149 = vector.shape_cast %146 : vector<2x8x8x8xf32> to vector<1x2x8x8x8xf32>
    tpu.vector_store %arg14[%c2_240, %c0_241, %c0_242, %c1_243, %c0_244], %149 {strides = array<i32>} : memref<4x2x9x9x8xf32, #tpu.memory_space<vmem>>, vector<1x2x8x8x8xf32>,
    %150 = vector.extract_strided_slice %139 {offsets = [2, 0, 0, 0, 0], sizes = [1, 2, 8, 8, 8], strides = [1, 1, 1, 1, 1]} : vector<4x2x8x8x8xf32> to vector<1x2x8x8x8xf32>
    %151 = vector.shape_cast %150 : vector<1x2x8x8x8xf32> to vector<2x8x8x8xf32>
    %c1_245 = arith.constant 1 : index
    %c0_246 = arith.constant 0 : index
    %c1_247 = arith.constant 1 : index
    %c0_248 = arith.constant 0 : index
    %c0_249 = arith.constant 0 : index
    %152 = vector.load %arg14[%c1_245, %c0_246, %c1_247, %c0_248, %c0_249] : memref<4x2x9x9x8xf32, #tpu.memory_space<vmem>>, vector<1x2x8x8x8xf32>
    %153 = vector.shape_cast %152 : vector<1x2x8x8x8xf32> to vector<2x8x8x8xf32>
    %154 = vector.shape_cast %151 : vector<2x8x8x8xf32> to vector<1x2x8x8x8xf32>
    tpu.vector_store %arg14[%c1_245, %c0_246, %c1_247, %c0_248, %c0_249], %154 {strides = array<i32>} : memref<4x2x9x9x8xf32, #tpu.memory_space<vmem>>, vector<1x2x8x8x8xf32>,
    %155 = vector.extract_strided_slice %139 {offsets = [3, 0, 0, 0, 0], sizes = [1, 2, 8, 8, 8], strides = [1, 1, 1, 1, 1]} : vector<4x2x8x8x8xf32> to vector<1x2x8x8x8xf32>
    %156 = vector.shape_cast %155 : vector<1x2x8x8x8xf32> to vector<2x8x8x8xf32>
    %c0_250 = arith.constant 0 : index
    %c0_251 = arith.constant 0 : index
    %c1_252 = arith.constant 1 : index
    %c1_253 = arith.constant 1 : index
    %c0_254 = arith.constant 0 : index
    %157 = vector.load %arg14[%c0_250, %c0_251, %c1_252, %c1_253, %c0_254] : memref<4x2x9x9x8xf32, #tpu.memory_space<vmem>>, vector<1x2x8x8x8xf32>
    %158 = vector.shape_cast %157 : vector<1x2x8x8x8xf32> to vector<2x8x8x8xf32>
    %159 = vector.shape_cast %156 : vector<2x8x8x8xf32> to vector<1x2x8x8x8xf32>
    tpu.vector_store %arg14[%c0_250, %c0_251, %c1_252, %c1_253, %c0_254], %159 {strides = array<i32>} : memref<4x2x9x9x8xf32, #tpu.memory_space<vmem>>, vector<1x2x8x8x8xf32>,
    %c0_255 = arith.constant 0 : index
    %c0_256 = arith.constant 0 : index
    %c0_257 = arith.constant 0 : index
    %c0_258 = arith.constant 0 : index
    %c0_259 = arith.constant 0 : index
    %160 = vector.load %arg14[%c0_255, %c0_256, %c0_257, %c0_258, %c0_259] : memref<4x2x9x9x8xf32, #tpu.memory_space<vmem>>, vector<1x2x8x8x8xf32>
    %161 = vector.shape_cast %160 : vector<1x2x8x8x8xf32> to vector<2x8x8x8xf32>
    %c1_260 = arith.constant 1 : index
    %c0_261 = arith.constant 0 : index
    %c0_262 = arith.constant 0 : index
    %c0_263 = arith.constant 0 : index
    %c0_264 = arith.constant 0 : index
    %162 = vector.load %arg14[%c1_260, %c0_261, %c0_262, %c0_263, %c0_264] : memref<4x2x9x9x8xf32, #tpu.memory_space<vmem>>, vector<1x2x8x8x8xf32>
    %163 = vector.shape_cast %162 : vector<1x2x8x8x8xf32> to vector<2x8x8x8xf32>
    %c0_265 = arith.constant 0 : index
    %c0_266 = arith.constant 0 : index
    %c0_267 = arith.constant 0 : index
    %c1_268 = arith.constant 1 : index
    %c0_269 = arith.constant 0 : index
    %164 = vector.load %arg14[%c0_265, %c0_266, %c0_267, %c1_268, %c0_269] : memref<4x2x9x9x8xf32, #tpu.memory_space<vmem>>, vector<1x2x8x8x8xf32>
    %165 = vector.shape_cast %164 : vector<1x2x8x8x8xf32> to vector<2x8x8x8xf32>
    %c2_270 = arith.constant 2 : index
    %c0_271 = arith.constant 0 : index
    %c0_272 = arith.constant 0 : index
    %c0_273 = arith.constant 0 : index
    %c0_274 = arith.constant 0 : index
    %166 = vector.load %arg14[%c2_270, %c0_271, %c0_272, %c0_273, %c0_274] : memref<4x2x9x9x8xf32, #tpu.memory_space<vmem>>, vector<1x2x8x8x8xf32>
    %167 = vector.shape_cast %166 : vector<1x2x8x8x8xf32> to vector<2x8x8x8xf32>
    %c3_275 = arith.constant 3 : index
    %c0_276 = arith.constant 0 : index
    %c0_277 = arith.constant 0 : index
    %c0_278 = arith.constant 0 : index
    %c0_279 = arith.constant 0 : index
    %168 = vector.load %arg14[%c3_275, %c0_276, %c0_277, %c0_278, %c0_279] : memref<4x2x9x9x8xf32, #tpu.memory_space<vmem>>, vector<1x2x8x8x8xf32>
    %169 = vector.shape_cast %168 : vector<1x2x8x8x8xf32> to vector<2x8x8x8xf32>
    %c2_280 = arith.constant 2 : index
    %c0_281 = arith.constant 0 : index
    %c0_282 = arith.constant 0 : index
    %c1_283 = arith.constant 1 : index
    %c0_284 = arith.constant 0 : index
    %170 = vector.load %arg14[%c2_280, %c0_281, %c0_282, %c1_283, %c0_284] : memref<4x2x9x9x8xf32, #tpu.memory_space<vmem>>, vector<1x2x8x8x8xf32>
    %171 = vector.shape_cast %170 : vector<1x2x8x8x8xf32> to vector<2x8x8x8xf32>
    %c0_285 = arith.constant 0 : index
    %c0_286 = arith.constant 0 : index
    %c1_287 = arith.constant 1 : index
    %c0_288 = arith.constant 0 : index
    %c0_289 = arith.constant 0 : index
    %172 = vector.load %arg14[%c0_285, %c0_286, %c1_287, %c0_288, %c0_289] : memref<4x2x9x9x8xf32, #tpu.memory_space<vmem>>, vector<1x2x8x8x8xf32>
    %173 = vector.shape_cast %172 : vector<1x2x8x8x8xf32> to vector<2x8x8x8xf32>
    %c1_290 = arith.constant 1 : index
    %c0_291 = arith.constant 0 : index
    %c1_292 = arith.constant 1 : index
    %c0_293 = arith.constant 0 : index
    %c0_294 = arith.constant 0 : index
    %174 = vector.load %arg14[%c1_290, %c0_291, %c1_292, %c0_293, %c0_294] : memref<4x2x9x9x8xf32, #tpu.memory_space<vmem>>, vector<1x2x8x8x8xf32>
    %175 = vector.shape_cast %174 : vector<1x2x8x8x8xf32> to vector<2x8x8x8xf32>
    %c0_295 = arith.constant 0 : index
    %c0_296 = arith.constant 0 : index
    %c1_297 = arith.constant 1 : index
    %c1_298 = arith.constant 1 : index
    %c0_299 = arith.constant 0 : index
    %176 = vector.load %arg14[%c0_295, %c0_296, %c1_297, %c1_298, %c0_299] : memref<4x2x9x9x8xf32, #tpu.memory_space<vmem>>, vector<1x2x8x8x8xf32>
    %177 = vector.shape_cast %176 : vector<1x2x8x8x8xf32> to vector<2x8x8x8xf32>
    %178 = tpu.concatenate %161, %163, %165, %167, %169, %171, %173, %175, %177 in 3 : vector<2x8x8x8xf32>, vector<2x8x8x8xf32>, vector<2x8x8x8xf32>, vector<2x8x8x8xf32>, vector<2x8x8x8xf32>, vector<2x8x8x8xf32>, vector<2x8x8x8xf32>, vector<2x8x8x8xf32>, vector<2x8x8x8xf32> -> vector<2x8x8x72xf32>
    %179 = vector.shape_cast %178 : vector<2x8x8x72xf32> to vector<128x72xf32>
    %180 = arith.truncf %179 : vector<128x72xf32> to vector<128x72xbf16>
    %c0_300 = arith.constant 0 : index
    %c0_301 = arith.constant 0 : index
    %181 = vector.load %arg4[%c0_300, %c0_301] : memref<72x16xbf16, #tpu.memory_space<vmem>>, vector<72x16xbf16>
    %cst_302 = arith.constant dense<0.000000e+00> : vector<128x16xf32>
    %182 = tpu.matmul %180, %181, %cst_302 {dimension_numbers = #tpu.dot_dimension_numbers<[1], [0], [0], [1], [0, 0, 1, 1], [], []>} : vector<128x72xbf16>, vector<72x16xbf16>, vector<128x16xf32> -> vector<128x16xf32>
    %c0_303 = arith.constant 0 : index
    %c0_304 = arith.constant 0 : index
    %183 = vector.load %arg5[%c0_303, %c0_304] : memref<1x16xf32, #tpu.memory_space<vmem>>, vector<1x16xf32>
    %c0_305 = arith.constant 0 : index
    %c0_306 = arith.constant 0 : index
    %184 = vector.load %arg6[%c0_305, %c0_306] : memref<1x16xf32, #tpu.memory_space<vmem>>, vector<1x16xf32>
    %cst_307 = arith.constant dense<0.000000e+00> : vector<16xf32>
    %185 = vector.multi_reduction <add>, %182, %cst_307 [0] : vector<128x16xf32> to vector<16xf32>
    %186 = vector.shape_cast %185 : vector<16xf32> to vector<1x16xf32>
    %cst_308 = arith.constant 7.812500e-03 : f32
    %187 = vector.broadcast %cst_308 : f32 to vector<1x16xf32>
    %188 = arith.mulf %186, %187 : vector<1x16xf32>
    %189 = vector.broadcast %188 : vector<1x16xf32> to vector<128x16xf32>
    %190 = arith.subf %182, %189 : vector<128x16xf32>
    %191 = arith.mulf %190, %190 : vector<128x16xf32>
    %cst_309 = arith.constant dense<0.000000e+00> : vector<16xf32>
    %192 = vector.multi_reduction <add>, %191, %cst_309 [0] : vector<128x16xf32> to vector<16xf32>
    %193 = vector.shape_cast %192 : vector<16xf32> to vector<1x16xf32>
    %cst_310 = arith.constant 7.812500e-03 : f32
    %194 = vector.broadcast %cst_310 : f32 to vector<1x16xf32>
    %195 = arith.mulf %193, %194 : vector<1x16xf32>
    %cst_311 = arith.constant 9.99999974E-6 : f32
    %196 = vector.broadcast %cst_311 : f32 to vector<1x16xf32>
    %197 = arith.addf %195, %196 : vector<1x16xf32>
    %198 = math.rsqrt %197 : vector<1x16xf32>
    %199 = arith.mulf %183, %198 : vector<1x16xf32>
    %200 = vector.broadcast %199 : vector<1x16xf32> to vector<128x16xf32>
    %201 = arith.mulf %190, %200 : vector<128x16xf32>
    %202 = vector.broadcast %184 : vector<1x16xf32> to vector<128x16xf32>
    %203 = arith.addf %201, %202 : vector<128x16xf32>
    %204 = vector.shape_cast %203 : vector<128x16xf32> to vector<2x64x16xf32>
    %205 = vector.extract_strided_slice %204 {offsets = [0, 0, 0], sizes = [2, 1, 16], strides = [1, 1, 1]} : vector<2x64x16xf32> to vector<2x1x16xf32>
    %206 = vector.shape_cast %205 : vector<2x1x16xf32> to vector<2x16xf32>
    %207 = vector.extract_strided_slice %204 {offsets = [0, 1, 0], sizes = [2, 1, 16], strides = [1, 1, 1]} : vector<2x64x16xf32> to vector<2x1x16xf32>
    %208 = vector.shape_cast %207 : vector<2x1x16xf32> to vector<2x16xf32>
    %209 = vector.extract_strided_slice %204 {offsets = [0, 2, 0], sizes = [2, 1, 16], strides = [1, 1, 1]} : vector<2x64x16xf32> to vector<2x1x16xf32>
    %210 = vector.shape_cast %209 : vector<2x1x16xf32> to vector<2x16xf32>
    %211 = vector.extract_strided_slice %204 {offsets = [0, 3, 0], sizes = [2, 1, 16], strides = [1, 1, 1]} : vector<2x64x16xf32> to vector<2x1x16xf32>
    %212 = vector.shape_cast %211 : vector<2x1x16xf32> to vector<2x16xf32>
    %213 = vector.extract_strided_slice %204 {offsets = [0, 4, 0], sizes = [2, 1, 16], strides = [1, 1, 1]} : vector<2x64x16xf32> to vector<2x1x16xf32>
    %214 = vector.shape_cast %213 : vector<2x1x16xf32> to vector<2x16xf32>
    %215 = vector.extract_strided_slice %204 {offsets = [0, 5, 0], sizes = [2, 1, 16], strides = [1, 1, 1]} : vector<2x64x16xf32> to vector<2x1x16xf32>
    %216 = vector.shape_cast %215 : vector<2x1x16xf32> to vector<2x16xf32>
    %217 = vector.extract_strided_slice %204 {offsets = [0, 6, 0], sizes = [2, 1, 16], strides = [1, 1, 1]} : vector<2x64x16xf32> to vector<2x1x16xf32>
    %218 = vector.shape_cast %217 : vector<2x1x16xf32> to vector<2x16xf32>
    %219 = vector.extract_strided_slice %204 {offsets = [0, 7, 0], sizes = [2, 1, 16], strides = [1, 1, 1]} : vector<2x64x16xf32> to vector<2x1x16xf32>
    %220 = vector.shape_cast %219 : vector<2x1x16xf32> to vector<2x16xf32>
    %221 = vector.extract_strided_slice %204 {offsets = [0, 8, 0], sizes = [2, 1, 16], strides = [1, 1, 1]} : vector<2x64x16xf32> to vector<2x1x16xf32>
    %222 = vector.shape_cast %221 : vector<2x1x16xf32> to vector<2x16xf32>
    %223 = vector.extract_strided_slice %204 {offsets = [0, 9, 0], sizes = [2, 1, 16], strides = [1, 1, 1]} : vector<2x64x16xf32> to vector<2x1x16xf32>
    %224 = vector.shape_cast %223 : vector<2x1x16xf32> to vector<2x16xf32>
    %225 = vector.extract_strided_slice %204 {offsets = [0, 10, 0], sizes = [2, 1, 16], strides = [1, 1, 1]} : vector<2x64x16xf32> to vector<2x1x16xf32>
    %226 = vector.shape_cast %225 : vector<2x1x16xf32> to vector<2x16xf32>
    %227 = vector.extract_strided_slice %204 {offsets = [0, 11, 0], sizes = [2, 1, 16], strides = [1, 1, 1]} : vector<2x64x16xf32> to vector<2x1x16xf32>
    %228 = vector.shape_cast %227 : vector<2x1x16xf32> to vector<2x16xf32>
    %229 = vector.extract_strided_slice %204 {offsets = [0, 12, 0], sizes = [2, 1, 16], strides = [1, 1, 1]} : vector<2x64x16xf32> to vector<2x1x16xf32>
    %230 = vector.shape_cast %229 : vector<2x1x16xf32> to vector<2x16xf32>
    %231 = vector.extract_strided_slice %204 {offsets = [0, 13, 0], sizes = [2, 1, 16], strides = [1, 1, 1]} : vector<2x64x16xf32> to vector<2x1x16xf32>
    %232 = vector.shape_cast %231 : vector<2x1x16xf32> to vector<2x16xf32>
    %233 = vector.extract_strided_slice %204 {offsets = [0, 14, 0], sizes = [2, 1, 16], strides = [1, 1, 1]} : vector<2x64x16xf32> to vector<2x1x16xf32>
    %234 = vector.shape_cast %233 : vector<2x1x16xf32> to vector<2x16xf32>
    %235 = vector.extract_strided_slice %204 {offsets = [0, 15, 0], sizes = [2, 1, 16], strides = [1, 1, 1]} : vector<2x64x16xf32> to vector<2x1x16xf32>
    %236 = vector.shape_cast %235 : vector<2x1x16xf32> to vector<2x16xf32>
    %237 = vector.extract_strided_slice %204 {offsets = [0, 16, 0], sizes = [2, 1, 16], strides = [1, 1, 1]} : vector<2x64x16xf32> to vector<2x1x16xf32>
    %238 = vector.shape_cast %237 : vector<2x1x16xf32> to vector<2x16xf32>
    %239 = vector.extract_strided_slice %204 {offsets = [0, 17, 0], sizes = [2, 1, 16], strides = [1, 1, 1]} : vector<2x64x16xf32> to vector<2x1x16xf32>
    %240 = vector.shape_cast %239 : vector<2x1x16xf32> to vector<2x16xf32>
    %241 = vector.extract_strided_slice %204 {offsets = [0, 18, 0], sizes = [2, 1, 16], strides = [1, 1, 1]} : vector<2x64x16xf32> to vector<2x1x16xf32>
    %242 = vector.shape_cast %241 : vector<2x1x16xf32> to vector<2x16xf32>
    %243 = vector.extract_strided_slice %204 {offsets = [0, 19, 0], sizes = [2, 1, 16], strides = [1, 1, 1]} : vector<2x64x16xf32> to vector<2x1x16xf32>
    %244 = vector.shape_cast %243 : vector<2x1x16xf32> to vector<2x16xf32>
    %245 = vector.extract_strided_slice %204 {offsets = [0, 20, 0], sizes = [2, 1, 16], strides = [1, 1, 1]} : vector<2x64x16xf32> to vector<2x1x16xf32>
    %246 = vector.shape_cast %245 : vector<2x1x16xf32> to vector<2x16xf32>
    %247 = vector.extract_strided_slice %204 {offsets = [0, 21, 0], sizes = [2, 1, 16], strides = [1, 1, 1]} : vector<2x64x16xf32> to vector<2x1x16xf32>
    %248 = vector.shape_cast %247 : vector<2x1x16xf32> to vector<2x16xf32>
    %249 = vector.extract_strided_slice %204 {offsets = [0, 22, 0], sizes = [2, 1, 16], strides = [1, 1, 1]} : vector<2x64x16xf32> to vector<2x1x16xf32>
    %250 = vector.shape_cast %249 : vector<2x1x16xf32> to vector<2x16xf32>
    %251 = vector.extract_strided_slice %204 {offsets = [0, 23, 0], sizes = [2, 1, 16], strides = [1, 1, 1]} : vector<2x64x16xf32> to vector<2x1x16xf32>
    %252 = vector.shape_cast %251 : vector<2x1x16xf32> to vector<2x16xf32>
    %253 = vector.extract_strided_slice %204 {offsets = [0, 24, 0], sizes = [2, 1, 16], strides = [1, 1, 1]} : vector<2x64x16xf32> to vector<2x1x16xf32>
    %254 = vector.shape_cast %253 : vector<2x1x16xf32> to vector<2x16xf32>
    %255 = vector.extract_strided_slice %204 {offsets = [0, 25, 0], sizes = [2, 1, 16], strides = [1, 1, 1]} : vector<2x64x16xf32> to vector<2x1x16xf32>
    %256 = vector.shape_cast %255 : vector<2x1x16xf32> to vector<2x16xf32>
    %257 = vector.extract_strided_slice %204 {offsets = [0, 26, 0], sizes = [2, 1, 16], strides = [1, 1, 1]} : vector<2x64x16xf32> to vector<2x1x16xf32>
    %258 = vector.shape_cast %257 : vector<2x1x16xf32> to vector<2x16xf32>
    %259 = vector.extract_strided_slice %204 {offsets = [0, 27, 0], sizes = [2, 1, 16], strides = [1, 1, 1]} : vector<2x64x16xf32> to vector<2x1x16xf32>
    %260 = vector.shape_cast %259 : vector<2x1x16xf32> to vector<2x16xf32>
    %261 = vector.extract_strided_slice %204 {offsets = [0, 28, 0], sizes = [2, 1, 16], strides = [1, 1, 1]} : vector<2x64x16xf32> to vector<2x1x16xf32>
    %262 = vector.shape_cast %261 : vector<2x1x16xf32> to vector<2x16xf32>
    %263 = vector.extract_strided_slice %204 {offsets = [0, 29, 0], sizes = [2, 1, 16], strides = [1, 1, 1]} : vector<2x64x16xf32> to vector<2x1x16xf32>
    %264 = vector.shape_cast %263 : vector<2x1x16xf32> to vector<2x16xf32>
    %265 = vector.extract_strided_slice %204 {offsets = [0, 30, 0], sizes = [2, 1, 16], strides = [1, 1, 1]} : vector<2x64x16xf32> to vector<2x1x16xf32>
    %266 = vector.shape_cast %265 : vector<2x1x16xf32> to vector<2x16xf32>
    %267 = vector.extract_strided_slice %204 {offsets = [0, 31, 0], sizes = [2, 1, 16], strides = [1, 1, 1]} : vector<2x64x16xf32> to vector<2x1x16xf32>
    %268 = vector.shape_cast %267 : vector<2x1x16xf32> to vector<2x16xf32>
    %269 = vector.extract_strided_slice %204 {offsets = [0, 32, 0], sizes = [2, 1, 16], strides = [1, 1, 1]} : vector<2x64x16xf32> to vector<2x1x16xf32>
    %270 = vector.shape_cast %269 : vector<2x1x16xf32> to vector<2x16xf32>
    %271 = vector.extract_strided_slice %204 {offsets = [0, 33, 0], sizes = [2, 1, 16], strides = [1, 1, 1]} : vector<2x64x16xf32> to vector<2x1x16xf32>
    %272 = vector.shape_cast %271 : vector<2x1x16xf32> to vector<2x16xf32>
    %273 = vector.extract_strided_slice %204 {offsets = [0, 34, 0], sizes = [2, 1, 16], strides = [1, 1, 1]} : vector<2x64x16xf32> to vector<2x1x16xf32>
    %274 = vector.shape_cast %273 : vector<2x1x16xf32> to vector<2x16xf32>
    %275 = vector.extract_strided_slice %204 {offsets = [0, 35, 0], sizes = [2, 1, 16], strides = [1, 1, 1]} : vector<2x64x16xf32> to vector<2x1x16xf32>
    %276 = vector.shape_cast %275 : vector<2x1x16xf32> to vector<2x16xf32>
    %277 = vector.extract_strided_slice %204 {offsets = [0, 36, 0], sizes = [2, 1, 16], strides = [1, 1, 1]} : vector<2x64x16xf32> to vector<2x1x16xf32>
    %278 = vector.shape_cast %277 : vector<2x1x16xf32> to vector<2x16xf32>
    %279 = vector.extract_strided_slice %204 {offsets = [0, 37, 0], sizes = [2, 1, 16], strides = [1, 1, 1]} : vector<2x64x16xf32> to vector<2x1x16xf32>
    %280 = vector.shape_cast %279 : vector<2x1x16xf32> to vector<2x16xf32>
    %281 = vector.extract_strided_slice %204 {offsets = [0, 38, 0], sizes = [2, 1, 16], strides = [1, 1, 1]} : vector<2x64x16xf32> to vector<2x1x16xf32>
    %282 = vector.shape_cast %281 : vector<2x1x16xf32> to vector<2x16xf32>
    %283 = vector.extract_strided_slice %204 {offsets = [0, 39, 0], sizes = [2, 1, 16], strides = [1, 1, 1]} : vector<2x64x16xf32> to vector<2x1x16xf32>
    %284 = vector.shape_cast %283 : vector<2x1x16xf32> to vector<2x16xf32>
    %285 = vector.extract_strided_slice %204 {offsets = [0, 40, 0], sizes = [2, 1, 16], strides = [1, 1, 1]} : vector<2x64x16xf32> to vector<2x1x16xf32>
    %286 = vector.shape_cast %285 : vector<2x1x16xf32> to vector<2x16xf32>
    %287 = vector.extract_strided_slice %204 {offsets = [0, 41, 0], sizes = [2, 1, 16], strides = [1, 1, 1]} : vector<2x64x16xf32> to vector<2x1x16xf32>
    %288 = vector.shape_cast %287 : vector<2x1x16xf32> to vector<2x16xf32>
    %289 = vector.extract_strided_slice %204 {offsets = [0, 42, 0], sizes = [2, 1, 16], strides = [1, 1, 1]} : vector<2x64x16xf32> to vector<2x1x16xf32>
    %290 = vector.shape_cast %289 : vector<2x1x16xf32> to vector<2x16xf32>
    %291 = vector.extract_strided_slice %204 {offsets = [0, 43, 0], sizes = [2, 1, 16], strides = [1, 1, 1]} : vector<2x64x16xf32> to vector<2x1x16xf32>
    %292 = vector.shape_cast %291 : vector<2x1x16xf32> to vector<2x16xf32>
    %293 = vector.extract_strided_slice %204 {offsets = [0, 44, 0], sizes = [2, 1, 16], strides = [1, 1, 1]} : vector<2x64x16xf32> to vector<2x1x16xf32>
    %294 = vector.shape_cast %293 : vector<2x1x16xf32> to vector<2x16xf32>
    %295 = vector.extract_strided_slice %204 {offsets = [0, 45, 0], sizes = [2, 1, 16], strides = [1, 1, 1]} : vector<2x64x16xf32> to vector<2x1x16xf32>
    %296 = vector.shape_cast %295 : vector<2x1x16xf32> to vector<2x16xf32>
    %297 = vector.extract_strided_slice %204 {offsets = [0, 46, 0], sizes = [2, 1, 16], strides = [1, 1, 1]} : vector<2x64x16xf32> to vector<2x1x16xf32>
    %298 = vector.shape_cast %297 : vector<2x1x16xf32> to vector<2x16xf32>
    %299 = vector.extract_strided_slice %204 {offsets = [0, 47, 0], sizes = [2, 1, 16], strides = [1, 1, 1]} : vector<2x64x16xf32> to vector<2x1x16xf32>
    %300 = vector.shape_cast %299 : vector<2x1x16xf32> to vector<2x16xf32>
    %301 = vector.extract_strided_slice %204 {offsets = [0, 48, 0], sizes = [2, 1, 16], strides = [1, 1, 1]} : vector<2x64x16xf32> to vector<2x1x16xf32>
    %302 = vector.shape_cast %301 : vector<2x1x16xf32> to vector<2x16xf32>
    %303 = vector.extract_strided_slice %204 {offsets = [0, 49, 0], sizes = [2, 1, 16], strides = [1, 1, 1]} : vector<2x64x16xf32> to vector<2x1x16xf32>
    %304 = vector.shape_cast %303 : vector<2x1x16xf32> to vector<2x16xf32>
    %305 = vector.extract_strided_slice %204 {offsets = [0, 50, 0], sizes = [2, 1, 16], strides = [1, 1, 1]} : vector<2x64x16xf32> to vector<2x1x16xf32>
    %306 = vector.shape_cast %305 : vector<2x1x16xf32> to vector<2x16xf32>
    %307 = vector.extract_strided_slice %204 {offsets = [0, 51, 0], sizes = [2, 1, 16], strides = [1, 1, 1]} : vector<2x64x16xf32> to vector<2x1x16xf32>
    %308 = vector.shape_cast %307 : vector<2x1x16xf32> to vector<2x16xf32>
    %309 = vector.extract_strided_slice %204 {offsets = [0, 52, 0], sizes = [2, 1, 16], strides = [1, 1, 1]} : vector<2x64x16xf32> to vector<2x1x16xf32>
    %310 = vector.shape_cast %309 : vector<2x1x16xf32> to vector<2x16xf32>
    %311 = vector.extract_strided_slice %204 {offsets = [0, 53, 0], sizes = [2, 1, 16], strides = [1, 1, 1]} : vector<2x64x16xf32> to vector<2x1x16xf32>
    %312 = vector.shape_cast %311 : vector<2x1x16xf32> to vector<2x16xf32>
    %313 = vector.extract_strided_slice %204 {offsets = [0, 54, 0], sizes = [2, 1, 16], strides = [1, 1, 1]} : vector<2x64x16xf32> to vector<2x1x16xf32>
    %314 = vector.shape_cast %313 : vector<2x1x16xf32> to vector<2x16xf32>
    %315 = vector.extract_strided_slice %204 {offsets = [0, 55, 0], sizes = [2, 1, 16], strides = [1, 1, 1]} : vector<2x64x16xf32> to vector<2x1x16xf32>
    %316 = vector.shape_cast %315 : vector<2x1x16xf32> to vector<2x16xf32>
    %317 = vector.extract_strided_slice %204 {offsets = [0, 56, 0], sizes = [2, 1, 16], strides = [1, 1, 1]} : vector<2x64x16xf32> to vector<2x1x16xf32>
    %318 = vector.shape_cast %317 : vector<2x1x16xf32> to vector<2x16xf32>
    %319 = vector.extract_strided_slice %204 {offsets = [0, 57, 0], sizes = [2, 1, 16], strides = [1, 1, 1]} : vector<2x64x16xf32> to vector<2x1x16xf32>
    %320 = vector.shape_cast %319 : vector<2x1x16xf32> to vector<2x16xf32>
    %321 = vector.extract_strided_slice %204 {offsets = [0, 58, 0], sizes = [2, 1, 16], strides = [1, 1, 1]} : vector<2x64x16xf32> to vector<2x1x16xf32>
    %322 = vector.shape_cast %321 : vector<2x1x16xf32> to vector<2x16xf32>
    %323 = vector.extract_strided_slice %204 {offsets = [0, 59, 0], sizes = [2, 1, 16], strides = [1, 1, 1]} : vector<2x64x16xf32> to vector<2x1x16xf32>
    %324 = vector.shape_cast %323 : vector<2x1x16xf32> to vector<2x16xf32>
    %325 = vector.extract_strided_slice %204 {offsets = [0, 60, 0], sizes = [2, 1, 16], strides = [1, 1, 1]} : vector<2x64x16xf32> to vector<2x1x16xf32>
    %326 = vector.shape_cast %325 : vector<2x1x16xf32> to vector<2x16xf32>
    %327 = vector.extract_strided_slice %204 {offsets = [0, 61, 0], sizes = [2, 1, 16], strides = [1, 1, 1]} : vector<2x64x16xf32> to vector<2x1x16xf32>
    %328 = vector.shape_cast %327 : vector<2x1x16xf32> to vector<2x16xf32>
    %329 = vector.extract_strided_slice %204 {offsets = [0, 62, 0], sizes = [2, 1, 16], strides = [1, 1, 1]} : vector<2x64x16xf32> to vector<2x1x16xf32>
    %330 = vector.shape_cast %329 : vector<2x1x16xf32> to vector<2x16xf32>
    %331 = vector.extract_strided_slice %204 {offsets = [0, 63, 0], sizes = [2, 1, 16], strides = [1, 1, 1]} : vector<2x64x16xf32> to vector<2x1x16xf32>
    %332 = vector.shape_cast %331 : vector<2x1x16xf32> to vector<2x16xf32>
    %333 = tpu.concatenate %206, %208, %210, %212, %214, %216, %218, %220, %222, %224, %226, %228, %230, %232, %234, %236 in 1 : vector<2x16xf32>, vector<2x16xf32>, vector<2x16xf32>, vector<2x16xf32>, vector<2x16xf32>, vector<2x16xf32>, vector<2x16xf32>, vector<2x16xf32>, vector<2x16xf32>, vector<2x16xf32>, vector<2x16xf32>, vector<2x16xf32>, vector<2x16xf32>, vector<2x16xf32>, vector<2x16xf32>, vector<2x16xf32> -> vector<2x256xf32>
    %334 = tpu.concatenate %238, %240, %242, %244, %246, %248, %250, %252, %254, %256, %258, %260, %262, %264, %266, %268 in 1 : vector<2x16xf32>, vector<2x16xf32>, vector<2x16xf32>, vector<2x16xf32>, vector<2x16xf32>, vector<2x16xf32>, vector<2x16xf32>, vector<2x16xf32>, vector<2x16xf32>, vector<2x16xf32>, vector<2x16xf32>, vector<2x16xf32>, vector<2x16xf32>, vector<2x16xf32>, vector<2x16xf32>, vector<2x16xf32> -> vector<2x256xf32>
    %335 = tpu.concatenate %270, %272, %274, %276, %278, %280, %282, %284, %286, %288, %290, %292, %294, %296, %298, %300 in 1 : vector<2x16xf32>, vector<2x16xf32>, vector<2x16xf32>, vector<2x16xf32>, vector<2x16xf32>, vector<2x16xf32>, vector<2x16xf32>, vector<2x16xf32>, vector<2x16xf32>, vector<2x16xf32>, vector<2x16xf32>, vector<2x16xf32>, vector<2x16xf32>, vector<2x16xf32>, vector<2x16xf32>, vector<2x16xf32> -> vector<2x256xf32>
    %336 = tpu.concatenate %302, %304, %306, %308, %310, %312, %314, %316, %318, %320, %322, %324, %326, %328, %330, %332 in 1 : vector<2x16xf32>, vector<2x16xf32>, vector<2x16xf32>, vector<2x16xf32>, vector<2x16xf32>, vector<2x16xf32>, vector<2x16xf32>, vector<2x16xf32>, vector<2x16xf32>, vector<2x16xf32>, vector<2x16xf32>, vector<2x16xf32>, vector<2x16xf32>, vector<2x16xf32>, vector<2x16xf32>, vector<2x16xf32> -> vector<2x256xf32>
    %337 = tpu.concatenate %333, %334, %335, %336 in 1 : vector<2x256xf32>, vector<2x256xf32>, vector<2x256xf32>, vector<2x256xf32> -> vector<2x1024xf32>
    %338 = arith.truncf %337 : vector<2x1024xf32> to vector<2x1024xbf16>
    %c0_312 = arith.constant 0 : index
    %c0_313 = arith.constant 0 : index
    %339 = vector.load %arg7[%c0_312, %c0_313] : memref<1024x32xbf16, #tpu.memory_space<vmem>>, vector<1024x32xbf16>
    %c0_314 = arith.constant 0 : index
    %c0_315 = arith.constant 0 : index
    %340 = vector.load %arg8[%c0_314, %c0_315] : memref<1x32xf32, #tpu.memory_space<vmem>>, vector<1x32xf32>
    %c0_316 = arith.constant 0 : index
    %c0_317 = arith.constant 0 : index
    %341 = vector.load %arg9[%c0_316, %c0_317] : memref<1x32xf32, #tpu.memory_space<vmem>>, vector<1x32xf32>
    %cst_318 = arith.constant dense<0.000000e+00> : vector<2x32xf32>
    %342 = tpu.matmul %338, %339, %cst_318 {dimension_numbers = #tpu.dot_dimension_numbers<[1], [0], [0], [1], [0, 0, 1, 1], [], []>} : vector<2x1024xbf16>, vector<1024x32xbf16>, vector<2x32xf32> -> vector<2x32xf32>
    %cst_319 = arith.constant dense<0.000000e+00> : vector<32xf32>
    %343 = vector.multi_reduction <add>, %342, %cst_319 [0] : vector<2x32xf32> to vector<32xf32>
    %344 = vector.shape_cast %343 : vector<32xf32> to vector<1x32xf32>
    %cst_320 = arith.constant 5.000000e-01 : f32
    %345 = vector.broadcast %cst_320 : f32 to vector<1x32xf32>
    %346 = arith.mulf %344, %345 : vector<1x32xf32>
    %347 = vector.broadcast %346 : vector<1x32xf32> to vector<2x32xf32>
    %348 = arith.subf %342, %347 : vector<2x32xf32>
    %349 = arith.mulf %348, %348 : vector<2x32xf32>
    %cst_321 = arith.constant dense<0.000000e+00> : vector<32xf32>
    %350 = vector.multi_reduction <add>, %349, %cst_321 [0] : vector<2x32xf32> to vector<32xf32>
    %351 = vector.shape_cast %350 : vector<32xf32> to vector<1x32xf32>
    %cst_322 = arith.constant 5.000000e-01 : f32
    %352 = vector.broadcast %cst_322 : f32 to vector<1x32xf32>
    %353 = arith.mulf %351, %352 : vector<1x32xf32>
    %cst_323 = arith.constant 9.99999974E-6 : f32
    %354 = vector.broadcast %cst_323 : f32 to vector<1x32xf32>
    %355 = arith.addf %353, %354 : vector<1x32xf32>
    %356 = math.rsqrt %355 : vector<1x32xf32>
    %357 = arith.mulf %340, %356 : vector<1x32xf32>
    %358 = vector.broadcast %357 : vector<1x32xf32> to vector<2x32xf32>
    %359 = arith.mulf %348, %358 : vector<2x32xf32>
    %360 = vector.broadcast %341 : vector<1x32xf32> to vector<2x32xf32>
    %361 = arith.addf %359, %360 : vector<2x32xf32>
    %cst_324 = arith.constant 0.000000e+00 : f32
    %362 = vector.broadcast %cst_324 : f32 to vector<2x32xf32>
    %363 = arith.maximumf %361, %362 : vector<2x32xf32>
    %364 = arith.truncf %363 : vector<2x32xf32> to vector<2x32xbf16>
    %c0_325 = arith.constant 0 : index
    %c0_326 = arith.constant 0 : index
    %365 = vector.load %arg10[%c0_325, %c0_326] : memref<32x10xbf16, #tpu.memory_space<vmem>>, vector<32x10xbf16>
    %c0_327 = arith.constant 0 : index
    %c0_328 = arith.constant 0 : index
    %366 = vector.load %arg11[%c0_327, %c0_328] : memref<1x10xf32, #tpu.memory_space<vmem>>, vector<1x10xf32>
    %c0_329 = arith.constant 0 : index
    %c0_330 = arith.constant 0 : index
    %367 = vector.load %arg12[%c0_329, %c0_330] : memref<1x10xf32, #tpu.memory_space<vmem>>, vector<1x10xf32>
    %cst_331 = arith.constant dense<0.000000e+00> : vector<2x10xf32>
    %368 = tpu.matmul %364, %365, %cst_331 {dimension_numbers = #tpu.dot_dimension_numbers<[1], [0], [0], [1], [0, 0, 1, 1], [], []>} : vector<2x32xbf16>, vector<32x10xbf16>, vector<2x10xf32> -> vector<2x10xf32>
    %cst_332 = arith.constant dense<0.000000e+00> : vector<10xf32>
    %369 = vector.multi_reduction <add>, %368, %cst_332 [0] : vector<2x10xf32> to vector<10xf32>
    %370 = vector.shape_cast %369 : vector<10xf32> to vector<1x10xf32>
    %cst_333 = arith.constant 5.000000e-01 : f32
    %371 = vector.broadcast %cst_333 : f32 to vector<1x10xf32>
    %372 = arith.mulf %370, %371 : vector<1x10xf32>
    %373 = vector.broadcast %372 : vector<1x10xf32> to vector<2x10xf32>
    %374 = arith.subf %368, %373 : vector<2x10xf32>
    %375 = arith.mulf %374, %374 : vector<2x10xf32>
    %cst_334 = arith.constant dense<0.000000e+00> : vector<10xf32>
    %376 = vector.multi_reduction <add>, %375, %cst_334 [0] : vector<2x10xf32> to vector<10xf32>
    %377 = vector.shape_cast %376 : vector<10xf32> to vector<1x10xf32>
    %cst_335 = arith.constant 5.000000e-01 : f32
    %378 = vector.broadcast %cst_335 : f32 to vector<1x10xf32>
    %379 = arith.mulf %377, %378 : vector<1x10xf32>
    %cst_336 = arith.constant 9.99999974E-6 : f32
    %380 = vector.broadcast %cst_336 : f32 to vector<1x10xf32>
    %381 = arith.addf %379, %380 : vector<1x10xf32>
    %382 = math.rsqrt %381 : vector<1x10xf32>
    %383 = arith.mulf %366, %382 : vector<1x10xf32>
    %384 = vector.broadcast %383 : vector<1x10xf32> to vector<2x10xf32>
    %385 = arith.mulf %374, %384 : vector<2x10xf32>
    %386 = vector.broadcast %367 : vector<1x10xf32> to vector<2x10xf32>
    %387 = arith.addf %385, %386 : vector<2x10xf32>
    %c0_337 = arith.constant 0 : index
    %c0_338 = arith.constant 0 : index
    %388 = vector.load %arg13[%c0_337, %c0_338] : memref<2x10xf32, #tpu.memory_space<vmem>>, vector<2x10xf32>
    tpu.vector_store %arg13[%c0_337, %c0_338], %387 {strides = array<i32>} : memref<2x10xf32, #tpu.memory_space<vmem>>, vector<2x10xf32>,
    return
  }
}

</mosaic_0001>

<llo_original>
// kernel: forward.1
$region0: #{forward.1}
  #allocation0 [shape = 'u32[]', space=smem, size = 0x4, offset = 0x4, fixed_abs, tag = 'smem constant byte address 0x4 - core index']
  #allocation1 [shape = 'u32[144,128]{1,0:T(1,128)}', space=vmem, size = 0x12000, scoped, tag = 'internal scratch']
  #allocation2 [shape = 'f32[4,2,9,9,8]{4,3,2,1,0:T(8,128)}', space=vmem, size = 0x90000, scoped, tag = 'scratch operand']
  %s0 = inlined_call_operand.vmem [shape: f32[4,2,9,9,4], index: 0, kind: input, shape index: {}]
  %s1 = inlined_call_operand.vmem [shape: bf16[36,8], index: 1, kind: input, shape index: {}]
  %s2 = inlined_call_operand.vmem [shape: f32[1,8], index: 2, kind: input, shape index: {}]
  %s3 = inlined_call_operand.vmem [shape: f32[1,8], index: 3, kind: input, shape index: {}]
  %s4 = inlined_call_operand.vmem [shape: bf16[72,16], index: 4, kind: input, shape index: {}]
  %s5 = inlined_call_operand.vmem [shape: f32[1,16], index: 5, kind: input, shape index: {}]
  %s6 = inlined_call_operand.vmem [shape: f32[1,16], index: 6, kind: input, shape index: {}]
  %s7 = inlined_call_operand.vmem [shape: bf16[1024,32], index: 7, kind: input, shape index: {}]
  %s8 = inlined_call_operand.vmem [shape: f32[1,32], index: 8, kind: input, shape index: {}]
  %s9 = inlined_call_operand.vmem [shape: f32[1,32], index: 9, kind: input, shape index: {}]
  %s10 = inlined_call_operand.vmem [shape: bf16[32,10], index: 10, kind: input, shape index: {}]
  %s11 = inlined_call_operand.vmem [shape: f32[1,10], index: 11, kind: input, shape index: {}]
  %s12 = inlined_call_operand.vmem [shape: f32[1,10], index: 12, kind: input, shape index: {}]
  %s13 = inlined_call_operand.hbm [shape: f32[2,10], index: 13, kind: output, shape index: {}]
  %s14 = sld [smem:[#allocation0]]
  $region62: #{forward.1} parent=0
    _
  %s16 = ssub.s32 1, %s14
  %s17 = scalar_select 0, %s16, %s14
  $region1: #{forward.1} parent=0
    #allocation3 [shape = 'u8[1024]{0}', space=vmem, size = 0x400, scoped, tag = 'output window, operand 0, single buffered']
    #allocation4 [shape = 's32[1]{0}', space=sflag, size = 0x4, scoped, tag = 'scoped memory for forward.1']
    %18 = vsyncpa [#allocation4], 0
    // Predicated region
    $region2: #{forward.1} parent=1 // pred_check
      _
    $region3: #{forward.1} parent=1 // pred_check_branch
      %20 = sbr.rel (0) target = $region5
    $region4: #{forward.1} parent=1 // pred_region
      _
    $region5: #{forward.1} parent=1 // pred_fallthru
      _
    // Predicated region
    $region6: #{forward.1} parent=1 // pred_check
      _
    $region7: #{forward.1} parent=1 // pred_check_branch
      %22 = sbr.rel (0) target = $region9
    $region8: #{forward.1} parent=1 // pred_region
      _
    $region9: #{forward.1} parent=1 // pred_fallthru
      _
    // Predicated region
    $region10: #{forward.1} parent=1 // pred_check
      _
    $region11: #{forward.1} parent=1 // pred_check_branch
      %24 = sbr.rel (0) target = $region13
    $region12: #{forward.1} parent=1 // pred_region
      _
    $region13: #{forward.1} parent=1 // pred_fallthru
      _
    // Predicated region
    $region14: #{forward.1} parent=1 // pred_check
      _
    $region15: #{forward.1} parent=1 // pred_check_branch
      %26 = sbr.rel (0) target = $region17
    $region16: #{forward.1} parent=1 // pred_region
      _
    $region17: #{forward.1} parent=1 // pred_fallthru
      _
    // Predicated region
    $region18: #{forward.1} parent=1 // pred_check
      _
    $region19: #{forward.1} parent=1 // pred_check_branch
      %28 = sbr.rel (0) target = $region21
    $region20: #{forward.1} parent=1 // pred_region
      _
    $region21: #{forward.1} parent=1 // pred_fallthru
      _
    // Predicated region
    $region22: #{forward.1} parent=1 // pred_check
      _
    $region23: #{forward.1} parent=1 // pred_check_branch
      %30 = sbr.rel (0) target = $region25
    $region24: #{forward.1} parent=1 // pred_region
      _
    $region25: #{forward.1} parent=1 // pred_fallthru
      _
    // Predicated region
    $region26: #{forward.1} parent=1 // pred_check
      _
    $region27: #{forward.1} parent=1 // pred_check_branch
      %32 = sbr.rel (0) target = $region29
    $region28: #{forward.1} parent=1 // pred_region
      _
    $region29: #{forward.1} parent=1 // pred_fallthru
      _
    // Predicated region
    $region30: #{forward.1} parent=1 // pred_check
      _
    $region31: #{forward.1} parent=1 // pred_check_branch
      %34 = sbr.rel (0) target = $region33
    $region32: #{forward.1} parent=1 // pred_region
      _
    $region33: #{forward.1} parent=1 // pred_fallthru
      _
    // Predicated region
    $region34: #{forward.1} parent=1 // pred_check
      _
    $region35: #{forward.1} parent=1 // pred_check_branch
      %36 = sbr.rel (0) target = $region37
    $region36: #{forward.1} parent=1 // pred_region
      _
    $region37: #{forward.1} parent=1 // pred_fallthru
      _
    // Predicated region
    $region38: #{forward.1} parent=1 // pred_check
      _
    $region39: #{forward.1} parent=1 // pred_check_branch
      %38 = sbr.rel (0) target = $region41
    $region40: #{forward.1} parent=1 // pred_region
      _
    $region41: #{forward.1} parent=1 // pred_fallthru
      _
    // Predicated region
    $region42: #{forward.1} parent=1 // pred_check
      _
    $region43: #{forward.1} parent=1 // pred_check_branch
      %40 = sbr.rel (0) target = $region45
    $region44: #{forward.1} parent=1 // pred_region
      _
    $region45: #{forward.1} parent=1 // pred_fallthru
      _
    // Predicated region
    $region46: #{forward.1} parent=1 // pred_check
      _
    $region47: #{forward.1} parent=1 // pred_check_branch
      %42 = sbr.rel (0) target = $region49
    $region48: #{forward.1} parent=1 // pred_region
      _
    $region49: #{forward.1} parent=1 // pred_fallthru
      _
    // Predicated region
    $region50: #{forward.1} parent=1 // pred_check
      _
    $region51: #{forward.1} parent=1 // pred_check_branch
      %44 = sbr.rel (0) target = $region53
    $region52: #{forward.1} parent=1 // pred_region
      _
    $region53: #{forward.1} parent=1 // pred_fallthru
      _
    %vm46 = vcmask 64512
    %47 = vst.msk [vmem:[#allocation2] sm:$0xff] %vm46, 0.0
    %vm48 = vcmask 57344
    %49 = vst.msk [vmem:[#allocation2 + $0x8] sm:$0x1] %vm48, 0.0
    %50 = vst.msk [vmem:[#allocation2 + $0x90] sm:$0xff] %vm46, 0.0
    %51 = vst.msk [vmem:[#allocation2 + $0x98] sm:$0x1] %vm48, 0.0
    %52 = vst.msk [vmem:[#allocation2] sm:$0x1] %vm48, 0.0
    %53 = vst.msk [vmem:[#allocation2 + $0x10] sm:$0x1] %vm48, 0.0
    %54 = vst.msk [vmem:[#allocation2 + $0x20] sm:$0x1] %vm48, 0.0
    %55 = vst.msk [vmem:[#allocation2 + $0x30] sm:$0x1] %vm48, 0.0
    %56 = vst.msk [vmem:[#allocation2 + $0x40] sm:$0x1] %vm48, 0.0
    %57 = vst.msk [vmem:[#allocation2 + $0x50] sm:$0x1] %vm48, 0.0
    %58 = vst.msk [vmem:[#allocation2 + $0x60] sm:$0x1] %vm48, 0.0
    %59 = vst.msk [vmem:[#allocation2 + $0x70] sm:$0x1] %vm48, 0.0
    %60 = vst.msk [vmem:[#allocation2 + $0x80] sm:$0x1] %vm48, 0.0
    %61 = vst.msk [vmem:[#allocation2 + $0x90] sm:$0x1] %vm48, 0.0
    %62 = vst.msk [vmem:[#allocation2 + $0xa0] sm:$0x1] %vm48, 0.0
    %63 = vst.msk [vmem:[#allocation2 + $0xb0] sm:$0x1] %vm48, 0.0
    %64 = vst.msk [vmem:[#allocation2 + $0xc0] sm:$0x1] %vm48, 0.0
    %65 = vst.msk [vmem:[#allocation2 + $0xd0] sm:$0x1] %vm48, 0.0
    %66 = vst.msk [vmem:[#allocation2 + $0xe0] sm:$0x1] %vm48, 0.0
    %67 = vst.msk [vmem:[#allocation2 + $0xf0] sm:$0x1] %vm48, 0.0
    %68 = vst.msk [vmem:[#allocation2 + $0x100] sm:$0x1] %vm48, 0.0
    %69 = vst.msk [vmem:[#allocation2 + $0x110] sm:$0x1] %vm48, 0.0
    %s70 = scalar_lea.vmem [#allocation2], 288
    %71 = vst.msk [vmem:[%s70] sm:$0xff] %vm46, 0.0
    %72 = vst.msk [vmem:[%s70 + $0x8] sm:$0x1] %vm48, 0.0
    %73 = vst.msk [vmem:[%s70 + $0x90] sm:$0xff] %vm46, 0.0
    %74 = vst.msk [vmem:[%s70 + $0x98] sm:$0x1] %vm48, 0.0
    %75 = vst.msk [vmem:[%s70 + $0x8] sm:$0x1] %vm48, 0.0
    %76 = vst.msk [vmem:[%s70 + $0x18] sm:$0x1] %vm48, 0.0
    %77 = vst.msk [vmem:[%s70 + $0x28] sm:$0x1] %vm48, 0.0
    %78 = vst.msk [vmem:[%s70 + $0x38] sm:$0x1] %vm48, 0.0
    %79 = vst.msk [vmem:[%s70 + $0x48] sm:$0x1] %vm48, 0.0
    %80 = vst.msk [vmem:[%s70 + $0x58] sm:$0x1] %vm48, 0.0
    %81 = vst.msk [vmem:[%s70 + $0x68] sm:$0x1] %vm48, 0.0
    %82 = vst.msk [vmem:[%s70 + $0x78] sm:$0x1] %vm48, 0.0
    %83 = vst.msk [vmem:[%s70 + $0x88] sm:$0x1] %vm48, 0.0
    %84 = vst.msk [vmem:[%s70 + $0x98] sm:$0x1] %vm48, 0.0
    %85 = vst.msk [vmem:[%s70 + $0xa8] sm:$0x1] %vm48, 0.0
    %86 = vst.msk [vmem:[%s70 + $0xb8] sm:$0x1] %vm48, 0.0
    %87 = vst.msk [vmem:[%s70 + $0xc8] sm:$0x1] %vm48, 0.0
    %88 = vst.msk [vmem:[%s70 + $0xd8] sm:$0x1] %vm48, 0.0
    %89 = vst.msk [vmem:[%s70 + $0xe8] sm:$0x1] %vm48, 0.0
    %90 = vst.msk [vmem:[%s70 + $0xf8] sm:$0x1] %vm48, 0.0
    %91 = vst.msk [vmem:[%s70 + $0x108] sm:$0x1] %vm48, 0.0
    %92 = vst.msk [vmem:[%s70 + $0x118] sm:$0x1] %vm48, 0.0
    %s93 = scalar_lea.vmem [#allocation2], 704
    %94 = vst.msk [vmem:[%s93] sm:$0xff] %vm46, 0.0
    %95 = vst.msk [vmem:[%s93 + $0x8] sm:$0x1] %vm48, 0.0
    %96 = vst.msk [vmem:[%s93 + $0x90] sm:$0xff] %vm46, 0.0
    %97 = vst.msk [vmem:[%s93 + $0x98] sm:$0x1] %vm48, 0.0
    %s98 = scalar_lea.vmem [#allocation2], 576
    %99 = vst.msk [vmem:[%s98] sm:$0x1] %vm48, 0.0
    %100 = vst.msk [vmem:[%s98 + $0x10] sm:$0x1] %vm48, 0.0
    %101 = vst.msk [vmem:[%s98 + $0x20] sm:$0x1] %vm48, 0.0
    %102 = vst.msk [vmem:[%s98 + $0x30] sm:$0x1] %vm48, 0.0
    %103 = vst.msk [vmem:[%s98 + $0x40] sm:$0x1] %vm48, 0.0
    %104 = vst.msk [vmem:[%s98 + $0x50] sm:$0x1] %vm48, 0.0
    %105 = vst.msk [vmem:[%s98 + $0x60] sm:$0x1] %vm48, 0.0
    %106 = vst.msk [vmem:[%s98 + $0x70] sm:$0x1] %vm48, 0.0
    %107 = vst.msk [vmem:[%s98 + $0x80] sm:$0x1] %vm48, 0.0
    %108 = vst.msk [vmem:[%s98 + $0x90] sm:$0x1] %vm48, 0.0
    %109 = vst.msk [vmem:[%s98 + $0xa0] sm:$0x1] %vm48, 0.0
    %110 = vst.msk [vmem:[%s98 + $0xb0] sm:$0x1] %vm48, 0.0
    %111 = vst.msk [vmem:[%s98 + $0xc0] sm:$0x1] %vm48, 0.0
    %112 = vst.msk [vmem:[%s98 + $0xd0] sm:$0x1] %vm48, 0.0
    %113 = vst.msk [vmem:[%s98 + $0xe0] sm:$0x1] %vm48, 0.0
    %114 = vst.msk [vmem:[%s98 + $0xf0] sm:$0x1] %vm48, 0.0
    %115 = vst.msk [vmem:[%s98 + $0x100] sm:$0x1] %vm48, 0.0
    %116 = vst.msk [vmem:[%s98 + $0x110] sm:$0x1] %vm48, 0.0
    %s117 = scalar_lea.vmem [#allocation2], 992
    %118 = vst.msk [vmem:[%s117] sm:$0xff] %vm46, 0.0
    %119 = vst.msk [vmem:[%s117 + $0x8] sm:$0x1] %vm48, 0.0
    %120 = vst.msk [vmem:[%s117 + $0x90] sm:$0xff] %vm46, 0.0
    %121 = vst.msk [vmem:[%s117 + $0x98] sm:$0x1] %vm48, 0.0
    %s122 = scalar_lea.vmem [#allocation2], 864
    %123 = vst.msk [vmem:[%s122 + $0x8] sm:$0x1] %vm48, 0.0
    %124 = vst.msk [vmem:[%s122 + $0x18] sm:$0x1] %vm48, 0.0
    %125 = vst.msk [vmem:[%s122 + $0x28] sm:$0x1] %vm48, 0.0
    %126 = vst.msk [vmem:[%s122 + $0x38] sm:$0x1] %vm48, 0.0
    %127 = vst.msk [vmem:[%s122 + $0x48] sm:$0x1] %vm48, 0.0
    %128 = vst.msk [vmem:[%s122 + $0x58] sm:$0x1] %vm48, 0.0
    %129 = vst.msk [vmem:[%s122 + $0x68] sm:$0x1] %vm48, 0.0
    %130 = vst.msk [vmem:[%s122 + $0x78] sm:$0x1] %vm48, 0.0
    %131 = vst.msk [vmem:[%s122 + $0x88] sm:$0x1] %vm48, 0.0
    %132 = vst.msk [vmem:[%s122 + $0x98] sm:$0x1] %vm48, 0.0
    %133 = vst.msk [vmem:[%s122 + $0xa8] sm:$0x1] %vm48, 0.0
    %134 = vst.msk [vmem:[%s122 + $0xb8] sm:$0x1] %vm48, 0.0
    %135 = vst.msk [vmem:[%s122 + $0xc8] sm:$0x1] %vm48, 0.0
    %136 = vst.msk [vmem:[%s122 + $0xd8] sm:$0x1] %vm48, 0.0
    %137 = vst.msk [vmem:[%s122 + $0xe8] sm:$0x1] %vm48, 0.0
    %138 = vst.msk [vmem:[%s122 + $0xf8] sm:$0x1] %vm48, 0.0
    %139 = vst.msk [vmem:[%s122 + $0x108] sm:$0x1] %vm48, 0.0
    %140 = vst.msk [vmem:[%s122 + $0x118] sm:$0x1] %vm48, 0.0
    %v141 = vld [vmem:[%s0] sm:$0xff]
    %v142 = vld [vmem:[%s0 + $0x10] sm:$0xff]
    %v143 = vld [vmem:[%s0 + $0x20] sm:$0xff]
    %v144 = vld [vmem:[%s0 + $0x30] sm:$0xff]
    %v145 = vld [vmem:[%s0 + $0x40] sm:$0xff]
    %v146 = vld [vmem:[%s0 + $0x50] sm:$0xff]
    %v147 = vld [vmem:[%s0 + $0x60] sm:$0xff]
    %v148 = vld [vmem:[%s0 + $0x70] sm:$0xff]
    %v149 = vld [vmem:[%s0 + $0x90] sm:$0xff]
    %v150 = vld [vmem:[%s0 + $0xa0] sm:$0xff]
    %v151 = vld [vmem:[%s0 + $0xb0] sm:$0xff]
    %v152 = vld [vmem:[%s0 + $0xc0] sm:$0xff]
    %v153 = vld [vmem:[%s0 + $0xd0] sm:$0xff]
    %v154 = vld [vmem:[%s0 + $0xe0] sm:$0xff]
    %v155 = vld [vmem:[%s0 + $0xf0] sm:$0xff]
    %v156 = vld [vmem:[%s0 + $0x100] sm:$0xff]
    %s157 = scalar_lea.vmem %s0, 288
    %v158 = vld [vmem:[%s157] sm:$0xff]
    %v159 = vld [vmem:[%s157 + $0x10] sm:$0xff]
    %v160 = vld [vmem:[%s157 + $0x20] sm:$0xff]
    %v161 = vld [vmem:[%s157 + $0x30] sm:$0xff]
    %v162 = vld [vmem:[%s157 + $0x40] sm:$0xff]
    %v163 = vld [vmem:[%s157 + $0x50] sm:$0xff]
    %v164 = vld [vmem:[%s157 + $0x60] sm:$0xff]
    %v165 = vld [vmem:[%s157 + $0x70] sm:$0xff]
    %v166 = vld [vmem:[%s157 + $0x90] sm:$0xff]
    %v167 = vld [vmem:[%s157 + $0xa0] sm:$0xff]
    %v168 = vld [vmem:[%s157 + $0xb0] sm:$0xff]
    %v169 = vld [vmem:[%s157 + $0xc0] sm:$0xff]
    %v170 = vld [vmem:[%s157 + $0xd0] sm:$0xff]
    %v171 = vld [vmem:[%s157 + $0xe0] sm:$0xff]
    %v172 = vld [vmem:[%s157 + $0xf0] sm:$0xff]
    %v173 = vld [vmem:[%s157 + $0x100] sm:$0xff]
    %v174 = vld [vmem:[%s0 + $0x1] sm:$0xff]
    %v175 = vld [vmem:[%s0 + $0x11] sm:$0xff]
    %v176 = vld [vmem:[%s0 + $0x21] sm:$0xff]
    %v177 = vld [vmem:[%s0 + $0x31] sm:$0xff]
    %v178 = vld [vmem:[%s0 + $0x41] sm:$0xff]
    %v179 = vld [vmem:[%s0 + $0x51] sm:$0xff]
    %v180 = vld [vmem:[%s0 + $0x61] sm:$0xff]
    %v181 = vld [vmem:[%s0 + $0x71] sm:$0xff]
    %v182 = vld [vmem:[%s0 + $0x91] sm:$0xff]
    %v183 = vld [vmem:[%s0 + $0xa1] sm:$0xff]
    %v184 = vld [vmem:[%s0 + $0xb1] sm:$0xff]
    %v185 = vld [vmem:[%s0 + $0xc1] sm:$0xff]
    %v186 = vld [vmem:[%s0 + $0xd1] sm:$0xff]
    %v187 = vld [vmem:[%s0 + $0xe1] sm:$0xff]
    %v188 = vld [vmem:[%s0 + $0xf1] sm:$0xff]
    %v189 = vld [vmem:[%s0 + $0x101] sm:$0xff]
    %s190 = scalar_lea.vmem %s0, 576
    %v191 = vld [vmem:[%s190] sm:$0xff]
    %v192 = vld [vmem:[%s190 + $0x10] sm:$0xff]
    %v193 = vld [vmem:[%s190 + $0x20] sm:$0xff]
    %v194 = vld [vmem:[%s190 + $0x30] sm:$0xff]
    %v195 = vld [vmem:[%s190 + $0x40] sm:$0xff]
    %v196 = vld [vmem:[%s190 + $0x50] sm:$0xff]
    %v197 = vld [vmem:[%s190 + $0x60] sm:$0xff]
    %v198 = vld [vmem:[%s190 + $0x70] sm:$0xff]
    %v199 = vld [vmem:[%s190 + $0x90] sm:$0xff]
    %v200 = vld [vmem:[%s190 + $0xa0] sm:$0xff]
    %v201 = vld [vmem:[%s190 + $0xb0] sm:$0xff]
    %v202 = vld [vmem:[%s190 + $0xc0] sm:$0xff]
    %v203 = vld [vmem:[%s190 + $0xd0] sm:$0xff]
    %v204 = vld [vmem:[%s190 + $0xe0] sm:$0xff]
    %v205 = vld [vmem:[%s190 + $0xf0] sm:$0xff]
    %v206 = vld [vmem:[%s190 + $0x100] sm:$0xff]
    %s207 = scalar_lea.vmem %s0, 864
    %v208 = vld [vmem:[%s207] sm:$0xff]
    %v209 = vld [vmem:[%s207 + $0x10] sm:$0xff]
    %v210 = vld [vmem:[%s207 + $0x20] sm:$0xff]
    %v211 = vld [vmem:[%s207 + $0x30] sm:$0xff]
    %v212 = vld [vmem:[%s207 + $0x40] sm:$0xff]
    %v213 = vld [vmem:[%s207 + $0x50] sm:$0xff]
    %v214 = vld [vmem:[%s207 + $0x60] sm:$0xff]
    %v215 = vld [vmem:[%s207 + $0x70] sm:$0xff]
    %v216 = vld [vmem:[%s207 + $0x90] sm:$0xff]
    %v217 = vld [vmem:[%s207 + $0xa0] sm:$0xff]
    %v218 = vld [vmem:[%s207 + $0xb0] sm:$0xff]
    %v219 = vld [vmem:[%s207 + $0xc0] sm:$0xff]
    %v220 = vld [vmem:[%s207 + $0xd0] sm:$0xff]
    %v221 = vld [vmem:[%s207 + $0xe0] sm:$0xff]
    %v222 = vld [vmem:[%s207 + $0xf0] sm:$0xff]
    %v223 = vld [vmem:[%s207 + $0x100] sm:$0xff]
    %v224 = vld [vmem:[%s190 + $0x1] sm:$0xff]
    %v225 = vld [vmem:[%s190 + $0x11] sm:$0xff]
    %v226 = vld [vmem:[%s190 + $0x21] sm:$0xff]
    %v227 = vld [vmem:[%s190 + $0x31] sm:$0xff]
    %v228 = vld [vmem:[%s190 + $0x41] sm:$0xff]
    %v229 = vld [vmem:[%s190 + $0x51] sm:$0xff]
    %v230 = vld [vmem:[%s190 + $0x61] sm:$0xff]
    %v231 = vld [vmem:[%s190 + $0x71] sm:$0xff]
    %v232 = vld [vmem:[%s190 + $0x91] sm:$0xff]
    %v233 = vld [vmem:[%s190 + $0xa1] sm:$0xff]
    %v234 = vld [vmem:[%s190 + $0xb1] sm:$0xff]
    %v235 = vld [vmem:[%s190 + $0xc1] sm:$0xff]
    %v236 = vld [vmem:[%s190 + $0xd1] sm:$0xff]
    %v237 = vld [vmem:[%s190 + $0xe1] sm:$0xff]
    %v238 = vld [vmem:[%s190 + $0xf1] sm:$0xff]
    %v239 = vld [vmem:[%s190 + $0x101] sm:$0xff]
    %s240 = scalar_lea.vmem %s0, 16
    %v241 = vld [vmem:[%s240] sm:$0xff]
    %v242 = vld [vmem:[%s240 + $0x10] sm:$0xff]
    %v243 = vld [vmem:[%s240 + $0x20] sm:$0xff]
    %v244 = vld [vmem:[%s240 + $0x30] sm:$0xff]
    %v245 = vld [vmem:[%s240 + $0x40] sm:$0xff]
    %v246 = vld [vmem:[%s240 + $0x50] sm:$0xff]
    %v247 = vld [vmem:[%s240 + $0x60] sm:$0xff]
    %v248 = vld [vmem:[%s240 + $0x70] sm:$0xff]
    %v249 = vld [vmem:[%s240 + $0x90] sm:$0xff]
    %v250 = vld [vmem:[%s240 + $0xa0] sm:$0xff]
    %v251 = vld [vmem:[%s240 + $0xb0] sm:$0xff]
    %v252 = vld [vmem:[%s240 + $0xc0] sm:$0xff]
    %v253 = vld [vmem:[%s240 + $0xd0] sm:$0xff]
    %v254 = vld [vmem:[%s240 + $0xe0] sm:$0xff]
    %v255 = vld [vmem:[%s240 + $0xf0] sm:$0xff]
    %v256 = vld [vmem:[%s240 + $0x100] sm:$0xff]
    %s257 = scalar_lea.vmem %s0, 304
    %v258 = vld [vmem:[%s257] sm:$0xff]
    %v259 = vld [vmem:[%s257 + $0x10] sm:$0xff]
    %v260 = vld [vmem:[%s257 + $0x20] sm:$0xff]
    %v261 = vld [vmem:[%s257 + $0x30] sm:$0xff]
    %v262 = vld [vmem:[%s257 + $0x40] sm:$0xff]
    %v263 = vld [vmem:[%s257 + $0x50] sm:$0xff]
    %v264 = vld [vmem:[%s257 + $0x60] sm:$0xff]
    %v265 = vld [vmem:[%s257 + $0x70] sm:$0xff]
    %v266 = vld [vmem:[%s257 + $0x90] sm:$0xff]
    %v267 = vld [vmem:[%s257 + $0xa0] sm:$0xff]
    %v268 = vld [vmem:[%s257 + $0xb0] sm:$0xff]
    %v269 = vld [vmem:[%s257 + $0xc0] sm:$0xff]
    %v270 = vld [vmem:[%s257 + $0xd0] sm:$0xff]
    %v271 = vld [vmem:[%s257 + $0xe0] sm:$0xff]
    %v272 = vld [vmem:[%s257 + $0xf0] sm:$0xff]
    %v273 = vld [vmem:[%s257 + $0x100] sm:$0xff]
    %v274 = vld [vmem:[%s240 + $0x1] sm:$0xff]
    %v275 = vld [vmem:[%s240 + $0x11] sm:$0xff]
    %v276 = vld [vmem:[%s240 + $0x21] sm:$0xff]
    %v277 = vld [vmem:[%s240 + $0x31] sm:$0xff]
    %v278 = vld [vmem:[%s240 + $0x41] sm:$0xff]
    %v279 = vld [vmem:[%s240 + $0x51] sm:$0xff]
    %v280 = vld [vmem:[%s240 + $0x61] sm:$0xff]
    %v281 = vld [vmem:[%s240 + $0x71] sm:$0xff]
    %v282 = vld [vmem:[%s240 + $0x91] sm:$0xff]
    %v283 = vld [vmem:[%s240 + $0xa1] sm:$0xff]
    %v284 = vld [vmem:[%s240 + $0xb1] sm:$0xff]
    %v285 = vld [vmem:[%s240 + $0xc1] sm:$0xff]
    %v286 = vld [vmem:[%s240 + $0xd1] sm:$0xff]
    %v287 = vld [vmem:[%s240 + $0xe1] sm:$0xff]
    %v288 = vld [vmem:[%s240 + $0xf1] sm:$0xff]
    %v289 = vld [vmem:[%s240 + $0x101] sm:$0xff]
    %306 = vrot.lane.b32.xlu0 %v158, 4
    %v307 = vpop.permute.xlu0 %306
    %308 = vrot.lane.b32.xlu0 %v159, 4
    %v309 = vpop.permute.xlu0 %308
    %310 = vrot.lane.b32.xlu0 %v160, 4
    %v311 = vpop.permute.xlu0 %310
    %312 = vrot.lane.b32.xlu0 %v161, 4
    %v313 = vpop.permute.xlu0 %312
    %314 = vrot.lane.b32.xlu0 %v162, 4
    %v315 = vpop.permute.xlu0 %314
    %316 = vrot.lane.b32.xlu0 %v163, 4
    %v317 = vpop.permute.xlu0 %316
    %318 = vrot.lane.b32.xlu0 %v164, 4
    %v319 = vpop.permute.xlu0 %318
    %320 = vrot.lane.b32.xlu0 %v165, 4
    %v321 = vpop.permute.xlu0 %320
    %322 = vrot.lane.b32.xlu0 %v166, 4
    %v323 = vpop.permute.xlu0 %322
    %324 = vrot.lane.b32.xlu0 %v167, 4
    %v325 = vpop.permute.xlu0 %324
    %326 = vrot.lane.b32.xlu0 %v168, 4
    %v327 = vpop.permute.xlu0 %326
    %328 = vrot.lane.b32.xlu0 %v169, 4
    %v329 = vpop.permute.xlu0 %328
    %330 = vrot.lane.b32.xlu0 %v170, 4
    %v331 = vpop.permute.xlu0 %330
    %332 = vrot.lane.b32.xlu0 %v171, 4
    %v333 = vpop.permute.xlu0 %332
    %334 = vrot.lane.b32.xlu0 %v172, 4
    %v335 = vpop.permute.xlu0 %334
    %336 = vrot.lane.b32.xlu0 %v173, 4
    %v337 = vpop.permute.xlu0 %336
    %370 = vrot.lane.b32.xlu0 %v174, 8
    %v371 = vpop.permute.xlu0 %370
    %372 = vrot.lane.b32.xlu0 %v175, 8
    %v373 = vpop.permute.xlu0 %372
    %374 = vrot.lane.b32.xlu0 %v176, 8
    %v375 = vpop.permute.xlu0 %374
    %376 = vrot.lane.b32.xlu0 %v177, 8
    %v377 = vpop.permute.xlu0 %376
    %378 = vrot.lane.b32.xlu0 %v178, 8
    %v379 = vpop.permute.xlu0 %378
    %380 = vrot.lane.b32.xlu0 %v179, 8
    %v381 = vpop.permute.xlu0 %380
    %382 = vrot.lane.b32.xlu0 %v180, 8
    %v383 = vpop.permute.xlu0 %382
    %384 = vrot.lane.b32.xlu0 %v181, 8
    %v385 = vpop.permute.xlu0 %384
    %386 = vrot.lane.b32.xlu0 %v182, 8
    %v387 = vpop.permute.xlu0 %386
    %388 = vrot.lane.b32.xlu0 %v183, 8
    %v389 = vpop.permute.xlu0 %388
    %390 = vrot.lane.b32.xlu0 %v184, 8
    %v391 = vpop.permute.xlu0 %390
    %392 = vrot.lane.b32.xlu0 %v185, 8
    %v393 = vpop.permute.xlu0 %392
    %394 = vrot.lane.b32.xlu0 %v186, 8
    %v395 = vpop.permute.xlu0 %394
    %396 = vrot.lane.b32.xlu0 %v187, 8
    %v397 = vpop.permute.xlu0 %396
    %398 = vrot.lane.b32.xlu0 %v188, 8
    %v399 = vpop.permute.xlu0 %398
    %400 = vrot.lane.b32.xlu0 %v189, 8
    %v401 = vpop.permute.xlu0 %400
    %434 = vrot.lane.b32.xlu0 %v191, 12
    %v435 = vpop.permute.xlu0 %434
    %436 = vrot.lane.b32.xlu0 %v192, 12
    %v437 = vpop.permute.xlu0 %436
    %438 = vrot.lane.b32.xlu0 %v193, 12
    %v439 = vpop.permute.xlu0 %438
    %440 = vrot.lane.b32.xlu0 %v194, 12
    %v441 = vpop.permute.xlu0 %440
    %442 = vrot.lane.b32.xlu0 %v195, 12
    %v443 = vpop.permute.xlu0 %442
    %444 = vrot.lane.b32.xlu0 %v196, 12
    %v445 = vpop.permute.xlu0 %444
    %446 = vrot.lane.b32.xlu0 %v197, 12
    %v447 = vpop.permute.xlu0 %446
    %448 = vrot.lane.b32.xlu0 %v198, 12
    %v449 = vpop.permute.xlu0 %448
    %450 = vrot.lane.b32.xlu0 %v199, 12
    %v451 = vpop.permute.xlu0 %450
    %452 = vrot.lane.b32.xlu0 %v200, 12
    %v453 = vpop.permute.xlu0 %452
    %454 = vrot.lane.b32.xlu0 %v201, 12
    %v455 = vpop.permute.xlu0 %454
    %456 = vrot.lane.b32.xlu0 %v202, 12
    %v457 = vpop.permute.xlu0 %456
    %458 = vrot.lane.b32.xlu0 %v203, 12
    %v459 = vpop.permute.xlu0 %458
    %460 = vrot.lane.b32.xlu0 %v204, 12
    %v461 = vpop.permute.xlu0 %460
    %462 = vrot.lane.b32.xlu0 %v205, 12
    %v463 = vpop.permute.xlu0 %462
    %464 = vrot.lane.b32.xlu0 %v206, 12
    %v465 = vpop.permute.xlu0 %464
    %498 = vrot.lane.b32.xlu0 %v208, 16
    %v499 = vpop.permute.xlu0 %498
    %500 = vrot.lane.b32.xlu0 %v209, 16
    %v501 = vpop.permute.xlu0 %500
    %502 = vrot.lane.b32.xlu0 %v210, 16
    %v503 = vpop.permute.xlu0 %502
    %504 = vrot.lane.b32.xlu0 %v211, 16
    %v505 = vpop.permute.xlu0 %504
    %506 = vrot.lane.b32.xlu0 %v212, 16
    %v507 = vpop.permute.xlu0 %506
    %508 = vrot.lane.b32.xlu0 %v213, 16
    %v509 = vpop.permute.xlu0 %508
    %510 = vrot.lane.b32.xlu0 %v214, 16
    %v511 = vpop.permute.xlu0 %510
    %512 = vrot.lane.b32.xlu0 %v215, 16
    %v513 = vpop.permute.xlu0 %512
    %514 = vrot.lane.b32.xlu0 %v216, 16
    %v515 = vpop.permute.xlu0 %514
    %516 = vrot.lane.b32.xlu0 %v217, 16
    %v517 = vpop.permute.xlu0 %516
    %518 = vrot.lane.b32.xlu0 %v218, 16
    %v519 = vpop.permute.xlu0 %518
    %520 = vrot.lane.b32.xlu0 %v219, 16
    %v521 = vpop.permute.xlu0 %520
    %522 = vrot.lane.b32.xlu0 %v220, 16
    %v523 = vpop.permute.xlu0 %522
    %524 = vrot.lane.b32.xlu0 %v221, 16
    %v525 = vpop.permute.xlu0 %524
    %526 = vrot.lane.b32.xlu0 %v222, 16
    %v527 = vpop.permute.xlu0 %526
    %528 = vrot.lane.b32.xlu0 %v223, 16
    %v529 = vpop.permute.xlu0 %528
    %562 = vrot.lane.b32.xlu0 %v224, 20
    %v563 = vpop.permute.xlu0 %562
    %564 = vrot.lane.b32.xlu0 %v225, 20
    %v565 = vpop.permute.xlu0 %564
    %566 = vrot.lane.b32.xlu0 %v226, 20
    %v567 = vpop.permute.xlu0 %566
    %568 = vrot.lane.b32.xlu0 %v227, 20
    %v569 = vpop.permute.xlu0 %568
    %570 = vrot.lane.b32.xlu0 %v228, 20
    %v571 = vpop.permute.xlu0 %570
    %572 = vrot.lane.b32.xlu0 %v229, 20
    %v573 = vpop.permute.xlu0 %572
    %574 = vrot.lane.b32.xlu0 %v230, 20
    %v575 = vpop.permute.xlu0 %574
    %576 = vrot.lane.b32.xlu0 %v231, 20
    %v577 = vpop.permute.xlu0 %576
    %578 = vrot.lane.b32.xlu0 %v232, 20
    %v579 = vpop.permute.xlu0 %578
    %580 = vrot.lane.b32.xlu0 %v233, 20
    %v581 = vpop.permute.xlu0 %580
    %582 = vrot.lane.b32.xlu0 %v234, 20
    %v583 = vpop.permute.xlu0 %582
    %584 = vrot.lane.b32.xlu0 %v235, 20
    %v585 = vpop.permute.xlu0 %584
    %586 = vrot.lane.b32.xlu0 %v236, 20
    %v587 = vpop.permute.xlu0 %586
    %588 = vrot.lane.b32.xlu0 %v237, 20
    %v589 = vpop.permute.xlu0 %588
    %590 = vrot.lane.b32.xlu0 %v238, 20
    %v591 = vpop.permute.xlu0 %590
    %592 = vrot.lane.b32.xlu0 %v239, 20
    %v593 = vpop.permute.xlu0 %592
    %626 = vrot.lane.b32.xlu0 %v241, 24
    %v627 = vpop.permute.xlu0 %626
    %628 = vrot.lane.b32.xlu0 %v242, 24
    %v629 = vpop.permute.xlu0 %628
    %630 = vrot.lane.b32.xlu0 %v243, 24
    %v631 = vpop.permute.xlu0 %630
    %632 = vrot.lane.b32.xlu0 %v244, 24
    %v633 = vpop.permute.xlu0 %632
    %634 = vrot.lane.b32.xlu0 %v245, 24
    %v635 = vpop.permute.xlu0 %634
    %636 = vrot.lane.b32.xlu0 %v246, 24
    %v637 = vpop.permute.xlu0 %636
    %638 = vrot.lane.b32.xlu0 %v247, 24
    %v639 = vpop.permute.xlu0 %638
    %640 = vrot.lane.b32.xlu0 %v248, 24
    %v641 = vpop.permute.xlu0 %640
    %642 = vrot.lane.b32.xlu0 %v249, 24
    %v643 = vpop.permute.xlu0 %642
    %644 = vrot.lane.b32.xlu0 %v250, 24
    %v645 = vpop.permute.xlu0 %644
    %646 = vrot.lane.b32.xlu0 %v251, 24
    %v647 = vpop.permute.xlu0 %646
    %648 = vrot.lane.b32.xlu0 %v252, 24
    %v649 = vpop.permute.xlu0 %648
    %650 = vrot.lane.b32.xlu0 %v253, 24
    %v651 = vpop.permute.xlu0 %650
    %652 = vrot.lane.b32.xlu0 %v254, 24
    %v653 = vpop.permute.xlu0 %652
    %654 = vrot.lane.b32.xlu0 %v255, 24
    %v655 = vpop.permute.xlu0 %654
    %656 = vrot.lane.b32.xlu0 %v256, 24
    %v657 = vpop.permute.xlu0 %656
    %690 = vrot.lane.b32.xlu0 %v258, 28
    %v691 = vpop.permute.xlu0 %690
    %692 = vrot.lane.b32.xlu0 %v259, 28
    %v693 = vpop.permute.xlu0 %692
    %694 = vrot.lane.b32.xlu0 %v260, 28
    %v695 = vpop.permute.xlu0 %694
    %696 = vrot.lane.b32.xlu0 %v261, 28
    %v697 = vpop.permute.xlu0 %696
    %698 = vrot.lane.b32.xlu0 %v262, 28
    %v699 = vpop.permute.xlu0 %698
    %700 = vrot.lane.b32.xlu0 %v263, 28
    %v701 = vpop.permute.xlu0 %700
    %702 = vrot.lane.b32.xlu0 %v264, 28
    %v703 = vpop.permute.xlu0 %702
    %704 = vrot.lane.b32.xlu0 %v265, 28
    %v705 = vpop.permute.xlu0 %704
    %706 = vrot.lane.b32.xlu0 %v266, 28
    %v707 = vpop.permute.xlu0 %706
    %708 = vrot.lane.b32.xlu0 %v267, 28
    %v709 = vpop.permute.xlu0 %708
    %710 = vrot.lane.b32.xlu0 %v268, 28
    %v711 = vpop.permute.xlu0 %710
    %712 = vrot.lane.b32.xlu0 %v269, 28
    %v713 = vpop.permute.xlu0 %712
    %714 = vrot.lane.b32.xlu0 %v270, 28
    %v715 = vpop.permute.xlu0 %714
    %716 = vrot.lane.b32.xlu0 %v271, 28
    %v717 = vpop.permute.xlu0 %716
    %718 = vrot.lane.b32.xlu0 %v272, 28
    %v719 = vpop.permute.xlu0 %718
    %720 = vrot.lane.b32.xlu0 %v273, 28
    %v721 = vpop.permute.xlu0 %720
    %754 = vrot.lane.b32.xlu0 %v274, 32
    %v755 = vpop.permute.xlu0 %754
    %756 = vrot.lane.b32.xlu0 %v275, 32
    %v757 = vpop.permute.xlu0 %756
    %758 = vrot.lane.b32.xlu0 %v276, 32
    %v759 = vpop.permute.xlu0 %758
    %760 = vrot.lane.b32.xlu0 %v277, 32
    %v761 = vpop.permute.xlu0 %760
    %762 = vrot.lane.b32.xlu0 %v278, 32
    %v763 = vpop.permute.xlu0 %762
    %764 = vrot.lane.b32.xlu0 %v279, 32
    %v765 = vpop.permute.xlu0 %764
    %766 = vrot.lane.b32.xlu0 %v280, 32
    %v767 = vpop.permute.xlu0 %766
    %768 = vrot.lane.b32.xlu0 %v281, 32
    %v769 = vpop.permute.xlu0 %768
    %770 = vrot.lane.b32.xlu0 %v282, 32
    %v771 = vpop.permute.xlu0 %770
    %772 = vrot.lane.b32.xlu0 %v283, 32
    %v773 = vpop.permute.xlu0 %772
    %774 = vrot.lane.b32.xlu0 %v284, 32
    %v775 = vpop.permute.xlu0 %774
    %776 = vrot.lane.b32.xlu0 %v285, 32
    %v777 = vpop.permute.xlu0 %776
    %778 = vrot.lane.b32.xlu0 %v286, 32
    %v779 = vpop.permute.xlu0 %778
    %780 = vrot.lane.b32.xlu0 %v287, 32
    %v781 = vpop.permute.xlu0 %780
    %782 = vrot.lane.b32.xlu0 %v288, 32
    %v783 = vpop.permute.xlu0 %782
    %784 = vrot.lane.b32.xlu0 %v289, 32
    %v785 = vpop.permute.xlu0 %784
    %vm802 = vcmask 31744
    %v803 = vsel %vm802, %v141, %v307
    %v804 = vsel %vm802, %v142, %v309
    %v805 = vsel %vm802, %v143, %v311
    %v806 = vsel %vm802, %v144, %v313
    %v807 = vsel %vm802, %v145, %v315
    %v808 = vsel %vm802, %v146, %v317
    %v809 = vsel %vm802, %v147, %v319
    %v810 = vsel %vm802, %v148, %v321
    %v811 = vsel %vm802, %v149, %v323
    %v812 = vsel %vm802, %v150, %v325
    %v813 = vsel %vm802, %v151, %v327
    %v814 = vsel %vm802, %v152, %v329
    %v815 = vsel %vm802, %v153, %v331
    %v816 = vsel %vm802, %v154, %v333
    %v817 = vsel %vm802, %v155, %v335
    %v818 = vsel %vm802, %v156, %v337
    %v819 = vsel %vm46, %v803, %v371
    %v820 = vsel %vm46, %v804, %v373
    %v821 = vsel %vm46, %v805, %v375
    %v822 = vsel %vm46, %v806, %v377
    %v823 = vsel %vm46, %v807, %v379
    %v824 = vsel %vm46, %v808, %v381
    %v825 = vsel %vm46, %v809, %v383
    %v826 = vsel %vm46, %v810, %v385
    %v827 = vsel %vm46, %v811, %v387
    %v828 = vsel %vm46, %v812, %v389
    %v829 = vsel %vm46, %v813, %v391
    %v830 = vsel %vm46, %v814, %v393
    %v831 = vsel %vm46, %v815, %v395
    %v832 = vsel %vm46, %v816, %v397
    %v833 = vsel %vm46, %v817, %v399
    %v834 = vsel %vm46, %v818, %v401
    %vm835 = vcmask 97280
    %v836 = vsel %vm835, %v819, %v435
    %v837 = vsel %vm835, %v820, %v437
    %v838 = vsel %vm835, %v821, %v439
    %v839 = vsel %vm835, %v822, %v441
    %v840 = vsel %vm835, %v823, %v443
    %v841 = vsel %vm835, %v824, %v445
    %v842 = vsel %vm835, %v825, %v447
    %v843 = vsel %vm835, %v826, %v449
    %v844 = vsel %vm835, %v827, %v451
    %v845 = vsel %vm835, %v828, %v453
    %v846 = vsel %vm835, %v829, %v455
    %v847 = vsel %vm835, %v830, %v457
    %v848 = vsel %vm835, %v831, %v459
    %v849 = vsel %vm835, %v832, %v461
    %v850 = vsel %vm835, %v833, %v463
    %v851 = vsel %vm835, %v834, %v465
    %vm852 = vcmask 130048
    %v853 = vsel %vm852, %v836, %v499
    %v854 = vsel %vm852, %v837, %v501
    %v855 = vsel %vm852, %v838, %v503
    %v856 = vsel %vm852, %v839, %v505
    %v857 = vsel %vm852, %v840, %v507
    %v858 = vsel %vm852, %v841, %v509
    %v859 = vsel %vm852, %v842, %v511
    %v860 = vsel %vm852, %v843, %v513
    %v861 = vsel %vm852, %v844, %v515
    %v862 = vsel %vm852, %v845, %v517
    %v863 = vsel %vm852, %v846, %v519
    %v864 = vsel %vm852, %v847, %v521
    %v865 = vsel %vm852, %v848, %v523
    %v866 = vsel %vm852, %v849, %v525
    %v867 = vsel %vm852, %v850, %v527
    %v868 = vsel %vm852, %v851, %v529
    %vm869 = vcmask 162816
    %v870 = vsel %vm869, %v853, %v563
    %v871 = vsel %vm869, %v854, %v565
    %v872 = vsel %vm869, %v855, %v567
    %v873 = vsel %vm869, %v856, %v569
    %v874 = vsel %vm869, %v857, %v571
    %v875 = vsel %vm869, %v858, %v573
    %v876 = vsel %vm869, %v859, %v575
    %v877 = vsel %vm869, %v860, %v577
    %v878 = vsel %vm869, %v861, %v579
    %v879 = vsel %vm869, %v862, %v581
    %v880 = vsel %vm869, %v863, %v583
    %v881 = vsel %vm869, %v864, %v585
    %v882 = vsel %vm869, %v865, %v587
    %v883 = vsel %vm869, %v866, %v589
    %v884 = vsel %vm869, %v867, %v591
    %v885 = vsel %vm869, %v868, %v593
    %vm886 = vcmask 195584
    %v887 = vsel %vm886, %v870, %v627
    %v888 = vsel %vm886, %v871, %v629
    %v889 = vsel %vm886, %v872, %v631
    %v890 = vsel %vm886, %v873, %v633
    %v891 = vsel %vm886, %v874, %v635
    %v892 = vsel %vm886, %v875, %v637
    %v893 = vsel %vm886, %v876, %v639
    %v894 = vsel %vm886, %v877, %v641
    %v895 = vsel %vm886, %v878, %v643
    %v896 = vsel %vm886, %v879, %v645
    %v897 = vsel %vm886, %v880, %v647
    %v898 = vsel %vm886, %v881, %v649
    %v899 = vsel %vm886, %v882, %v651
    %v900 = vsel %vm886, %v883, %v653
    %v901 = vsel %vm886, %v884, %v655
    %v902 = vsel %vm886, %v885, %v657
    %vm903 = vcmask 228352
    %v904 = vsel %vm903, %v887, %v691
    %v905 = vsel %vm903, %v888, %v693
    %v906 = vsel %vm903, %v889, %v695
    %v907 = vsel %vm903, %v890, %v697
    %v908 = vsel %vm903, %v891, %v699
    %v909 = vsel %vm903, %v892, %v701
    %v910 = vsel %vm903, %v893, %v703
    %v911 = vsel %vm903, %v894, %v705
    %v912 = vsel %vm903, %v895, %v707
    %v913 = vsel %vm903, %v896, %v709
    %v914 = vsel %vm903, %v897, %v711
    %v915 = vsel %vm903, %v898, %v713
    %v916 = vsel %vm903, %v899, %v715
    %v917 = vsel %vm903, %v900, %v717
    %v918 = vsel %vm903, %v901, %v719
    %v919 = vsel %vm903, %v902, %v721
    %vm920 = vcmask 261120
    %v921 = vsel %vm920, %v904, %v755
    %v922 = vsel %vm920, %v905, %v757
    %v923 = vsel %vm920, %v906, %v759
    %v924 = vsel %vm920, %v907, %v761
    %v925 = vsel %vm920, %v908, %v763
    %v926 = vsel %vm920, %v909, %v765
    %v927 = vsel %vm920, %v910, %v767
    %v928 = vsel %vm920, %v911, %v769
    %v929 = vsel %vm920, %v912, %v771
    %v930 = vsel %vm920, %v913, %v773
    %v931 = vsel %vm920, %v914, %v775
    %v932 = vsel %vm920, %v915, %v777
    %v933 = vsel %vm920, %v916, %v779
    %v934 = vsel %vm920, %v917, %v781
    %v935 = vsel %vm920, %v918, %v783
    %v936 = vsel %vm920, %v919, %v785
    %v937 = vld [vmem:[%s157 + $0x1] sm:$0xff]
    %v938 = vld [vmem:[%s157 + $0x11] sm:$0xff]
    %v939 = vld [vmem:[%s157 + $0x21] sm:$0xff]
    %v940 = vld [vmem:[%s157 + $0x31] sm:$0xff]
    %v941 = vld [vmem:[%s157 + $0x41] sm:$0xff]
    %v942 = vld [vmem:[%s157 + $0x51] sm:$0xff]
    %v943 = vld [vmem:[%s157 + $0x61] sm:$0xff]
    %v944 = vld [vmem:[%s157 + $0x71] sm:$0xff]
    %v945 = vld [vmem:[%s157 + $0x91] sm:$0xff]
    %v946 = vld [vmem:[%s157 + $0xa1] sm:$0xff]
    %v947 = vld [vmem:[%s157 + $0xb1] sm:$0xff]
    %v948 = vld [vmem:[%s157 + $0xc1] sm:$0xff]
    %v949 = vld [vmem:[%s157 + $0xd1] sm:$0xff]
    %v950 = vld [vmem:[%s157 + $0xe1] sm:$0xff]
    %v951 = vld [vmem:[%s157 + $0xf1] sm:$0xff]
    %v952 = vld [vmem:[%s157 + $0x101] sm:$0xff]
    %v953 = vld [vmem:[%s207 + $0x1] sm:$0xff]
    %v954 = vld [vmem:[%s207 + $0x11] sm:$0xff]
    %v955 = vld [vmem:[%s207 + $0x21] sm:$0xff]
    %v956 = vld [vmem:[%s207 + $0x31] sm:$0xff]
    %v957 = vld [vmem:[%s207 + $0x41] sm:$0xff]
    %v958 = vld [vmem:[%s207 + $0x51] sm:$0xff]
    %v959 = vld [vmem:[%s207 + $0x61] sm:$0xff]
    %v960 = vld [vmem:[%s207 + $0x71] sm:$0xff]
    %v961 = vld [vmem:[%s207 + $0x91] sm:$0xff]
    %v962 = vld [vmem:[%s207 + $0xa1] sm:$0xff]
    %v963 = vld [vmem:[%s207 + $0xb1] sm:$0xff]
    %v964 = vld [vmem:[%s207 + $0xc1] sm:$0xff]
    %v965 = vld [vmem:[%s207 + $0xd1] sm:$0xff]
    %v966 = vld [vmem:[%s207 + $0xe1] sm:$0xff]
    %v967 = vld [vmem:[%s207 + $0xf1] sm:$0xff]
    %v968 = vld [vmem:[%s207 + $0x101] sm:$0xff]
    %v969 = vld [vmem:[%s257 + $0x1] sm:$0xff]
    %v970 = vld [vmem:[%s257 + $0x11] sm:$0xff]
    %v971 = vld [vmem:[%s257 + $0x21] sm:$0xff]
    %v972 = vld [vmem:[%s257 + $0x31] sm:$0xff]
    %v973 = vld [vmem:[%s257 + $0x41] sm:$0xff]
    %v974 = vld [vmem:[%s257 + $0x51] sm:$0xff]
    %v975 = vld [vmem:[%s257 + $0x61] sm:$0xff]
    %v976 = vld [vmem:[%s257 + $0x71] sm:$0xff]
    %v977 = vld [vmem:[%s257 + $0x91] sm:$0xff]
    %v978 = vld [vmem:[%s257 + $0xa1] sm:$0xff]
    %v979 = vld [vmem:[%s257 + $0xb1] sm:$0xff]
    %v980 = vld [vmem:[%s257 + $0xc1] sm:$0xff]
    %v981 = vld [vmem:[%s257 + $0xd1] sm:$0xff]
    %v982 = vld [vmem:[%s257 + $0xe1] sm:$0xff]
    %v983 = vld [vmem:[%s257 + $0xf1] sm:$0xff]
    %v984 = vld [vmem:[%s257 + $0x101] sm:$0xff]
    %985 = vrot.lane.b32.xlu0 %v174, 4
    %v986 = vpop.permute.xlu0 %985
    %987 = vrot.lane.b32.xlu0 %v175, 4
    %v988 = vpop.permute.xlu0 %987
    %989 = vrot.lane.b32.xlu0 %v176, 4
    %v990 = vpop.permute.xlu0 %989
    %991 = vrot.lane.b32.xlu0 %v177, 4
    %v992 = vpop.permute.xlu0 %991
    %993 = vrot.lane.b32.xlu0 %v178, 4
    %v994 = vpop.permute.xlu0 %993
    %995 = vrot.lane.b32.xlu0 %v179, 4
    %v996 = vpop.permute.xlu0 %995
    %997 = vrot.lane.b32.xlu0 %v180, 4
    %v998 = vpop.permute.xlu0 %997
    %999 = vrot.lane.b32.xlu0 %v181, 4
    %v1000 = vpop.permute.xlu0 %999
    %1001 = vrot.lane.b32.xlu0 %v182, 4
    %v1002 = vpop.permute.xlu0 %1001
    %1003 = vrot.lane.b32.xlu0 %v183, 4
    %v1004 = vpop.permute.xlu0 %1003
    %1005 = vrot.lane.b32.xlu0 %v184, 4
    %v1006 = vpop.permute.xlu0 %1005
    %1007 = vrot.lane.b32.xlu0 %v185, 4
    %v1008 = vpop.permute.xlu0 %1007
    %1009 = vrot.lane.b32.xlu0 %v186, 4
    %v1010 = vpop.permute.xlu0 %1009
    %1011 = vrot.lane.b32.xlu0 %v187, 4
    %v1012 = vpop.permute.xlu0 %1011
    %1013 = vrot.lane.b32.xlu0 %v188, 4
    %v1014 = vpop.permute.xlu0 %1013
    %1015 = vrot.lane.b32.xlu0 %v189, 4
    %v1016 = vpop.permute.xlu0 %1015
    %1049 = vrot.lane.b32.xlu0 %v937, 8
    %v1050 = vpop.permute.xlu0 %1049
    %1051 = vrot.lane.b32.xlu0 %v938, 8
    %v1052 = vpop.permute.xlu0 %1051
    %1053 = vrot.lane.b32.xlu0 %v939, 8
    %v1054 = vpop.permute.xlu0 %1053
    %1055 = vrot.lane.b32.xlu0 %v940, 8
    %v1056 = vpop.permute.xlu0 %1055
    %1057 = vrot.lane.b32.xlu0 %v941, 8
    %v1058 = vpop.permute.xlu0 %1057
    %1059 = vrot.lane.b32.xlu0 %v942, 8
    %v1060 = vpop.permute.xlu0 %1059
    %1061 = vrot.lane.b32.xlu0 %v943, 8
    %v1062 = vpop.permute.xlu0 %1061
    %1063 = vrot.lane.b32.xlu0 %v944, 8
    %v1064 = vpop.permute.xlu0 %1063
    %1065 = vrot.lane.b32.xlu0 %v945, 8
    %v1066 = vpop.permute.xlu0 %1065
    %1067 = vrot.lane.b32.xlu0 %v946, 8
    %v1068 = vpop.permute.xlu0 %1067
    %1069 = vrot.lane.b32.xlu0 %v947, 8
    %v1070 = vpop.permute.xlu0 %1069
    %1071 = vrot.lane.b32.xlu0 %v948, 8
    %v1072 = vpop.permute.xlu0 %1071
    %1073 = vrot.lane.b32.xlu0 %v949, 8
    %v1074 = vpop.permute.xlu0 %1073
    %1075 = vrot.lane.b32.xlu0 %v950, 8
    %v1076 = vpop.permute.xlu0 %1075
    %1077 = vrot.lane.b32.xlu0 %v951, 8
    %v1078 = vpop.permute.xlu0 %1077
    %1079 = vrot.lane.b32.xlu0 %v952, 8
    %v1080 = vpop.permute.xlu0 %1079
    %1097 = vrot.lane.b32.xlu0 %v208, 12
    %v1098 = vpop.permute.xlu0 %1097
    %1099 = vrot.lane.b32.xlu0 %v209, 12
    %v1100 = vpop.permute.xlu0 %1099
    %1101 = vrot.lane.b32.xlu0 %v210, 12
    %v1102 = vpop.permute.xlu0 %1101
    %1103 = vrot.lane.b32.xlu0 %v211, 12
    %v1104 = vpop.permute.xlu0 %1103
    %1105 = vrot.lane.b32.xlu0 %v212, 12
    %v1106 = vpop.permute.xlu0 %1105
    %1107 = vrot.lane.b32.xlu0 %v213, 12
    %v1108 = vpop.permute.xlu0 %1107
    %1109 = vrot.lane.b32.xlu0 %v214, 12
    %v1110 = vpop.permute.xlu0 %1109
    %1111 = vrot.lane.b32.xlu0 %v215, 12
    %v1112 = vpop.permute.xlu0 %1111
    %1113 = vrot.lane.b32.xlu0 %v216, 12
    %v1114 = vpop.permute.xlu0 %1113
    %1115 = vrot.lane.b32.xlu0 %v217, 12
    %v1116 = vpop.permute.xlu0 %1115
    %1117 = vrot.lane.b32.xlu0 %v218, 12
    %v1118 = vpop.permute.xlu0 %1117
    %1119 = vrot.lane.b32.xlu0 %v219, 12
    %v1120 = vpop.permute.xlu0 %1119
    %1121 = vrot.lane.b32.xlu0 %v220, 12
    %v1122 = vpop.permute.xlu0 %1121
    %1123 = vrot.lane.b32.xlu0 %v221, 12
    %v1124 = vpop.permute.xlu0 %1123
    %1125 = vrot.lane.b32.xlu0 %v222, 12
    %v1126 = vpop.permute.xlu0 %1125
    %1127 = vrot.lane.b32.xlu0 %v223, 12
    %v1128 = vpop.permute.xlu0 %1127
    %1145 = vrot.lane.b32.xlu0 %v224, 16
    %v1146 = vpop.permute.xlu0 %1145
    %1147 = vrot.lane.b32.xlu0 %v225, 16
    %v1148 = vpop.permute.xlu0 %1147
    %1149 = vrot.lane.b32.xlu0 %v226, 16
    %v1150 = vpop.permute.xlu0 %1149
    %1151 = vrot.lane.b32.xlu0 %v227, 16
    %v1152 = vpop.permute.xlu0 %1151
    %1153 = vrot.lane.b32.xlu0 %v228, 16
    %v1154 = vpop.permute.xlu0 %1153
    %1155 = vrot.lane.b32.xlu0 %v229, 16
    %v1156 = vpop.permute.xlu0 %1155
    %1157 = vrot.lane.b32.xlu0 %v230, 16
    %v1158 = vpop.permute.xlu0 %1157
    %1159 = vrot.lane.b32.xlu0 %v231, 16
    %v1160 = vpop.permute.xlu0 %1159
    %1161 = vrot.lane.b32.xlu0 %v232, 16
    %v1162 = vpop.permute.xlu0 %1161
    %1163 = vrot.lane.b32.xlu0 %v233, 16
    %v1164 = vpop.permute.xlu0 %1163
    %1165 = vrot.lane.b32.xlu0 %v234, 16
    %v1166 = vpop.permute.xlu0 %1165
    %1167 = vrot.lane.b32.xlu0 %v235, 16
    %v1168 = vpop.permute.xlu0 %1167
    %1169 = vrot.lane.b32.xlu0 %v236, 16
    %v1170 = vpop.permute.xlu0 %1169
    %1171 = vrot.lane.b32.xlu0 %v237, 16
    %v1172 = vpop.permute.xlu0 %1171
    %1173 = vrot.lane.b32.xlu0 %v238, 16
    %v1174 = vpop.permute.xlu0 %1173
    %1175 = vrot.lane.b32.xlu0 %v239, 16
    %v1176 = vpop.permute.xlu0 %1175
    %1209 = vrot.lane.b32.xlu0 %v953, 20
    %v1210 = vpop.permute.xlu0 %1209
    %1211 = vrot.lane.b32.xlu0 %v954, 20
    %v1212 = vpop.permute.xlu0 %1211
    %1213 = vrot.lane.b32.xlu0 %v955, 20
    %v1214 = vpop.permute.xlu0 %1213
    %1215 = vrot.lane.b32.xlu0 %v956, 20
    %v1216 = vpop.permute.xlu0 %1215
    %1217 = vrot.lane.b32.xlu0 %v957, 20
    %v1218 = vpop.permute.xlu0 %1217
    %1219 = vrot.lane.b32.xlu0 %v958, 20
    %v1220 = vpop.permute.xlu0 %1219
    %1221 = vrot.lane.b32.xlu0 %v959, 20
    %v1222 = vpop.permute.xlu0 %1221
    %1223 = vrot.lane.b32.xlu0 %v960, 20
    %v1224 = vpop.permute.xlu0 %1223
    %1225 = vrot.lane.b32.xlu0 %v961, 20
    %v1226 = vpop.permute.xlu0 %1225
    %1227 = vrot.lane.b32.xlu0 %v962, 20
    %v1228 = vpop.permute.xlu0 %1227
    %1229 = vrot.lane.b32.xlu0 %v963, 20
    %v1230 = vpop.permute.xlu0 %1229
    %1231 = vrot.lane.b32.xlu0 %v964, 20
    %v1232 = vpop.permute.xlu0 %1231
    %1233 = vrot.lane.b32.xlu0 %v965, 20
    %v1234 = vpop.permute.xlu0 %1233
    %1235 = vrot.lane.b32.xlu0 %v966, 20
    %v1236 = vpop.permute.xlu0 %1235
    %1237 = vrot.lane.b32.xlu0 %v967, 20
    %v1238 = vpop.permute.xlu0 %1237
    %1239 = vrot.lane.b32.xlu0 %v968, 20
    %v1240 = vpop.permute.xlu0 %1239
    %1257 = vrot.lane.b32.xlu0 %v258, 24
    %v1258 = vpop.permute.xlu0 %1257
    %1259 = vrot.lane.b32.xlu0 %v259, 24
    %v1260 = vpop.permute.xlu0 %1259
    %1261 = vrot.lane.b32.xlu0 %v260, 24
    %v1262 = vpop.permute.xlu0 %1261
    %1263 = vrot.lane.b32.xlu0 %v261, 24
    %v1264 = vpop.permute.xlu0 %1263
    %1265 = vrot.lane.b32.xlu0 %v262, 24
    %v1266 = vpop.permute.xlu0 %1265
    %1267 = vrot.lane.b32.xlu0 %v263, 24
    %v1268 = vpop.permute.xlu0 %1267
    %1269 = vrot.lane.b32.xlu0 %v264, 24
    %v1270 = vpop.permute.xlu0 %1269
    %1271 = vrot.lane.b32.xlu0 %v265, 24
    %v1272 = vpop.permute.xlu0 %1271
    %1273 = vrot.lane.b32.xlu0 %v266, 24
    %v1274 = vpop.permute.xlu0 %1273
    %1275 = vrot.lane.b32.xlu0 %v267, 24
    %v1276 = vpop.permute.xlu0 %1275
    %1277 = vrot.lane.b32.xlu0 %v268, 24
    %v1278 = vpop.permute.xlu0 %1277
    %1279 = vrot.lane.b32.xlu0 %v269, 24
    %v1280 = vpop.permute.xlu0 %1279
    %1281 = vrot.lane.b32.xlu0 %v270, 24
    %v1282 = vpop.permute.xlu0 %1281
    %1283 = vrot.lane.b32.xlu0 %v271, 24
    %v1284 = vpop.permute.xlu0 %1283
    %1285 = vrot.lane.b32.xlu0 %v272, 24
    %v1286 = vpop.permute.xlu0 %1285
    %1287 = vrot.lane.b32.xlu0 %v273, 24
    %v1288 = vpop.permute.xlu0 %1287
    %1305 = vrot.lane.b32.xlu0 %v274, 28
    %v1306 = vpop.permute.xlu0 %1305
    %1307 = vrot.lane.b32.xlu0 %v275, 28
    %v1308 = vpop.permute.xlu0 %1307
    %1309 = vrot.lane.b32.xlu0 %v276, 28
    %v1310 = vpop.permute.xlu0 %1309
    %1311 = vrot.lane.b32.xlu0 %v277, 28
    %v1312 = vpop.permute.xlu0 %1311
    %1313 = vrot.lane.b32.xlu0 %v278, 28
    %v1314 = vpop.permute.xlu0 %1313
    %1315 = vrot.lane.b32.xlu0 %v279, 28
    %v1316 = vpop.permute.xlu0 %1315
    %1317 = vrot.lane.b32.xlu0 %v280, 28
    %v1318 = vpop.permute.xlu0 %1317
    %1319 = vrot.lane.b32.xlu0 %v281, 28
    %v1320 = vpop.permute.xlu0 %1319
    %1321 = vrot.lane.b32.xlu0 %v282, 28
    %v1322 = vpop.permute.xlu0 %1321
    %1323 = vrot.lane.b32.xlu0 %v283, 28
    %v1324 = vpop.permute.xlu0 %1323
    %1325 = vrot.lane.b32.xlu0 %v284, 28
    %v1326 = vpop.permute.xlu0 %1325
    %1327 = vrot.lane.b32.xlu0 %v285, 28
    %v1328 = vpop.permute.xlu0 %1327
    %1329 = vrot.lane.b32.xlu0 %v286, 28
    %v1330 = vpop.permute.xlu0 %1329
    %1331 = vrot.lane.b32.xlu0 %v287, 28
    %v1332 = vpop.permute.xlu0 %1331
    %1333 = vrot.lane.b32.xlu0 %v288, 28
    %v1334 = vpop.permute.xlu0 %1333
    %1335 = vrot.lane.b32.xlu0 %v289, 28
    %v1336 = vpop.permute.xlu0 %1335
    %1369 = vrot.lane.b32.xlu0 %v969, 32
    %v1370 = vpop.permute.xlu0 %1369
    %1371 = vrot.lane.b32.xlu0 %v970, 32
    %v1372 = vpop.permute.xlu0 %1371
    %1373 = vrot.lane.b32.xlu0 %v971, 32
    %v1374 = vpop.permute.xlu0 %1373
    %1375 = vrot.lane.b32.xlu0 %v972, 32
    %v1376 = vpop.permute.xlu0 %1375
    %1377 = vrot.lane.b32.xlu0 %v973, 32
    %v1378 = vpop.permute.xlu0 %1377
    %1379 = vrot.lane.b32.xlu0 %v974, 32
    %v1380 = vpop.permute.xlu0 %1379
    %1381 = vrot.lane.b32.xlu0 %v975, 32
    %v1382 = vpop.permute.xlu0 %1381
    %1383 = vrot.lane.b32.xlu0 %v976, 32
    %v1384 = vpop.permute.xlu0 %1383
    %1385 = vrot.lane.b32.xlu0 %v977, 32
    %v1386 = vpop.permute.xlu0 %1385
    %1387 = vrot.lane.b32.xlu0 %v978, 32
    %v1388 = vpop.permute.xlu0 %1387
    %1389 = vrot.lane.b32.xlu0 %v979, 32
    %v1390 = vpop.permute.xlu0 %1389
    %1391 = vrot.lane.b32.xlu0 %v980, 32
    %v1392 = vpop.permute.xlu0 %1391
    %1393 = vrot.lane.b32.xlu0 %v981, 32
    %v1394 = vpop.permute.xlu0 %1393
    %1395 = vrot.lane.b32.xlu0 %v982, 32
    %v1396 = vpop.permute.xlu0 %1395
    %1397 = vrot.lane.b32.xlu0 %v983, 32
    %v1398 = vpop.permute.xlu0 %1397
    %1399 = vrot.lane.b32.xlu0 %v984, 32
    %v1400 = vpop.permute.xlu0 %1399
    %v1417 = vsel %vm802, %v158, %v986
    %v1418 = vsel %vm802, %v159, %v988
    %v1419 = vsel %vm802, %v160, %v990
    %v1420 = vsel %vm802, %v161, %v992
    %v1421 = vsel %vm802, %v162, %v994
    %v1422 = vsel %vm802, %v163, %v996
    %v1423 = vsel %vm802, %v164, %v998
    %v1424 = vsel %vm802, %v165, %v1000
    %v1425 = vsel %vm802, %v166, %v1002
    %v1426 = vsel %vm802, %v167, %v1004
    %v1427 = vsel %vm802, %v168, %v1006
    %v1428 = vsel %vm802, %v169, %v1008
    %v1429 = vsel %vm802, %v170, %v1010
    %v1430 = vsel %vm802, %v171, %v1012
    %v1431 = vsel %vm802, %v172, %v1014
    %v1432 = vsel %vm802, %v173, %v1016
    %v1433 = vsel %vm46, %v1417, %v1050
    %v1434 = vsel %vm46, %v1418, %v1052
    %v1435 = vsel %vm46, %v1419, %v1054
    %v1436 = vsel %vm46, %v1420, %v1056
    %v1437 = vsel %vm46, %v1421, %v1058
    %v1438 = vsel %vm46, %v1422, %v1060
    %v1439 = vsel %vm46, %v1423, %v1062
    %v1440 = vsel %vm46, %v1424, %v1064
    %v1441 = vsel %vm46, %v1425, %v1066
    %v1442 = vsel %vm46, %v1426, %v1068
    %v1443 = vsel %vm46, %v1427, %v1070
    %v1444 = vsel %vm46, %v1428, %v1072
    %v1445 = vsel %vm46, %v1429, %v1074
    %v1446 = vsel %vm46, %v1430, %v1076
    %v1447 = vsel %vm46, %v1431, %v1078
    %v1448 = vsel %vm46, %v1432, %v1080
    %v1449 = vsel %vm835, %v1433, %v1098
    %v1450 = vsel %vm835, %v1434, %v1100
    %v1451 = vsel %vm835, %v1435, %v1102
    %v1452 = vsel %vm835, %v1436, %v1104
    %v1453 = vsel %vm835, %v1437, %v1106
    %v1454 = vsel %vm835, %v1438, %v1108
    %v1455 = vsel %vm835, %v1439, %v1110
    %v1456 = vsel %vm835, %v1440, %v1112
    %v1457 = vsel %vm835, %v1441, %v1114
    %v1458 = vsel %vm835, %v1442, %v1116
    %v1459 = vsel %vm835, %v1443, %v1118
    %v1460 = vsel %vm835, %v1444, %v1120
    %v1461 = vsel %vm835, %v1445, %v1122
    %v1462 = vsel %vm835, %v1446, %v1124
    %v1463 = vsel %vm835, %v1447, %v1126
    %v1464 = vsel %vm835, %v1448, %v1128
    %v1465 = vsel %vm852, %v1449, %v1146
    %v1466 = vsel %vm852, %v1450, %v1148
    %v1467 = vsel %vm852, %v1451, %v1150
    %v1468 = vsel %vm852, %v1452, %v1152
    %v1469 = vsel %vm852, %v1453, %v1154
    %v1470 = vsel %vm852, %v1454, %v1156
    %v1471 = vsel %vm852, %v1455, %v1158
    %v1472 = vsel %vm852, %v1456, %v1160
    %v1473 = vsel %vm852, %v1457, %v1162
    %v1474 = vsel %vm852, %v1458, %v1164
    %v1475 = vsel %vm852, %v1459, %v1166
    %v1476 = vsel %vm852, %v1460, %v1168
    %v1477 = vsel %vm852, %v1461, %v1170
    %v1478 = vsel %vm852, %v1462, %v1172
    %v1479 = vsel %vm852, %v1463, %v1174
    %v1480 = vsel %vm852, %v1464, %v1176
    %v1481 = vsel %vm869, %v1465, %v1210
    %v1482 = vsel %vm869, %v1466, %v1212
    %v1483 = vsel %vm869, %v1467, %v1214
    %v1484 = vsel %vm869, %v1468, %v1216
    %v1485 = vsel %vm869, %v1469, %v1218
    %v1486 = vsel %vm869, %v1470, %v1220
    %v1487 = vsel %vm869, %v1471, %v1222
    %v1488 = vsel %vm869, %v1472, %v1224
    %v1489 = vsel %vm869, %v1473, %v1226
    %v1490 = vsel %vm869, %v1474, %v1228
    %v1491 = vsel %vm869, %v1475, %v1230
    %v1492 = vsel %vm869, %v1476, %v1232
    %v1493 = vsel %vm869, %v1477, %v1234
    %v1494 = vsel %vm869, %v1478, %v1236
    %v1495 = vsel %vm869, %v1479, %v1238
    %v1496 = vsel %vm869, %v1480, %v1240
    %v1497 = vsel %vm886, %v1481, %v1258
    %v1498 = vsel %vm886, %v1482, %v1260
    %v1499 = vsel %vm886, %v1483, %v1262
    %v1500 = vsel %vm886, %v1484, %v1264
    %v1501 = vsel %vm886, %v1485, %v1266
    %v1502 = vsel %vm886, %v1486, %v1268
    %v1503 = vsel %vm886, %v1487, %v1270
    %v1504 = vsel %vm886, %v1488, %v1272
    %v1505 = vsel %vm886, %v1489, %v1274
    %v1506 = vsel %vm886, %v1490, %v1276
    %v1507 = vsel %vm886, %v1491, %v1278
    %v1508 = vsel %vm886, %v1492, %v1280
    %v1509 = vsel %vm886, %v1493, %v1282
    %v1510 = vsel %vm886, %v1494, %v1284
    %v1511 = vsel %vm886, %v1495, %v1286
    %v1512 = vsel %vm886, %v1496, %v1288
    %v1513 = vsel %vm903, %v1497, %v1306
    %v1514 = vsel %vm903, %v1498, %v1308
    %v1515 = vsel %vm903, %v1499, %v1310
    %v1516 = vsel %vm903, %v1500, %v1312
    %v1517 = vsel %vm903, %v1501, %v1314
    %v1518 = vsel %vm903, %v1502, %v1316
    %v1519 = vsel %vm903, %v1503, %v1318
    %v1520 = vsel %vm903, %v1504, %v1320
    %v1521 = vsel %vm903, %v1505, %v1322
    %v1522 = vsel %vm903, %v1506, %v1324
    %v1523 = vsel %vm903, %v1507, %v1326
    %v1524 = vsel %vm903, %v1508, %v1328
    %v1525 = vsel %vm903, %v1509, %v1330
    %v1526 = vsel %vm903, %v1510, %v1332
    %v1527 = vsel %vm903, %v1511, %v1334
    %v1528 = vsel %vm903, %v1512, %v1336
    %v1529 = vsel %vm920, %v1513, %v1370
    %v1530 = vsel %vm920, %v1514, %v1372
    %v1531 = vsel %vm920, %v1515, %v1374
    %v1532 = vsel %vm920, %v1516, %v1376
    %v1533 = vsel %vm920, %v1517, %v1378
    %v1534 = vsel %vm920, %v1518, %v1380
    %v1535 = vsel %vm920, %v1519, %v1382
    %v1536 = vsel %vm920, %v1520, %v1384
    %v1537 = vsel %vm920, %v1521, %v1386
    %v1538 = vsel %vm920, %v1522, %v1388
    %v1539 = vsel %vm920, %v1523, %v1390
    %v1540 = vsel %vm920, %v1524, %v1392
    %v1541 = vsel %vm920, %v1525, %v1394
    %v1542 = vsel %vm920, %v1526, %v1396
    %v1543 = vsel %vm920, %v1527, %v1398
    %v1544 = vsel %vm920, %v1528, %v1400
    %s1545 = scalar_lea.vmem %s0, 592
    %v1546 = vld [vmem:[%s1545] sm:$0xff]
    %v1547 = vld [vmem:[%s1545 + $0x10] sm:$0xff]
    %v1548 = vld [vmem:[%s1545 + $0x20] sm:$0xff]
    %v1549 = vld [vmem:[%s1545 + $0x30] sm:$0xff]
    %v1550 = vld [vmem:[%s1545 + $0x40] sm:$0xff]
    %v1551 = vld [vmem:[%s1545 + $0x50] sm:$0xff]
    %v1552 = vld [vmem:[%s1545 + $0x60] sm:$0xff]
    %v1553 = vld [vmem:[%s1545 + $0x70] sm:$0xff]
    %v1554 = vld [vmem:[%s1545 + $0x90] sm:$0xff]
    %v1555 = vld [vmem:[%s1545 + $0xa0] sm:$0xff]
    %v1556 = vld [vmem:[%s1545 + $0xb0] sm:$0xff]
    %v1557 = vld [vmem:[%s1545 + $0xc0] sm:$0xff]
    %v1558 = vld [vmem:[%s1545 + $0xd0] sm:$0xff]
    %v1559 = vld [vmem:[%s1545 + $0xe0] sm:$0xff]
    %v1560 = vld [vmem:[%s1545 + $0xf0] sm:$0xff]
    %v1561 = vld [vmem:[%s1545 + $0x100] sm:$0xff]
    %s1562 = scalar_lea.vmem %s0, 880
    %v1563 = vld [vmem:[%s1562] sm:$0xff]
    %v1564 = vld [vmem:[%s1562 + $0x10] sm:$0xff]
    %v1565 = vld [vmem:[%s1562 + $0x20] sm:$0xff]
    %v1566 = vld [vmem:[%s1562 + $0x30] sm:$0xff]
    %v1567 = vld [vmem:[%s1562 + $0x40] sm:$0xff]
    %v1568 = vld [vmem:[%s1562 + $0x50] sm:$0xff]
    %v1569 = vld [vmem:[%s1562 + $0x60] sm:$0xff]
    %v1570 = vld [vmem:[%s1562 + $0x70] sm:$0xff]
    %v1571 = vld [vmem:[%s1562 + $0x90] sm:$0xff]
    %v1572 = vld [vmem:[%s1562 + $0xa0] sm:$0xff]
    %v1573 = vld [vmem:[%s1562 + $0xb0] sm:$0xff]
    %v1574 = vld [vmem:[%s1562 + $0xc0] sm:$0xff]
    %v1575 = vld [vmem:[%s1562 + $0xd0] sm:$0xff]
    %v1576 = vld [vmem:[%s1562 + $0xe0] sm:$0xff]
    %v1577 = vld [vmem:[%s1562 + $0xf0] sm:$0xff]
    %v1578 = vld [vmem:[%s1562 + $0x100] sm:$0xff]
    %v1579 = vld [vmem:[%s1545 + $0x1] sm:$0xff]
    %v1580 = vld [vmem:[%s1545 + $0x11] sm:$0xff]
    %v1581 = vld [vmem:[%s1545 + $0x21] sm:$0xff]
    %v1582 = vld [vmem:[%s1545 + $0x31] sm:$0xff]
    %v1583 = vld [vmem:[%s1545 + $0x41] sm:$0xff]
    %v1584 = vld [vmem:[%s1545 + $0x51] sm:$0xff]
    %v1585 = vld [vmem:[%s1545 + $0x61] sm:$0xff]
    %v1586 = vld [vmem:[%s1545 + $0x71] sm:$0xff]
    %v1587 = vld [vmem:[%s1545 + $0x91] sm:$0xff]
    %v1588 = vld [vmem:[%s1545 + $0xa1] sm:$0xff]
    %v1589 = vld [vmem:[%s1545 + $0xb1] sm:$0xff]
    %v1590 = vld [vmem:[%s1545 + $0xc1] sm:$0xff]
    %v1591 = vld [vmem:[%s1545 + $0xd1] sm:$0xff]
    %v1592 = vld [vmem:[%s1545 + $0xe1] sm:$0xff]
    %v1593 = vld [vmem:[%s1545 + $0xf1] sm:$0xff]
    %v1594 = vld [vmem:[%s1545 + $0x101] sm:$0xff]
    %1595 = vrot.lane.b32.xlu0 %v208, 4
    %v1596 = vpop.permute.xlu0 %1595
    %1597 = vrot.lane.b32.xlu0 %v209, 4
    %v1598 = vpop.permute.xlu0 %1597
    %1599 = vrot.lane.b32.xlu0 %v210, 4
    %v1600 = vpop.permute.xlu0 %1599
    %1601 = vrot.lane.b32.xlu0 %v211, 4
    %v1602 = vpop.permute.xlu0 %1601
    %1603 = vrot.lane.b32.xlu0 %v212, 4
    %v1604 = vpop.permute.xlu0 %1603
    %1605 = vrot.lane.b32.xlu0 %v213, 4
    %v1606 = vpop.permute.xlu0 %1605
    %1607 = vrot.lane.b32.xlu0 %v214, 4
    %v1608 = vpop.permute.xlu0 %1607
    %1609 = vrot.lane.b32.xlu0 %v215, 4
    %v1610 = vpop.permute.xlu0 %1609
    %1611 = vrot.lane.b32.xlu0 %v216, 4
    %v1612 = vpop.permute.xlu0 %1611
    %1613 = vrot.lane.b32.xlu0 %v217, 4
    %v1614 = vpop.permute.xlu0 %1613
    %1615 = vrot.lane.b32.xlu0 %v218, 4
    %v1616 = vpop.permute.xlu0 %1615
    %1617 = vrot.lane.b32.xlu0 %v219, 4
    %v1618 = vpop.permute.xlu0 %1617
    %1619 = vrot.lane.b32.xlu0 %v220, 4
    %v1620 = vpop.permute.xlu0 %1619
    %1621 = vrot.lane.b32.xlu0 %v221, 4
    %v1622 = vpop.permute.xlu0 %1621
    %1623 = vrot.lane.b32.xlu0 %v222, 4
    %v1624 = vpop.permute.xlu0 %1623
    %1625 = vrot.lane.b32.xlu0 %v223, 4
    %v1626 = vpop.permute.xlu0 %1625
    %1643 = vrot.lane.b32.xlu0 %v224, 8
    %v1644 = vpop.permute.xlu0 %1643
    %1645 = vrot.lane.b32.xlu0 %v225, 8
    %v1646 = vpop.permute.xlu0 %1645
    %1647 = vrot.lane.b32.xlu0 %v226, 8
    %v1648 = vpop.permute.xlu0 %1647
    %1649 = vrot.lane.b32.xlu0 %v227, 8
    %v1650 = vpop.permute.xlu0 %1649
    %1651 = vrot.lane.b32.xlu0 %v228, 8
    %v1652 = vpop.permute.xlu0 %1651
    %1653 = vrot.lane.b32.xlu0 %v229, 8
    %v1654 = vpop.permute.xlu0 %1653
    %1655 = vrot.lane.b32.xlu0 %v230, 8
    %v1656 = vpop.permute.xlu0 %1655
    %1657 = vrot.lane.b32.xlu0 %v231, 8
    %v1658 = vpop.permute.xlu0 %1657
    %1659 = vrot.lane.b32.xlu0 %v232, 8
    %v1660 = vpop.permute.xlu0 %1659
    %1661 = vrot.lane.b32.xlu0 %v233, 8
    %v1662 = vpop.permute.xlu0 %1661
    %1663 = vrot.lane.b32.xlu0 %v234, 8
    %v1664 = vpop.permute.xlu0 %1663
    %1665 = vrot.lane.b32.xlu0 %v235, 8
    %v1666 = vpop.permute.xlu0 %1665
    %1667 = vrot.lane.b32.xlu0 %v236, 8
    %v1668 = vpop.permute.xlu0 %1667
    %1669 = vrot.lane.b32.xlu0 %v237, 8
    %v1670 = vpop.permute.xlu0 %1669
    %1671 = vrot.lane.b32.xlu0 %v238, 8
    %v1672 = vpop.permute.xlu0 %1671
    %1673 = vrot.lane.b32.xlu0 %v239, 8
    %v1674 = vpop.permute.xlu0 %1673
    %1691 = vrot.lane.b32.xlu0 %v241, 12
    %v1692 = vpop.permute.xlu0 %1691
    %1693 = vrot.lane.b32.xlu0 %v242, 12
    %v1694 = vpop.permute.xlu0 %1693
    %1695 = vrot.lane.b32.xlu0 %v243, 12
    %v1696 = vpop.permute.xlu0 %1695
    %1697 = vrot.lane.b32.xlu0 %v244, 12
    %v1698 = vpop.permute.xlu0 %1697
    %1699 = vrot.lane.b32.xlu0 %v245, 12
    %v1700 = vpop.permute.xlu0 %1699
    %1701 = vrot.lane.b32.xlu0 %v246, 12
    %v1702 = vpop.permute.xlu0 %1701
    %1703 = vrot.lane.b32.xlu0 %v247, 12
    %v1704 = vpop.permute.xlu0 %1703
    %1705 = vrot.lane.b32.xlu0 %v248, 12
    %v1706 = vpop.permute.xlu0 %1705
    %1707 = vrot.lane.b32.xlu0 %v249, 12
    %v1708 = vpop.permute.xlu0 %1707
    %1709 = vrot.lane.b32.xlu0 %v250, 12
    %v1710 = vpop.permute.xlu0 %1709
    %1711 = vrot.lane.b32.xlu0 %v251, 12
    %v1712 = vpop.permute.xlu0 %1711
    %1713 = vrot.lane.b32.xlu0 %v252, 12
    %v1714 = vpop.permute.xlu0 %1713
    %1715 = vrot.lane.b32.xlu0 %v253, 12
    %v1716 = vpop.permute.xlu0 %1715
    %1717 = vrot.lane.b32.xlu0 %v254, 12
    %v1718 = vpop.permute.xlu0 %1717
    %1719 = vrot.lane.b32.xlu0 %v255, 12
    %v1720 = vpop.permute.xlu0 %1719
    %1721 = vrot.lane.b32.xlu0 %v256, 12
    %v1722 = vpop.permute.xlu0 %1721
    %1739 = vrot.lane.b32.xlu0 %v258, 16
    %v1740 = vpop.permute.xlu0 %1739
    %1741 = vrot.lane.b32.xlu0 %v259, 16
    %v1742 = vpop.permute.xlu0 %1741
    %1743 = vrot.lane.b32.xlu0 %v260, 16
    %v1744 = vpop.permute.xlu0 %1743
    %1745 = vrot.lane.b32.xlu0 %v261, 16
    %v1746 = vpop.permute.xlu0 %1745
    %1747 = vrot.lane.b32.xlu0 %v262, 16
    %v1748 = vpop.permute.xlu0 %1747
    %1749 = vrot.lane.b32.xlu0 %v263, 16
    %v1750 = vpop.permute.xlu0 %1749
    %1751 = vrot.lane.b32.xlu0 %v264, 16
    %v1752 = vpop.permute.xlu0 %1751
    %1753 = vrot.lane.b32.xlu0 %v265, 16
    %v1754 = vpop.permute.xlu0 %1753
    %1755 = vrot.lane.b32.xlu0 %v266, 16
    %v1756 = vpop.permute.xlu0 %1755
    %1757 = vrot.lane.b32.xlu0 %v267, 16
    %v1758 = vpop.permute.xlu0 %1757
    %1759 = vrot.lane.b32.xlu0 %v268, 16
    %v1760 = vpop.permute.xlu0 %1759
    %1761 = vrot.lane.b32.xlu0 %v269, 16
    %v1762 = vpop.permute.xlu0 %1761
    %1763 = vrot.lane.b32.xlu0 %v270, 16
    %v1764 = vpop.permute.xlu0 %1763
    %1765 = vrot.lane.b32.xlu0 %v271, 16
    %v1766 = vpop.permute.xlu0 %1765
    %1767 = vrot.lane.b32.xlu0 %v272, 16
    %v1768 = vpop.permute.xlu0 %1767
    %1769 = vrot.lane.b32.xlu0 %v273, 16
    %v1770 = vpop.permute.xlu0 %1769
    %1787 = vrot.lane.b32.xlu0 %v274, 20
    %v1788 = vpop.permute.xlu0 %1787
    %1789 = vrot.lane.b32.xlu0 %v275, 20
    %v1790 = vpop.permute.xlu0 %1789
    %1791 = vrot.lane.b32.xlu0 %v276, 20
    %v1792 = vpop.permute.xlu0 %1791
    %1793 = vrot.lane.b32.xlu0 %v277, 20
    %v1794 = vpop.permute.xlu0 %1793
    %1795 = vrot.lane.b32.xlu0 %v278, 20
    %v1796 = vpop.permute.xlu0 %1795
    %1797 = vrot.lane.b32.xlu0 %v279, 20
    %v1798 = vpop.permute.xlu0 %1797
    %1799 = vrot.lane.b32.xlu0 %v280, 20
    %v1800 = vpop.permute.xlu0 %1799
    %1801 = vrot.lane.b32.xlu0 %v281, 20
    %v1802 = vpop.permute.xlu0 %1801
    %1803 = vrot.lane.b32.xlu0 %v282, 20
    %v1804 = vpop.permute.xlu0 %1803
    %1805 = vrot.lane.b32.xlu0 %v283, 20
    %v1806 = vpop.permute.xlu0 %1805
    %1807 = vrot.lane.b32.xlu0 %v284, 20
    %v1808 = vpop.permute.xlu0 %1807
    %1809 = vrot.lane.b32.xlu0 %v285, 20
    %v1810 = vpop.permute.xlu0 %1809
    %1811 = vrot.lane.b32.xlu0 %v286, 20
    %v1812 = vpop.permute.xlu0 %1811
    %1813 = vrot.lane.b32.xlu0 %v287, 20
    %v1814 = vpop.permute.xlu0 %1813
    %1815 = vrot.lane.b32.xlu0 %v288, 20
    %v1816 = vpop.permute.xlu0 %1815
    %1817 = vrot.lane.b32.xlu0 %v289, 20
    %v1818 = vpop.permute.xlu0 %1817
    %1851 = vrot.lane.b32.xlu0 %v1546, 24
    %v1852 = vpop.permute.xlu0 %1851
    %1853 = vrot.lane.b32.xlu0 %v1547, 24
    %v1854 = vpop.permute.xlu0 %1853
    %1855 = vrot.lane.b32.xlu0 %v1548, 24
    %v1856 = vpop.permute.xlu0 %1855
    %1857 = vrot.lane.b32.xlu0 %v1549, 24
    %v1858 = vpop.permute.xlu0 %1857
    %1859 = vrot.lane.b32.xlu0 %v1550, 24
    %v1860 = vpop.permute.xlu0 %1859
    %1861 = vrot.lane.b32.xlu0 %v1551, 24
    %v1862 = vpop.permute.xlu0 %1861
    %1863 = vrot.lane.b32.xlu0 %v1552, 24
    %v1864 = vpop.permute.xlu0 %1863
    %1865 = vrot.lane.b32.xlu0 %v1553, 24
    %v1866 = vpop.permute.xlu0 %1865
    %1867 = vrot.lane.b32.xlu0 %v1554, 24
    %v1868 = vpop.permute.xlu0 %1867
    %1869 = vrot.lane.b32.xlu0 %v1555, 24
    %v1870 = vpop.permute.xlu0 %1869
    %1871 = vrot.lane.b32.xlu0 %v1556, 24
    %v1872 = vpop.permute.xlu0 %1871
    %1873 = vrot.lane.b32.xlu0 %v1557, 24
    %v1874 = vpop.permute.xlu0 %1873
    %1875 = vrot.lane.b32.xlu0 %v1558, 24
    %v1876 = vpop.permute.xlu0 %1875
    %1877 = vrot.lane.b32.xlu0 %v1559, 24
    %v1878 = vpop.permute.xlu0 %1877
    %1879 = vrot.lane.b32.xlu0 %v1560, 24
    %v1880 = vpop.permute.xlu0 %1879
    %1881 = vrot.lane.b32.xlu0 %v1561, 24
    %v1882 = vpop.permute.xlu0 %1881
    %1915 = vrot.lane.b32.xlu0 %v1563, 28
    %v1916 = vpop.permute.xlu0 %1915
    %1917 = vrot.lane.b32.xlu0 %v1564, 28
    %v1918 = vpop.permute.xlu0 %1917
    %1919 = vrot.lane.b32.xlu0 %v1565, 28
    %v1920 = vpop.permute.xlu0 %1919
    %1921 = vrot.lane.b32.xlu0 %v1566, 28
    %v1922 = vpop.permute.xlu0 %1921
    %1923 = vrot.lane.b32.xlu0 %v1567, 28
    %v1924 = vpop.permute.xlu0 %1923
    %1925 = vrot.lane.b32.xlu0 %v1568, 28
    %v1926 = vpop.permute.xlu0 %1925
    %1927 = vrot.lane.b32.xlu0 %v1569, 28
    %v1928 = vpop.permute.xlu0 %1927
    %1929 = vrot.lane.b32.xlu0 %v1570, 28
    %v1930 = vpop.permute.xlu0 %1929
    %1931 = vrot.lane.b32.xlu0 %v1571, 28
    %v1932 = vpop.permute.xlu0 %1931
    %1933 = vrot.lane.b32.xlu0 %v1572, 28
    %v1934 = vpop.permute.xlu0 %1933
    %1935 = vrot.lane.b32.xlu0 %v1573, 28
    %v1936 = vpop.permute.xlu0 %1935
    %1937 = vrot.lane.b32.xlu0 %v1574, 28
    %v1938 = vpop.permute.xlu0 %1937
    %1939 = vrot.lane.b32.xlu0 %v1575, 28
    %v1940 = vpop.permute.xlu0 %1939
    %1941 = vrot.lane.b32.xlu0 %v1576, 28
    %v1942 = vpop.permute.xlu0 %1941
    %1943 = vrot.lane.b32.xlu0 %v1577, 28
    %v1944 = vpop.permute.xlu0 %1943
    %1945 = vrot.lane.b32.xlu0 %v1578, 28
    %v1946 = vpop.permute.xlu0 %1945
    %1979 = vrot.lane.b32.xlu0 %v1579, 32
    %v1980 = vpop.permute.xlu0 %1979
    %1981 = vrot.lane.b32.xlu0 %v1580, 32
    %v1982 = vpop.permute.xlu0 %1981
    %1983 = vrot.lane.b32.xlu0 %v1581, 32
    %v1984 = vpop.permute.xlu0 %1983
    %1985 = vrot.lane.b32.xlu0 %v1582, 32
    %v1986 = vpop.permute.xlu0 %1985
    %1987 = vrot.lane.b32.xlu0 %v1583, 32
    %v1988 = vpop.permute.xlu0 %1987
    %1989 = vrot.lane.b32.xlu0 %v1584, 32
    %v1990 = vpop.permute.xlu0 %1989
    %1991 = vrot.lane.b32.xlu0 %v1585, 32
    %v1992 = vpop.permute.xlu0 %1991
    %1993 = vrot.lane.b32.xlu0 %v1586, 32
    %v1994 = vpop.permute.xlu0 %1993
    %1995 = vrot.lane.b32.xlu0 %v1587, 32
    %v1996 = vpop.permute.xlu0 %1995
    %1997 = vrot.lane.b32.xlu0 %v1588, 32
    %v1998 = vpop.permute.xlu0 %1997
    %1999 = vrot.lane.b32.xlu0 %v1589, 32
    %v2000 = vpop.permute.xlu0 %1999
    %2001 = vrot.lane.b32.xlu0 %v1590, 32
    %v2002 = vpop.permute.xlu0 %2001
    %2003 = vrot.lane.b32.xlu0 %v1591, 32
    %v2004 = vpop.permute.xlu0 %2003
    %2005 = vrot.lane.b32.xlu0 %v1592, 32
    %v2006 = vpop.permute.xlu0 %2005
    %2007 = vrot.lane.b32.xlu0 %v1593, 32
    %v2008 = vpop.permute.xlu0 %2007
    %2009 = vrot.lane.b32.xlu0 %v1594, 32
    %v2010 = vpop.permute.xlu0 %2009
    %v2027 = vsel %vm802, %v191, %v1596
    %v2028 = vsel %vm802, %v192, %v1598
    %v2029 = vsel %vm802, %v193, %v1600
    %v2030 = vsel %vm802, %v194, %v1602
    %v2031 = vsel %vm802, %v195, %v1604
    %v2032 = vsel %vm802, %v196, %v1606
    %v2033 = vsel %vm802, %v197, %v1608
    %v2034 = vsel %vm802, %v198, %v1610
    %v2035 = vsel %vm802, %v199, %v1612
    %v2036 = vsel %vm802, %v200, %v1614
    %v2037 = vsel %vm802, %v201, %v1616
    %v2038 = vsel %vm802, %v202, %v1618
    %v2039 = vsel %vm802, %v203, %v1620
    %v2040 = vsel %vm802, %v204, %v1622
    %v2041 = vsel %vm802, %v205, %v1624
    %v2042 = vsel %vm802, %v206, %v1626
    %v2043 = vsel %vm46, %v2027, %v1644
    %v2044 = vsel %vm46, %v2028, %v1646
    %v2045 = vsel %vm46, %v2029, %v1648
    %v2046 = vsel %vm46, %v2030, %v1650
    %v2047 = vsel %vm46, %v2031, %v1652
    %v2048 = vsel %vm46, %v2032, %v1654
    %v2049 = vsel %vm46, %v2033, %v1656
    %v2050 = vsel %vm46, %v2034, %v1658
    %v2051 = vsel %vm46, %v2035, %v1660
    %v2052 = vsel %vm46, %v2036, %v1662
    %v2053 = vsel %vm46, %v2037, %v1664
    %v2054 = vsel %vm46, %v2038, %v1666
    %v2055 = vsel %vm46, %v2039, %v1668
    %v2056 = vsel %vm46, %v2040, %v1670
    %v2057 = vsel %vm46, %v2041, %v1672
    %v2058 = vsel %vm46, %v2042, %v1674
    %v2059 = vsel %vm835, %v2043, %v1692
    %v2060 = vsel %vm835, %v2044, %v1694
    %v2061 = vsel %vm835, %v2045, %v1696
    %v2062 = vsel %vm835, %v2046, %v1698
    %v2063 = vsel %vm835, %v2047, %v1700
    %v2064 = vsel %vm835, %v2048, %v1702
    %v2065 = vsel %vm835, %v2049, %v1704
    %v2066 = vsel %vm835, %v2050, %v1706
    %v2067 = vsel %vm835, %v2051, %v1708
    %v2068 = vsel %vm835, %v2052, %v1710
    %v2069 = vsel %vm835, %v2053, %v1712
    %v2070 = vsel %vm835, %v2054, %v1714
    %v2071 = vsel %vm835, %v2055, %v1716
    %v2072 = vsel %vm835, %v2056, %v1718
    %v2073 = vsel %vm835, %v2057, %v1720
    %v2074 = vsel %vm835, %v2058, %v1722
    %v2075 = vsel %vm852, %v2059, %v1740
    %v2076 = vsel %vm852, %v2060, %v1742
    %v2077 = vsel %vm852, %v2061, %v1744
    %v2078 = vsel %vm852, %v2062, %v1746
    %v2079 = vsel %vm852, %v2063, %v1748
    %v2080 = vsel %vm852, %v2064, %v1750
    %v2081 = vsel %vm852, %v2065, %v1752
    %v2082 = vsel %vm852, %v2066, %v1754
    %v2083 = vsel %vm852, %v2067, %v1756
    %v2084 = vsel %vm852, %v2068, %v1758
    %v2085 = vsel %vm852, %v2069, %v1760
    %v2086 = vsel %vm852, %v2070, %v1762
    %v2087 = vsel %vm852, %v2071, %v1764
    %v2088 = vsel %vm852, %v2072, %v1766
    %v2089 = vsel %vm852, %v2073, %v1768
    %v2090 = vsel %vm852, %v2074, %v1770
    %v2091 = vsel %vm869, %v2075, %v1788
    %v2092 = vsel %vm869, %v2076, %v1790
    %v2093 = vsel %vm869, %v2077, %v1792
    %v2094 = vsel %vm869, %v2078, %v1794
    %v2095 = vsel %vm869, %v2079, %v1796
    %v2096 = vsel %vm869, %v2080, %v1798
    %v2097 = vsel %vm869, %v2081, %v1800
    %v2098 = vsel %vm869, %v2082, %v1802
    %v2099 = vsel %vm869, %v2083, %v1804
    %v2100 = vsel %vm869, %v2084, %v1806
    %v2101 = vsel %vm869, %v2085, %v1808
    %v2102 = vsel %vm869, %v2086, %v1810
    %v2103 = vsel %vm869, %v2087, %v1812
    %v2104 = vsel %vm869, %v2088, %v1814
    %v2105 = vsel %vm869, %v2089, %v1816
    %v2106 = vsel %vm869, %v2090, %v1818
    %v2107 = vsel %vm886, %v2091, %v1852
    %v2108 = vsel %vm886, %v2092, %v1854
    %v2109 = vsel %vm886, %v2093, %v1856
    %v2110 = vsel %vm886, %v2094, %v1858
    %v2111 = vsel %vm886, %v2095, %v1860
    %v2112 = vsel %vm886, %v2096, %v1862
    %v2113 = vsel %vm886, %v2097, %v1864
    %v2114 = vsel %vm886, %v2098, %v1866
    %v2115 = vsel %vm886, %v2099, %v1868
    %v2116 = vsel %vm886, %v2100, %v1870
    %v2117 = vsel %vm886, %v2101, %v1872
    %v2118 = vsel %vm886, %v2102, %v1874
    %v2119 = vsel %vm886, %v2103, %v1876
    %v2120 = vsel %vm886, %v2104, %v1878
    %v2121 = vsel %vm886, %v2105, %v1880
    %v2122 = vsel %vm886, %v2106, %v1882
    %v2123 = vsel %vm903, %v2107, %v1916
    %v2124 = vsel %vm903, %v2108, %v1918
    %v2125 = vsel %vm903, %v2109, %v1920
    %v2126 = vsel %vm903, %v2110, %v1922
    %v2127 = vsel %vm903, %v2111, %v1924
    %v2128 = vsel %vm903, %v2112, %v1926
    %v2129 = vsel %vm903, %v2113, %v1928
    %v2130 = vsel %vm903, %v2114, %v1930
    %v2131 = vsel %vm903, %v2115, %v1932
    %v2132 = vsel %vm903, %v2116, %v1934
    %v2133 = vsel %vm903, %v2117, %v1936
    %v2134 = vsel %vm903, %v2118, %v1938
    %v2135 = vsel %vm903, %v2119, %v1940
    %v2136 = vsel %vm903, %v2120, %v1942
    %v2137 = vsel %vm903, %v2121, %v1944
    %v2138 = vsel %vm903, %v2122, %v1946
    %v2139 = vsel %vm920, %v2123, %v1980
    %v2140 = vsel %vm920, %v2124, %v1982
    %v2141 = vsel %vm920, %v2125, %v1984
    %v2142 = vsel %vm920, %v2126, %v1986
    %v2143 = vsel %vm920, %v2127, %v1988
    %v2144 = vsel %vm920, %v2128, %v1990
    %v2145 = vsel %vm920, %v2129, %v1992
    %v2146 = vsel %vm920, %v2130, %v1994
    %v2147 = vsel %vm920, %v2131, %v1996
    %v2148 = vsel %vm920, %v2132, %v1998
    %v2149 = vsel %vm920, %v2133, %v2000
    %v2150 = vsel %vm920, %v2134, %v2002
    %v2151 = vsel %vm920, %v2135, %v2004
    %v2152 = vsel %vm920, %v2136, %v2006
    %v2153 = vsel %vm920, %v2137, %v2008
    %v2154 = vsel %vm920, %v2138, %v2010
    %v2155 = vld [vmem:[%s1562 + $0x1] sm:$0xff]
    %v2156 = vld [vmem:[%s1562 + $0x11] sm:$0xff]
    %v2157 = vld [vmem:[%s1562 + $0x21] sm:$0xff]
    %v2158 = vld [vmem:[%s1562 + $0x31] sm:$0xff]
    %v2159 = vld [vmem:[%s1562 + $0x41] sm:$0xff]
    %v2160 = vld [vmem:[%s1562 + $0x51] sm:$0xff]
    %v2161 = vld [vmem:[%s1562 + $0x61] sm:$0xff]
    %v2162 = vld [vmem:[%s1562 + $0x71] sm:$0xff]
    %v2163 = vld [vmem:[%s1562 + $0x91] sm:$0xff]
    %v2164 = vld [vmem:[%s1562 + $0xa1] sm:$0xff]
    %v2165 = vld [vmem:[%s1562 + $0xb1] sm:$0xff]
    %v2166 = vld [vmem:[%s1562 + $0xc1] sm:$0xff]
    %v2167 = vld [vmem:[%s1562 + $0xd1] sm:$0xff]
    %v2168 = vld [vmem:[%s1562 + $0xe1] sm:$0xff]
    %v2169 = vld [vmem:[%s1562 + $0xf1] sm:$0xff]
    %v2170 = vld [vmem:[%s1562 + $0x101] sm:$0xff]
    %2171 = vrot.lane.b32.xlu0 %v224, 4
    %v2172 = vpop.permute.xlu0 %2171
    %2173 = vrot.lane.b32.xlu0 %v225, 4
    %v2174 = vpop.permute.xlu0 %2173
    %2175 = vrot.lane.b32.xlu0 %v226, 4
    %v2176 = vpop.permute.xlu0 %2175
    %2177 = vrot.lane.b32.xlu0 %v227, 4
    %v2178 = vpop.permute.xlu0 %2177
    %2179 = vrot.lane.b32.xlu0 %v228, 4
    %v2180 = vpop.permute.xlu0 %2179
    %2181 = vrot.lane.b32.xlu0 %v229, 4
    %v2182 = vpop.permute.xlu0 %2181
    %2183 = vrot.lane.b32.xlu0 %v230, 4
    %v2184 = vpop.permute.xlu0 %2183
    %2185 = vrot.lane.b32.xlu0 %v231, 4
    %v2186 = vpop.permute.xlu0 %2185
    %2187 = vrot.lane.b32.xlu0 %v232, 4
    %v2188 = vpop.permute.xlu0 %2187
    %2189 = vrot.lane.b32.xlu0 %v233, 4
    %v2190 = vpop.permute.xlu0 %2189
    %2191 = vrot.lane.b32.xlu0 %v234, 4
    %v2192 = vpop.permute.xlu0 %2191
    %2193 = vrot.lane.b32.xlu0 %v235, 4
    %v2194 = vpop.permute.xlu0 %2193
    %2195 = vrot.lane.b32.xlu0 %v236, 4
    %v2196 = vpop.permute.xlu0 %2195
    %2197 = vrot.lane.b32.xlu0 %v237, 4
    %v2198 = vpop.permute.xlu0 %2197
    %2199 = vrot.lane.b32.xlu0 %v238, 4
    %v2200 = vpop.permute.xlu0 %2199
    %2201 = vrot.lane.b32.xlu0 %v239, 4
    %v2202 = vpop.permute.xlu0 %2201
    %2219 = vrot.lane.b32.xlu0 %v953, 8
    %v2220 = vpop.permute.xlu0 %2219
    %2221 = vrot.lane.b32.xlu0 %v954, 8
    %v2222 = vpop.permute.xlu0 %2221
    %2223 = vrot.lane.b32.xlu0 %v955, 8
    %v2224 = vpop.permute.xlu0 %2223
    %2225 = vrot.lane.b32.xlu0 %v956, 8
    %v2226 = vpop.permute.xlu0 %2225
    %2227 = vrot.lane.b32.xlu0 %v957, 8
    %v2228 = vpop.permute.xlu0 %2227
    %2229 = vrot.lane.b32.xlu0 %v958, 8
    %v2230 = vpop.permute.xlu0 %2229
    %2231 = vrot.lane.b32.xlu0 %v959, 8
    %v2232 = vpop.permute.xlu0 %2231
    %2233 = vrot.lane.b32.xlu0 %v960, 8
    %v2234 = vpop.permute.xlu0 %2233
    %2235 = vrot.lane.b32.xlu0 %v961, 8
    %v2236 = vpop.permute.xlu0 %2235
    %2237 = vrot.lane.b32.xlu0 %v962, 8
    %v2238 = vpop.permute.xlu0 %2237
    %2239 = vrot.lane.b32.xlu0 %v963, 8
    %v2240 = vpop.permute.xlu0 %2239
    %2241 = vrot.lane.b32.xlu0 %v964, 8
    %v2242 = vpop.permute.xlu0 %2241
    %2243 = vrot.lane.b32.xlu0 %v965, 8
    %v2244 = vpop.permute.xlu0 %2243
    %2245 = vrot.lane.b32.xlu0 %v966, 8
    %v2246 = vpop.permute.xlu0 %2245
    %2247 = vrot.lane.b32.xlu0 %v967, 8
    %v2248 = vpop.permute.xlu0 %2247
    %2249 = vrot.lane.b32.xlu0 %v968, 8
    %v2250 = vpop.permute.xlu0 %2249
    %2267 = vrot.lane.b32.xlu0 %v258, 12
    %v2268 = vpop.permute.xlu0 %2267
    %2269 = vrot.lane.b32.xlu0 %v259, 12
    %v2270 = vpop.permute.xlu0 %2269
    %2271 = vrot.lane.b32.xlu0 %v260, 12
    %v2272 = vpop.permute.xlu0 %2271
    %2273 = vrot.lane.b32.xlu0 %v261, 12
    %v2274 = vpop.permute.xlu0 %2273
    %2275 = vrot.lane.b32.xlu0 %v262, 12
    %v2276 = vpop.permute.xlu0 %2275
    %2277 = vrot.lane.b32.xlu0 %v263, 12
    %v2278 = vpop.permute.xlu0 %2277
    %2279 = vrot.lane.b32.xlu0 %v264, 12
    %v2280 = vpop.permute.xlu0 %2279
    %2281 = vrot.lane.b32.xlu0 %v265, 12
    %v2282 = vpop.permute.xlu0 %2281
    %2283 = vrot.lane.b32.xlu0 %v266, 12
    %v2284 = vpop.permute.xlu0 %2283
    %2285 = vrot.lane.b32.xlu0 %v267, 12
    %v2286 = vpop.permute.xlu0 %2285
    %2287 = vrot.lane.b32.xlu0 %v268, 12
    %v2288 = vpop.permute.xlu0 %2287
    %2289 = vrot.lane.b32.xlu0 %v269, 12
    %v2290 = vpop.permute.xlu0 %2289
    %2291 = vrot.lane.b32.xlu0 %v270, 12
    %v2292 = vpop.permute.xlu0 %2291
    %2293 = vrot.lane.b32.xlu0 %v271, 12
    %v2294 = vpop.permute.xlu0 %2293
    %2295 = vrot.lane.b32.xlu0 %v272, 12
    %v2296 = vpop.permute.xlu0 %2295
    %2297 = vrot.lane.b32.xlu0 %v273, 12
    %v2298 = vpop.permute.xlu0 %2297
    %2315 = vrot.lane.b32.xlu0 %v274, 16
    %v2316 = vpop.permute.xlu0 %2315
    %2317 = vrot.lane.b32.xlu0 %v275, 16
    %v2318 = vpop.permute.xlu0 %2317
    %2319 = vrot.lane.b32.xlu0 %v276, 16
    %v2320 = vpop.permute.xlu0 %2319
    %2321 = vrot.lane.b32.xlu0 %v277, 16
    %v2322 = vpop.permute.xlu0 %2321
    %2323 = vrot.lane.b32.xlu0 %v278, 16
    %v2324 = vpop.permute.xlu0 %2323
    %2325 = vrot.lane.b32.xlu0 %v279, 16
    %v2326 = vpop.permute.xlu0 %2325
    %2327 = vrot.lane.b32.xlu0 %v280, 16
    %v2328 = vpop.permute.xlu0 %2327
    %2329 = vrot.lane.b32.xlu0 %v281, 16
    %v2330 = vpop.permute.xlu0 %2329
    %2331 = vrot.lane.b32.xlu0 %v282, 16
    %v2332 = vpop.permute.xlu0 %2331
    %2333 = vrot.lane.b32.xlu0 %v283, 16
    %v2334 = vpop.permute.xlu0 %2333
    %2335 = vrot.lane.b32.xlu0 %v284, 16
    %v2336 = vpop.permute.xlu0 %2335
    %2337 = vrot.lane.b32.xlu0 %v285, 16
    %v2338 = vpop.permute.xlu0 %2337
    %2339 = vrot.lane.b32.xlu0 %v286, 16
    %v2340 = vpop.permute.xlu0 %2339
    %2341 = vrot.lane.b32.xlu0 %v287, 16
    %v2342 = vpop.permute.xlu0 %2341
    %2343 = vrot.lane.b32.xlu0 %v288, 16
    %v2344 = vpop.permute.xlu0 %2343
    %2345 = vrot.lane.b32.xlu0 %v289, 16
    %v2346 = vpop.permute.xlu0 %2345
    %2363 = vrot.lane.b32.xlu0 %v969, 20
    %v2364 = vpop.permute.xlu0 %2363
    %2365 = vrot.lane.b32.xlu0 %v970, 20
    %v2366 = vpop.permute.xlu0 %2365
    %2367 = vrot.lane.b32.xlu0 %v971, 20
    %v2368 = vpop.permute.xlu0 %2367
    %2369 = vrot.lane.b32.xlu0 %v972, 20
    %v2370 = vpop.permute.xlu0 %2369
    %2371 = vrot.lane.b32.xlu0 %v973, 20
    %v2372 = vpop.permute.xlu0 %2371
    %2373 = vrot.lane.b32.xlu0 %v974, 20
    %v2374 = vpop.permute.xlu0 %2373
    %2375 = vrot.lane.b32.xlu0 %v975, 20
    %v2376 = vpop.permute.xlu0 %2375
    %2377 = vrot.lane.b32.xlu0 %v976, 20
    %v2378 = vpop.permute.xlu0 %2377
    %2379 = vrot.lane.b32.xlu0 %v977, 20
    %v2380 = vpop.permute.xlu0 %2379
    %2381 = vrot.lane.b32.xlu0 %v978, 20
    %v2382 = vpop.permute.xlu0 %2381
    %2383 = vrot.lane.b32.xlu0 %v979, 20
    %v2384 = vpop.permute.xlu0 %2383
    %2385 = vrot.lane.b32.xlu0 %v980, 20
    %v2386 = vpop.permute.xlu0 %2385
    %2387 = vrot.lane.b32.xlu0 %v981, 20
    %v2388 = vpop.permute.xlu0 %2387
    %2389 = vrot.lane.b32.xlu0 %v982, 20
    %v2390 = vpop.permute.xlu0 %2389
    %2391 = vrot.lane.b32.xlu0 %v983, 20
    %v2392 = vpop.permute.xlu0 %2391
    %2393 = vrot.lane.b32.xlu0 %v984, 20
    %v2394 = vpop.permute.xlu0 %2393
    %2411 = vrot.lane.b32.xlu0 %v1563, 24
    %v2412 = vpop.permute.xlu0 %2411
    %2413 = vrot.lane.b32.xlu0 %v1564, 24
    %v2414 = vpop.permute.xlu0 %2413
    %2415 = vrot.lane.b32.xlu0 %v1565, 24
    %v2416 = vpop.permute.xlu0 %2415
    %2417 = vrot.lane.b32.xlu0 %v1566, 24
    %v2418 = vpop.permute.xlu0 %2417
    %2419 = vrot.lane.b32.xlu0 %v1567, 24
    %v2420 = vpop.permute.xlu0 %2419
    %2421 = vrot.lane.b32.xlu0 %v1568, 24
    %v2422 = vpop.permute.xlu0 %2421
    %2423 = vrot.lane.b32.xlu0 %v1569, 24
    %v2424 = vpop.permute.xlu0 %2423
    %2425 = vrot.lane.b32.xlu0 %v1570, 24
    %v2426 = vpop.permute.xlu0 %2425
    %2427 = vrot.lane.b32.xlu0 %v1571, 24
    %v2428 = vpop.permute.xlu0 %2427
    %2429 = vrot.lane.b32.xlu0 %v1572, 24
    %v2430 = vpop.permute.xlu0 %2429
    %2431 = vrot.lane.b32.xlu0 %v1573, 24
    %v2432 = vpop.permute.xlu0 %2431
    %2433 = vrot.lane.b32.xlu0 %v1574, 24
    %v2434 = vpop.permute.xlu0 %2433
    %2435 = vrot.lane.b32.xlu0 %v1575, 24
    %v2436 = vpop.permute.xlu0 %2435
    %2437 = vrot.lane.b32.xlu0 %v1576, 24
    %v2438 = vpop.permute.xlu0 %2437
    %2439 = vrot.lane.b32.xlu0 %v1577, 24
    %v2440 = vpop.permute.xlu0 %2439
    %2441 = vrot.lane.b32.xlu0 %v1578, 24
    %v2442 = vpop.permute.xlu0 %2441
    %2459 = vrot.lane.b32.xlu0 %v1579, 28
    %v2460 = vpop.permute.xlu0 %2459
    %2461 = vrot.lane.b32.xlu0 %v1580, 28
    %v2462 = vpop.permute.xlu0 %2461
    %2463 = vrot.lane.b32.xlu0 %v1581, 28
    %v2464 = vpop.permute.xlu0 %2463
    %2465 = vrot.lane.b32.xlu0 %v1582, 28
    %v2466 = vpop.permute.xlu0 %2465
    %2467 = vrot.lane.b32.xlu0 %v1583, 28
    %v2468 = vpop.permute.xlu0 %2467
    %2469 = vrot.lane.b32.xlu0 %v1584, 28
    %v2470 = vpop.permute.xlu0 %2469
    %2471 = vrot.lane.b32.xlu0 %v1585, 28
    %v2472 = vpop.permute.xlu0 %2471
    %2473 = vrot.lane.b32.xlu0 %v1586, 28
    %v2474 = vpop.permute.xlu0 %2473
    %2475 = vrot.lane.b32.xlu0 %v1587, 28
    %v2476 = vpop.permute.xlu0 %2475
    %2477 = vrot.lane.b32.xlu0 %v1588, 28
    %v2478 = vpop.permute.xlu0 %2477
    %2479 = vrot.lane.b32.xlu0 %v1589, 28
    %v2480 = vpop.permute.xlu0 %2479
    %2481 = vrot.lane.b32.xlu0 %v1590, 28
    %v2482 = vpop.permute.xlu0 %2481
    %2483 = vrot.lane.b32.xlu0 %v1591, 28
    %v2484 = vpop.permute.xlu0 %2483
    %2485 = vrot.lane.b32.xlu0 %v1592, 28
    %v2486 = vpop.permute.xlu0 %2485
    %2487 = vrot.lane.b32.xlu0 %v1593, 28
    %v2488 = vpop.permute.xlu0 %2487
    %2489 = vrot.lane.b32.xlu0 %v1594, 28
    %v2490 = vpop.permute.xlu0 %2489
    %2523 = vrot.lane.b32.xlu0 %v2155, 32
    %v2524 = vpop.permute.xlu0 %2523
    %2525 = vrot.lane.b32.xlu0 %v2156, 32
    %v2526 = vpop.permute.xlu0 %2525
    %2527 = vrot.lane.b32.xlu0 %v2157, 32
    %v2528 = vpop.permute.xlu0 %2527
    %2529 = vrot.lane.b32.xlu0 %v2158, 32
    %v2530 = vpop.permute.xlu0 %2529
    %2531 = vrot.lane.b32.xlu0 %v2159, 32
    %v2532 = vpop.permute.xlu0 %2531
    %2533 = vrot.lane.b32.xlu0 %v2160, 32
    %v2534 = vpop.permute.xlu0 %2533
    %2535 = vrot.lane.b32.xlu0 %v2161, 32
    %v2536 = vpop.permute.xlu0 %2535
    %2537 = vrot.lane.b32.xlu0 %v2162, 32
    %v2538 = vpop.permute.xlu0 %2537
    %2539 = vrot.lane.b32.xlu0 %v2163, 32
    %v2540 = vpop.permute.xlu0 %2539
    %2541 = vrot.lane.b32.xlu0 %v2164, 32
    %v2542 = vpop.permute.xlu0 %2541
    %2543 = vrot.lane.b32.xlu0 %v2165, 32
    %v2544 = vpop.permute.xlu0 %2543
    %2545 = vrot.lane.b32.xlu0 %v2166, 32
    %v2546 = vpop.permute.xlu0 %2545
    %2547 = vrot.lane.b32.xlu0 %v2167, 32
    %v2548 = vpop.permute.xlu0 %2547
    %2549 = vrot.lane.b32.xlu0 %v2168, 32
    %v2550 = vpop.permute.xlu0 %2549
    %2551 = vrot.lane.b32.xlu0 %v2169, 32
    %v2552 = vpop.permute.xlu0 %2551
    %2553 = vrot.lane.b32.xlu0 %v2170, 32
    %v2554 = vpop.permute.xlu0 %2553
    %v2571 = vsel %vm802, %v208, %v2172
    %v2572 = vsel %vm802, %v209, %v2174
    %v2573 = vsel %vm802, %v210, %v2176
    %v2574 = vsel %vm802, %v211, %v2178
    %v2575 = vsel %vm802, %v212, %v2180
    %v2576 = vsel %vm802, %v213, %v2182
    %v2577 = vsel %vm802, %v214, %v2184
    %v2578 = vsel %vm802, %v215, %v2186
    %v2579 = vsel %vm802, %v216, %v2188
    %v2580 = vsel %vm802, %v217, %v2190
    %v2581 = vsel %vm802, %v218, %v2192
    %v2582 = vsel %vm802, %v219, %v2194
    %v2583 = vsel %vm802, %v220, %v2196
    %v2584 = vsel %vm802, %v221, %v2198
    %v2585 = vsel %vm802, %v222, %v2200
    %v2586 = vsel %vm802, %v223, %v2202
    %v2587 = vsel %vm46, %v2571, %v2220
    %v2588 = vsel %vm46, %v2572, %v2222
    %v2589 = vsel %vm46, %v2573, %v2224
    %v2590 = vsel %vm46, %v2574, %v2226
    %v2591 = vsel %vm46, %v2575, %v2228
    %v2592 = vsel %vm46, %v2576, %v2230
    %v2593 = vsel %vm46, %v2577, %v2232
    %v2594 = vsel %vm46, %v2578, %v2234
    %v2595 = vsel %vm46, %v2579, %v2236
    %v2596 = vsel %vm46, %v2580, %v2238
    %v2597 = vsel %vm46, %v2581, %v2240
    %v2598 = vsel %vm46, %v2582, %v2242
    %v2599 = vsel %vm46, %v2583, %v2244
    %v2600 = vsel %vm46, %v2584, %v2246
    %v2601 = vsel %vm46, %v2585, %v2248
    %v2602 = vsel %vm46, %v2586, %v2250
    %v2603 = vsel %vm835, %v2587, %v2268
    %v2604 = vsel %vm835, %v2588, %v2270
    %v2605 = vsel %vm835, %v2589, %v2272
    %v2606 = vsel %vm835, %v2590, %v2274
    %v2607 = vsel %vm835, %v2591, %v2276
    %v2608 = vsel %vm835, %v2592, %v2278
    %v2609 = vsel %vm835, %v2593, %v2280
    %v2610 = vsel %vm835, %v2594, %v2282
    %v2611 = vsel %vm835, %v2595, %v2284
    %v2612 = vsel %vm835, %v2596, %v2286
    %v2613 = vsel %vm835, %v2597, %v2288
    %v2614 = vsel %vm835, %v2598, %v2290
    %v2615 = vsel %vm835, %v2599, %v2292
    %v2616 = vsel %vm835, %v2600, %v2294
    %v2617 = vsel %vm835, %v2601, %v2296
    %v2618 = vsel %vm835, %v2602, %v2298
    %v2619 = vsel %vm852, %v2603, %v2316
    %v2620 = vsel %vm852, %v2604, %v2318
    %v2621 = vsel %vm852, %v2605, %v2320
    %v2622 = vsel %vm852, %v2606, %v2322
    %v2623 = vsel %vm852, %v2607, %v2324
    %v2624 = vsel %vm852, %v2608, %v2326
    %v2625 = vsel %vm852, %v2609, %v2328
    %v2626 = vsel %vm852, %v2610, %v2330
    %v2627 = vsel %vm852, %v2611, %v2332
    %v2628 = vsel %vm852, %v2612, %v2334
    %v2629 = vsel %vm852, %v2613, %v2336
    %v2630 = vsel %vm852, %v2614, %v2338
    %v2631 = vsel %vm852, %v2615, %v2340
    %v2632 = vsel %vm852, %v2616, %v2342
    %v2633 = vsel %vm852, %v2617, %v2344
    %v2634 = vsel %vm852, %v2618, %v2346
    %v2635 = vsel %vm869, %v2619, %v2364
    %v2636 = vsel %vm869, %v2620, %v2366
    %v2637 = vsel %vm869, %v2621, %v2368
    %v2638 = vsel %vm869, %v2622, %v2370
    %v2639 = vsel %vm869, %v2623, %v2372
    %v2640 = vsel %vm869, %v2624, %v2374
    %v2641 = vsel %vm869, %v2625, %v2376
    %v2642 = vsel %vm869, %v2626, %v2378
    %v2643 = vsel %vm869, %v2627, %v2380
    %v2644 = vsel %vm869, %v2628, %v2382
    %v2645 = vsel %vm869, %v2629, %v2384
    %v2646 = vsel %vm869, %v2630, %v2386
    %v2647 = vsel %vm869, %v2631, %v2388
    %v2648 = vsel %vm869, %v2632, %v2390
    %v2649 = vsel %vm869, %v2633, %v2392
    %v2650 = vsel %vm869, %v2634, %v2394
    %v2651 = vsel %vm886, %v2635, %v2412
    %v2652 = vsel %vm886, %v2636, %v2414
    %v2653 = vsel %vm886, %v2637, %v2416
    %v2654 = vsel %vm886, %v2638, %v2418
    %v2655 = vsel %vm886, %v2639, %v2420
    %v2656 = vsel %vm886, %v2640, %v2422
    %v2657 = vsel %vm886, %v2641, %v2424
    %v2658 = vsel %vm886, %v2642, %v2426
    %v2659 = vsel %vm886, %v2643, %v2428
    %v2660 = vsel %vm886, %v2644, %v2430
    %v2661 = vsel %vm886, %v2645, %v2432
    %v2662 = vsel %vm886, %v2646, %v2434
    %v2663 = vsel %vm886, %v2647, %v2436
    %v2664 = vsel %vm886, %v2648, %v2438
    %v2665 = vsel %vm886, %v2649, %v2440
    %v2666 = vsel %vm886, %v2650, %v2442
    %v2667 = vsel %vm903, %v2651, %v2460
    %v2668 = vsel %vm903, %v2652, %v2462
    %v2669 = vsel %vm903, %v2653, %v2464
    %v2670 = vsel %vm903, %v2654, %v2466
    %v2671 = vsel %vm903, %v2655, %v2468
    %v2672 = vsel %vm903, %v2656, %v2470
    %v2673 = vsel %vm903, %v2657, %v2472
    %v2674 = vsel %vm903, %v2658, %v2474
    %v2675 = vsel %vm903, %v2659, %v2476
    %v2676 = vsel %vm903, %v2660, %v2478
    %v2677 = vsel %vm903, %v2661, %v2480
    %v2678 = vsel %vm903, %v2662, %v2482
    %v2679 = vsel %vm903, %v2663, %v2484
    %v2680 = vsel %vm903, %v2664, %v2486
    %v2681 = vsel %vm903, %v2665, %v2488
    %v2682 = vsel %vm903, %v2666, %v2490
    %v2683 = vsel %vm920, %v2667, %v2524
    %v2684 = vsel %vm920, %v2668, %v2526
    %v2685 = vsel %vm920, %v2669, %v2528
    %v2686 = vsel %vm920, %v2670, %v2530
    %v2687 = vsel %vm920, %v2671, %v2532
    %v2688 = vsel %vm920, %v2672, %v2534
    %v2689 = vsel %vm920, %v2673, %v2536
    %v2690 = vsel %vm920, %v2674, %v2538
    %v2691 = vsel %vm920, %v2675, %v2540
    %v2692 = vsel %vm920, %v2676, %v2542
    %v2693 = vsel %vm920, %v2677, %v2544
    %v2694 = vsel %vm920, %v2678, %v2546
    %v2695 = vsel %vm920, %v2679, %v2548
    %v2696 = vsel %vm920, %v2680, %v2550
    %v2697 = vsel %vm920, %v2681, %v2552
    %v2698 = vsel %vm920, %v2682, %v2554
    %v2699 = vpack.c.bf16 %v922, %v921
    %v2700 = vpack.c.bf16 %v924, %v923
    %v2701 = vpack.c.bf16 %v926, %v925
    %v2702 = vpack.c.bf16 %v928, %v927
    %v2703 = vpack.c.bf16 %v930, %v929
    %v2704 = vpack.c.bf16 %v932, %v931
    %v2705 = vpack.c.bf16 %v934, %v933
    %v2706 = vpack.c.bf16 %v936, %v935
    %v2707 = vpack.c.bf16 %v1530, %v1529
    %v2708 = vpack.c.bf16 %v1532, %v1531
    %v2709 = vpack.c.bf16 %v1534, %v1533
    %v2710 = vpack.c.bf16 %v1536, %v1535
    %v2711 = vpack.c.bf16 %v1538, %v1537
    %v2712 = vpack.c.bf16 %v1540, %v1539
    %v2713 = vpack.c.bf16 %v1542, %v1541
    %v2714 = vpack.c.bf16 %v1544, %v1543
    %v2715 = vpack.c.bf16 %v2140, %v2139
    %v2716 = vpack.c.bf16 %v2142, %v2141
    %v2717 = vpack.c.bf16 %v2144, %v2143
    %v2718 = vpack.c.bf16 %v2146, %v2145
    %v2719 = vpack.c.bf16 %v2148, %v2147
    %v2720 = vpack.c.bf16 %v2150, %v2149
    %v2721 = vpack.c.bf16 %v2152, %v2151
    %v2722 = vpack.c.bf16 %v2154, %v2153
    %v2723 = vpack.c.bf16 %v2684, %v2683
    %v2724 = vpack.c.bf16 %v2686, %v2685
    %v2725 = vpack.c.bf16 %v2688, %v2687
    %v2726 = vpack.c.bf16 %v2690, %v2689
    %v2727 = vpack.c.bf16 %v2692, %v2691
    %v2728 = vpack.c.bf16 %v2694, %v2693
    %v2729 = vpack.c.bf16 %v2696, %v2695
    %v2730 = vpack.c.bf16 %v2698, %v2697
    %v2731 = vld [vmem:[%s1] sm:$0xf]
    %v2732 = vld [vmem:[%s1 + $0x4] sm:$0xf]
    %v2733 = vld [vmem:[%s1 + $0x8] sm:$0xf]
    %v2734 = vld [vmem:[%s1 + $0xc] sm:$0xf]
    %v2735 = vld [vmem:[%s1 + $0x10] sm:$0x3]
    %v2741 = vunpack.c.l.b16 %v2731
    %v2742 = vunpack.c.l.b16 %v2732
    %v2743 = vunpack.c.l.b16 %v2733
    %v2744 = vunpack.c.l.b16 %v2734
    %v2745 = vunpack.c.l.b16 %v2735
    %v2746 = vpack.c.b16 %v2742, %v2741
    %v2747 = vpack.c.b16 %v2744, %v2743
    %v2748 = vpack.c.b16 %v2745, %v2745
    %vm2751 = vcmask 293888
    %v2753 = vsel %vm2751, %v2699, 0
    %v2756 = vsel %vm2751, %v2700, 0
    %v2759 = vsel %vm2751, %v2701, 0
    %v2762 = vsel %vm2751, %v2702, 0
    %v2765 = vsel %vm2751, %v2703, 0
    %v2768 = vsel %vm2751, %v2704, 0
    %v2771 = vsel %vm2751, %v2705, 0
    %v2774 = vsel %vm2751, %v2706, 0
    %v2777 = vsel %vm2751, %v2707, 0
    %v2780 = vsel %vm2751, %v2708, 0
    %v2783 = vsel %vm2751, %v2709, 0
    %v2786 = vsel %vm2751, %v2710, 0
    %v2789 = vsel %vm2751, %v2711, 0
    %v2792 = vsel %vm2751, %v2712, 0
    %v2795 = vsel %vm2751, %v2713, 0
    %v2798 = vsel %vm2751, %v2714, 0
    %v2801 = vsel %vm2751, %v2715, 0
    %v2804 = vsel %vm2751, %v2716, 0
    %v2807 = vsel %vm2751, %v2717, 0
    %v2810 = vsel %vm2751, %v2718, 0
    %v2813 = vsel %vm2751, %v2719, 0
    %v2816 = vsel %vm2751, %v2720, 0
    %v2819 = vsel %vm2751, %v2721, 0
    %v2822 = vsel %vm2751, %v2722, 0
    %v2825 = vsel %vm2751, %v2723, 0
    %v2828 = vsel %vm2751, %v2724, 0
    %v2831 = vsel %vm2751, %v2725, 0
    %v2834 = vsel %vm2751, %v2726, 0
    %v2837 = vsel %vm2751, %v2727, 0
    %v2840 = vsel %vm2751, %v2728, 0
    %v2843 = vsel %vm2751, %v2729, 0
    %v2846 = vsel %vm2751, %v2730, 0
    %vm2848 = vcmask 1041408
    %v2850 = vsel %vm2848, %v2748, 0
    %2852 = vmatprep.subr.bf16.mxu0 0
    %2853 = vmatpush1.bf16.msra.mxu0 0
    %2854 = vmatprep.subr.bf16.mxu0 0
    %2855 = vmatpush1.bf16.msra.mxu0 0
    %2856 = vmatprep.subr.bf16.mxu0 0
    %2857 = vmatpush1.bf16.msra.mxu0 0
    %2858 = vmatprep.subr.bf16.mxu0 0
    %2859 = vmatpush1.bf16.msra.mxu0 0
    %2860 = vmatprep.subr.bf16.mxu0 0
    %2861 = vmatpush1.bf16.msra.mxu0 0
    %2862 = vmatprep.subr.bf16.mxu0 0
    %2863 = vmatpush1.bf16.msra.mxu0 %v2850
    %2864 = vmatprep.subr.bf16.mxu0 0
    %2865 = vmatpush1.bf16.msra.mxu0 %v2747
    %2866 = vmatprep.subr.bf16.mxu0 0
    %2867 = vmatpush1.bf16.msra.mxu0 %v2746
    %2868 = vmatprep.subr.bf16.mxu0 0
    %2869 = vmatpush2.bf16.msra.mxu0 0
    %2870 = vmatprep.subr.bf16.mxu0 0
    %2871 = vmatpush2.bf16.msra.mxu0 0
    %2872 = vmatprep.subr.bf16.mxu0 0
    %2873 = vmatpush2.bf16.msra.mxu0 0
    %2874 = vmatprep.subr.bf16.mxu0 0
    %2875 = vmatpush2.bf16.msra.mxu0 0
    %2876 = vmatprep.subr.bf16.mxu0 0
    %2877 = vmatpush2.bf16.msra.mxu0 0
    %2878 = vmatprep.subr.bf16.mxu0 0
    %2879 = vmatpush2.bf16.msra.mxu0 0
    %2880 = vmatprep.subr.bf16.mxu0 0
    %2881 = vmatpush2.bf16.msra.mxu0 0
    %2882 = vmatprep.subr.bf16.mxu0 0
    %2883 = vmatpush2.bf16.msra.mxu0 0
    %2884 = vmatprep.mubr.bf16.mxu0 0
    %2885 = vmatmul.mubr.bf16.gmra.mxu0 %v2753
    %v2886 = vpop.f32.mrf.mxu0
    %v2887 = vadd.f32 0.0, %v2886
    %v2888 = vpop.f32.mrf.mxu0
    %v2889 = vpop.f32.mrf.mxu0
    %v2890 = vadd.f32 0.0, %v2889
    %v2891 = vpop.f32.mrf.mxu0
    %2892 = vmatprep.mubr.bf16.mxu0 0
    %2893 = vmatmul.mubr.bf16.gmra.mxu0 %v2756
    %v2894 = vpop.f32.mrf.mxu0
    %v2895 = vadd.f32 0.0, %v2894
    %v2896 = vpop.f32.mrf.mxu0
    %v2897 = vpop.f32.mrf.mxu0
    %v2898 = vadd.f32 0.0, %v2897
    %v2899 = vpop.f32.mrf.mxu0
    %2900 = vmatprep.mubr.bf16.mxu0 0
    %2901 = vmatmul.mubr.bf16.gmra.mxu0 %v2759
    %v2902 = vpop.f32.mrf.mxu0
    %v2903 = vadd.f32 0.0, %v2902
    %v2904 = vpop.f32.mrf.mxu0
    %v2905 = vpop.f32.mrf.mxu0
    %v2906 = vadd.f32 0.0, %v2905
    %v2907 = vpop.f32.mrf.mxu0
    %2908 = vmatprep.mubr.bf16.mxu0 0
    %2909 = vmatmul.mubr.bf16.gmra.mxu0 %v2762
    %v2910 = vpop.f32.mrf.mxu0
    %v2911 = vadd.f32 0.0, %v2910
    %v2912 = vpop.f32.mrf.mxu0
    %v2913 = vpop.f32.mrf.mxu0
    %v2914 = vadd.f32 0.0, %v2913
    %v2915 = vpop.f32.mrf.mxu0
    %2916 = vmatprep.mubr.bf16.mxu0 0
    %2917 = vmatmul.mubr.bf16.gmra.mxu0 %v2765
    %v2918 = vpop.f32.mrf.mxu0
    %v2919 = vadd.f32 0.0, %v2918
    %v2920 = vpop.f32.mrf.mxu0
    %v2921 = vpop.f32.mrf.mxu0
    %v2922 = vadd.f32 0.0, %v2921
    %v2923 = vpop.f32.mrf.mxu0
    %2924 = vmatprep.mubr.bf16.mxu0 0
    %2925 = vmatmul.mubr.bf16.gmra.mxu0 %v2768
    %v2926 = vpop.f32.mrf.mxu0
    %v2927 = vadd.f32 0.0, %v2926
    %v2928 = vpop.f32.mrf.mxu0
    %v2929 = vpop.f32.mrf.mxu0
    %v2930 = vadd.f32 0.0, %v2929
    %v2931 = vpop.f32.mrf.mxu0
    %2932 = vmatprep.mubr.bf16.mxu0 0
    %2933 = vmatmul.mubr.bf16.gmra.mxu0 %v2771
    %v2934 = vpop.f32.mrf.mxu0
    %v2935 = vadd.f32 0.0, %v2934
    %v2936 = vpop.f32.mrf.mxu0
    %v2937 = vpop.f32.mrf.mxu0
    %v2938 = vadd.f32 0.0, %v2937
    %v2939 = vpop.f32.mrf.mxu0
    %2940 = vmatprep.mubr.bf16.mxu0 0
    %2941 = vmatmul.mubr.bf16.gmra.mxu0 %v2774
    %v2942 = vpop.f32.mrf.mxu0
    %v2943 = vadd.f32 0.0, %v2942
    %v2944 = vpop.f32.mrf.mxu0
    %v2945 = vpop.f32.mrf.mxu0
    %v2946 = vadd.f32 0.0, %v2945
    %v2947 = vpop.f32.mrf.mxu0
    %2948 = vmatprep.mubr.bf16.mxu0 0
    %2949 = vmatmul.mubr.bf16.gmra.mxu0 %v2777
    %v2950 = vpop.f32.mrf.mxu0
    %v2951 = vadd.f32 0.0, %v2950
    %v2952 = vpop.f32.mrf.mxu0
    %v2953 = vpop.f32.mrf.mxu0
    %v2954 = vadd.f32 0.0, %v2953
    %v2955 = vpop.f32.mrf.mxu0
    %2956 = vmatprep.mubr.bf16.mxu0 0
    %2957 = vmatmul.mubr.bf16.gmra.mxu0 %v2780
    %v2958 = vpop.f32.mrf.mxu0
    %v2959 = vadd.f32 0.0, %v2958
    %v2960 = vpop.f32.mrf.mxu0
    %v2961 = vpop.f32.mrf.mxu0
    %v2962 = vadd.f32 0.0, %v2961
    %v2963 = vpop.f32.mrf.mxu0
    %2964 = vmatprep.mubr.bf16.mxu0 0
    %2965 = vmatmul.mubr.bf16.gmra.mxu0 %v2783
    %v2966 = vpop.f32.mrf.mxu0
    %v2967 = vadd.f32 0.0, %v2966
    %v2968 = vpop.f32.mrf.mxu0
    %v2969 = vpop.f32.mrf.mxu0
    %v2970 = vadd.f32 0.0, %v2969
    %v2971 = vpop.f32.mrf.mxu0
    %2972 = vmatprep.mubr.bf16.mxu0 0
    %2973 = vmatmul.mubr.bf16.gmra.mxu0 %v2786
    %v2974 = vpop.f32.mrf.mxu0
    %v2975 = vadd.f32 0.0, %v2974
    %v2976 = vpop.f32.mrf.mxu0
    %v2977 = vpop.f32.mrf.mxu0
    %v2978 = vadd.f32 0.0, %v2977
    %v2979 = vpop.f32.mrf.mxu0
    %2980 = vmatprep.mubr.bf16.mxu0 0
    %2981 = vmatmul.mubr.bf16.gmra.mxu0 %v2789
    %v2982 = vpop.f32.mrf.mxu0
    %v2983 = vadd.f32 0.0, %v2982
    %v2984 = vpop.f32.mrf.mxu0
    %v2985 = vpop.f32.mrf.mxu0
    %v2986 = vadd.f32 0.0, %v2985
    %v2987 = vpop.f32.mrf.mxu0
    %2988 = vmatprep.mubr.bf16.mxu0 0
    %2989 = vmatmul.mubr.bf16.gmra.mxu0 %v2792
    %v2990 = vpop.f32.mrf.mxu0
    %v2991 = vadd.f32 0.0, %v2990
    %v2992 = vpop.f32.mrf.mxu0
    %v2993 = vpop.f32.mrf.mxu0
    %v2994 = vadd.f32 0.0, %v2993
    %v2995 = vpop.f32.mrf.mxu0
    %2996 = vmatprep.mubr.bf16.mxu0 0
    %2997 = vmatmul.mubr.bf16.gmra.mxu0 %v2795
    %v2998 = vpop.f32.mrf.mxu0
    %v2999 = vadd.f32 0.0, %v2998
    %v3000 = vpop.f32.mrf.mxu0
    %v3001 = vpop.f32.mrf.mxu0
    %v3002 = vadd.f32 0.0, %v3001
    %v3003 = vpop.f32.mrf.mxu0
    %3004 = vmatprep.mubr.bf16.mxu0 0
    %3005 = vmatmul.mubr.bf16.gmra.mxu0 %v2798
    %v3006 = vpop.f32.mrf.mxu0
    %v3007 = vadd.f32 0.0, %v3006
    %v3008 = vpop.f32.mrf.mxu0
    %v3009 = vpop.f32.mrf.mxu0
    %v3010 = vadd.f32 0.0, %v3009
    %v3011 = vpop.f32.mrf.mxu0
    %3012 = vmatprep.mubr.bf16.mxu0 0
    %3013 = vmatmul.mubr.bf16.gmra.mxu0 %v2801
    %v3014 = vpop.f32.mrf.mxu0
    %v3015 = vadd.f32 0.0, %v3014
    %v3016 = vpop.f32.mrf.mxu0
    %v3017 = vpop.f32.mrf.mxu0
    %v3018 = vadd.f32 0.0, %v3017
    %v3019 = vpop.f32.mrf.mxu0
    %3020 = vmatprep.mubr.bf16.mxu0 0
    %3021 = vmatmul.mubr.bf16.gmra.mxu0 %v2804
    %v3022 = vpop.f32.mrf.mxu0
    %v3023 = vadd.f32 0.0, %v3022
    %v3024 = vpop.f32.mrf.mxu0
    %v3025 = vpop.f32.mrf.mxu0
    %v3026 = vadd.f32 0.0, %v3025
    %v3027 = vpop.f32.mrf.mxu0
    %3028 = vmatprep.mubr.bf16.mxu0 0
    %3029 = vmatmul.mubr.bf16.gmra.mxu0 %v2807
    %v3030 = vpop.f32.mrf.mxu0
    %v3031 = vadd.f32 0.0, %v3030
    %v3032 = vpop.f32.mrf.mxu0
    %v3033 = vpop.f32.mrf.mxu0
    %v3034 = vadd.f32 0.0, %v3033
    %v3035 = vpop.f32.mrf.mxu0
    %3036 = vmatprep.mubr.bf16.mxu0 0
    %3037 = vmatmul.mubr.bf16.gmra.mxu0 %v2810
    %v3038 = vpop.f32.mrf.mxu0
    %v3039 = vadd.f32 0.0, %v3038
    %v3040 = vpop.f32.mrf.mxu0
    %v3041 = vpop.f32.mrf.mxu0
    %v3042 = vadd.f32 0.0, %v3041
    %v3043 = vpop.f32.mrf.mxu0
    %3044 = vmatprep.mubr.bf16.mxu0 0
    %3045 = vmatmul.mubr.bf16.gmra.mxu0 %v2813
    %v3046 = vpop.f32.mrf.mxu0
    %v3047 = vadd.f32 0.0, %v3046
    %v3048 = vpop.f32.mrf.mxu0
    %v3049 = vpop.f32.mrf.mxu0
    %v3050 = vadd.f32 0.0, %v3049
    %v3051 = vpop.f32.mrf.mxu0
    %3052 = vmatprep.mubr.bf16.mxu0 0
    %3053 = vmatmul.mubr.bf16.gmra.mxu0 %v2816
    %v3054 = vpop.f32.mrf.mxu0
    %v3055 = vadd.f32 0.0, %v3054
    %v3056 = vpop.f32.mrf.mxu0
    %v3057 = vpop.f32.mrf.mxu0
    %v3058 = vadd.f32 0.0, %v3057
    %v3059 = vpop.f32.mrf.mxu0
    %3060 = vmatprep.mubr.bf16.mxu0 0
    %3061 = vmatmul.mubr.bf16.gmra.mxu0 %v2819
    %v3062 = vpop.f32.mrf.mxu0
    %v3063 = vadd.f32 0.0, %v3062
    %v3064 = vpop.f32.mrf.mxu0
    %v3065 = vpop.f32.mrf.mxu0
    %v3066 = vadd.f32 0.0, %v3065
    %v3067 = vpop.f32.mrf.mxu0
    %3068 = vmatprep.mubr.bf16.mxu0 0
    %3069 = vmatmul.mubr.bf16.gmra.mxu0 %v2822
    %v3070 = vpop.f32.mrf.mxu0
    %v3071 = vadd.f32 0.0, %v3070
    %v3072 = vpop.f32.mrf.mxu0
    %v3073 = vpop.f32.mrf.mxu0
    %v3074 = vadd.f32 0.0, %v3073
    %v3075 = vpop.f32.mrf.mxu0
    %3076 = vmatprep.mubr.bf16.mxu0 0
    %3077 = vmatmul.mubr.bf16.gmra.mxu0 %v2825
    %v3078 = vpop.f32.mrf.mxu0
    %v3079 = vadd.f32 0.0, %v3078
    %v3080 = vpop.f32.mrf.mxu0
    %v3081 = vpop.f32.mrf.mxu0
    %v3082 = vadd.f32 0.0, %v3081
    %v3083 = vpop.f32.mrf.mxu0
    %3084 = vmatprep.mubr.bf16.mxu0 0
    %3085 = vmatmul.mubr.bf16.gmra.mxu0 %v2828
    %v3086 = vpop.f32.mrf.mxu0
    %v3087 = vadd.f32 0.0, %v3086
    %v3088 = vpop.f32.mrf.mxu0
    %v3089 = vpop.f32.mrf.mxu0
    %v3090 = vadd.f32 0.0, %v3089
    %v3091 = vpop.f32.mrf.mxu0
    %3092 = vmatprep.mubr.bf16.mxu0 0
    %3093 = vmatmul.mubr.bf16.gmra.mxu0 %v2831
    %v3094 = vpop.f32.mrf.mxu0
    %v3095 = vadd.f32 0.0, %v3094
    %v3096 = vpop.f32.mrf.mxu0
    %v3097 = vpop.f32.mrf.mxu0
    %v3098 = vadd.f32 0.0, %v3097
    %v3099 = vpop.f32.mrf.mxu0
    %3100 = vmatprep.mubr.bf16.mxu0 0
    %3101 = vmatmul.mubr.bf16.gmra.mxu0 %v2834
    %v3102 = vpop.f32.mrf.mxu0
    %v3103 = vadd.f32 0.0, %v3102
    %v3104 = vpop.f32.mrf.mxu0
    %v3105 = vpop.f32.mrf.mxu0
    %v3106 = vadd.f32 0.0, %v3105
    %v3107 = vpop.f32.mrf.mxu0
    %3108 = vmatprep.mubr.bf16.mxu0 0
    %3109 = vmatmul.mubr.bf16.gmra.mxu0 %v2837
    %v3110 = vpop.f32.mrf.mxu0
    %v3111 = vadd.f32 0.0, %v3110
    %v3112 = vpop.f32.mrf.mxu0
    %v3113 = vpop.f32.mrf.mxu0
    %v3114 = vadd.f32 0.0, %v3113
    %v3115 = vpop.f32.mrf.mxu0
    %3116 = vmatprep.mubr.bf16.mxu0 0
    %3117 = vmatmul.mubr.bf16.gmra.mxu0 %v2840
    %v3118 = vpop.f32.mrf.mxu0
    %v3119 = vadd.f32 0.0, %v3118
    %v3120 = vpop.f32.mrf.mxu0
    %v3121 = vpop.f32.mrf.mxu0
    %v3122 = vadd.f32 0.0, %v3121
    %v3123 = vpop.f32.mrf.mxu0
    %3124 = vmatprep.mubr.bf16.mxu0 0
    %3125 = vmatmul.mubr.bf16.gmra.mxu0 %v2843
    %v3126 = vpop.f32.mrf.mxu0
    %v3127 = vadd.f32 0.0, %v3126
    %v3128 = vpop.f32.mrf.mxu0
    %v3129 = vpop.f32.mrf.mxu0
    %v3130 = vadd.f32 0.0, %v3129
    %v3131 = vpop.f32.mrf.mxu0
    %3132 = vmatprep.mubr.bf16.mxu0 0
    %3133 = vmatmul.mubr.bf16.gmra.mxu0 %v2846
    %v3134 = vpop.f32.mrf.mxu0
    %v3135 = vadd.f32 0.0, %v3134
    %v3136 = vpop.f32.mrf.mxu0
    %v3137 = vpop.f32.mrf.mxu0
    %v3138 = vadd.f32 0.0, %v3137
    %v3139 = vpop.f32.mrf.mxu0
    %3140 = vdwg.mxu0
    %v3141 = vld [vmem:[%s2] sm:$0x1]
    %v3142 = vld [vmem:[%s3] sm:$0x1]
    %v3143 = vsel %vm46, %v2887, 0.0
    %v3144 = vsel %vm46, %v2890, 0.0
    %v3145 = vadd.f32 %v3143, %v3144
    %v3146 = vsel %vm46, %v2895, 0.0
    %v3147 = vadd.f32 %v3145, %v3146
    %v3148 = vsel %vm46, %v2898, 0.0
    %v3149 = vadd.f32 %v3147, %v3148
    %v3150 = vsel %vm46, %v2903, 0.0
    %v3151 = vadd.f32 %v3149, %v3150
    %v3152 = vsel %vm46, %v2906, 0.0
    %v3153 = vadd.f32 %v3151, %v3152
    %v3154 = vsel %vm46, %v2911, 0.0
    %v3155 = vadd.f32 %v3153, %v3154
    %v3156 = vsel %vm46, %v2914, 0.0
    %v3157 = vadd.f32 %v3155, %v3156
    %v3158 = vsel %vm46, %v2919, 0.0
    %v3159 = vadd.f32 %v3157, %v3158
    %v3160 = vsel %vm46, %v2922, 0.0
    %v3161 = vadd.f32 %v3159, %v3160
    %v3162 = vsel %vm46, %v2927, 0.0
    %v3163 = vadd.f32 %v3161, %v3162
    %v3164 = vsel %vm46, %v2930, 0.0
    %v3165 = vadd.f32 %v3163, %v3164
    %v3166 = vsel %vm46, %v2935, 0.0
    %v3167 = vadd.f32 %v3165, %v3166
    %v3168 = vsel %vm46, %v2938, 0.0
    %v3169 = vadd.f32 %v3167, %v3168
    %v3170 = vsel %vm46, %v2943, 0.0
    %v3171 = vadd.f32 %v3169, %v3170
    %v3172 = vsel %vm46, %v2946, 0.0
    %v3173 = vadd.f32 %v3171, %v3172
    %v3174 = vsel %vm46, %v2951, 0.0
    %v3175 = vadd.f32 %v3173, %v3174
    %v3176 = vsel %vm46, %v2954, 0.0
    %v3177 = vadd.f32 %v3175, %v3176
    %v3178 = vsel %vm46, %v2959, 0.0
    %v3179 = vadd.f32 %v3177, %v3178
    %v3180 = vsel %vm46, %v2962, 0.0
    %v3181 = vadd.f32 %v3179, %v3180
    %v3182 = vsel %vm46, %v2967, 0.0
    %v3183 = vadd.f32 %v3181, %v3182
    %v3184 = vsel %vm46, %v2970, 0.0
    %v3185 = vadd.f32 %v3183, %v3184
    %v3186 = vsel %vm46, %v2975, 0.0
    %v3187 = vadd.f32 %v3185, %v3186
    %v3188 = vsel %vm46, %v2978, 0.0
    %v3189 = vadd.f32 %v3187, %v3188
    %v3190 = vsel %vm46, %v2983, 0.0
    %v3191 = vadd.f32 %v3189, %v3190
    %v3192 = vsel %vm46, %v2986, 0.0
    %v3193 = vadd.f32 %v3191, %v3192
    %v3194 = vsel %vm46, %v2991, 0.0
    %v3195 = vadd.f32 %v3193, %v3194
    %v3196 = vsel %vm46, %v2994, 0.0
    %v3197 = vadd.f32 %v3195, %v3196
    %v3198 = vsel %vm46, %v2999, 0.0
    %v3199 = vadd.f32 %v3197, %v3198
    %v3200 = vsel %vm46, %v3002, 0.0
    %v3201 = vadd.f32 %v3199, %v3200
    %v3202 = vsel %vm46, %v3007, 0.0
    %v3203 = vadd.f32 %v3201, %v3202
    %v3204 = vsel %vm46, %v3010, 0.0
    %v3205 = vadd.f32 %v3203, %v3204
    %v3206 = vsel %vm46, %v3015, 0.0
    %v3207 = vadd.f32 %v3205, %v3206
    %v3208 = vsel %vm46, %v3018, 0.0
    %v3209 = vadd.f32 %v3207, %v3208
    %v3210 = vsel %vm46, %v3023, 0.0
    %v3211 = vadd.f32 %v3209, %v3210
    %v3212 = vsel %vm46, %v3026, 0.0
    %v3213 = vadd.f32 %v3211, %v3212
    %v3214 = vsel %vm46, %v3031, 0.0
    %v3215 = vadd.f32 %v3213, %v3214
    %v3216 = vsel %vm46, %v3034, 0.0
    %v3217 = vadd.f32 %v3215, %v3216
    %v3218 = vsel %vm46, %v3039, 0.0
    %v3219 = vadd.f32 %v3217, %v3218
    %v3220 = vsel %vm46, %v3042, 0.0
    %v3221 = vadd.f32 %v3219, %v3220
    %v3222 = vsel %vm46, %v3047, 0.0
    %v3223 = vadd.f32 %v3221, %v3222
    %v3224 = vsel %vm46, %v3050, 0.0
    %v3225 = vadd.f32 %v3223, %v3224
    %v3226 = vsel %vm46, %v3055, 0.0
    %v3227 = vadd.f32 %v3225, %v3226
    %v3228 = vsel %vm46, %v3058, 0.0
    %v3229 = vadd.f32 %v3227, %v3228
    %v3230 = vsel %vm46, %v3063, 0.0
    %v3231 = vadd.f32 %v3229, %v3230
    %v3232 = vsel %vm46, %v3066, 0.0
    %v3233 = vadd.f32 %v3231, %v3232
    %v3234 = vsel %vm46, %v3071, 0.0
    %v3235 = vadd.f32 %v3233, %v3234
    %v3236 = vsel %vm46, %v3074, 0.0
    %v3237 = vadd.f32 %v3235, %v3236
    %v3238 = vsel %vm46, %v3079, 0.0
    %v3239 = vadd.f32 %v3237, %v3238
    %v3240 = vsel %vm46, %v3082, 0.0
    %v3241 = vadd.f32 %v3239, %v3240
    %v3242 = vsel %vm46, %v3087, 0.0
    %v3243 = vadd.f32 %v3241, %v3242
    %v3244 = vsel %vm46, %v3090, 0.0
    %v3245 = vadd.f32 %v3243, %v3244
    %v3246 = vsel %vm46, %v3095, 0.0
    %v3247 = vadd.f32 %v3245, %v3246
    %v3248 = vsel %vm46, %v3098, 0.0
    %v3249 = vadd.f32 %v3247, %v3248
    %v3250 = vsel %vm46, %v3103, 0.0
    %v3251 = vadd.f32 %v3249, %v3250
    %v3252 = vsel %vm46, %v3106, 0.0
    %v3253 = vadd.f32 %v3251, %v3252
    %v3254 = vsel %vm46, %v3111, 0.0
    %v3255 = vadd.f32 %v3253, %v3254
    %v3256 = vsel %vm46, %v3114, 0.0
    %v3257 = vadd.f32 %v3255, %v3256
    %v3258 = vsel %vm46, %v3119, 0.0
    %v3259 = vadd.f32 %v3257, %v3258
    %v3260 = vsel %vm46, %v3122, 0.0
    %v3261 = vadd.f32 %v3259, %v3260
    %v3262 = vsel %vm46, %v3127, 0.0
    %v3263 = vadd.f32 %v3261, %v3262
    %v3264 = vsel %vm46, %v3130, 0.0
    %v3265 = vadd.f32 %v3263, %v3264
    %v3266 = vsel %vm46, %v3135, 0.0
    %v3267 = vadd.f32 %v3265, %v3266
    %v3268 = vsel %vm46, %v3138, 0.0
    %v3269 = vadd.f32 %v3267, %v3268
    %v3270 = vrot.slane %v3269, 4
    %v3271 = vadd.f32 %v3269, %v3270
    %v3272 = vrot.slane %v3271, 2
    %v3273 = vadd.f32 %v3271, %v3272
    %v3274 = vrot.slane %v3273, 1
    %v3275 = vadd.f32 %v3273, %v3274
    %v3276 = vmul.f32 %v3275, 0.001953125
    %v3277 = vsub.f32 %v2887, %v3276
    %v3278 = vsub.f32 %v2890, %v3276
    %v3279 = vsub.f32 %v2895, %v3276
    %v3280 = vsub.f32 %v2898, %v3276
    %v3281 = vsub.f32 %v2903, %v3276
    %v3282 = vsub.f32 %v2906, %v3276
    %v3283 = vsub.f32 %v2911, %v3276
    %v3284 = vsub.f32 %v2914, %v3276
    %v3285 = vsub.f32 %v2919, %v3276
    %v3286 = vsub.f32 %v2922, %v3276
    %v3287 = vsub.f32 %v2927, %v3276
    %v3288 = vsub.f32 %v2930, %v3276
    %v3289 = vsub.f32 %v2935, %v3276
    %v3290 = vsub.f32 %v2938, %v3276
    %v3291 = vsub.f32 %v2943, %v3276
    %v3292 = vsub.f32 %v2946, %v3276
    %v3293 = vsub.f32 %v2951, %v3276
    %v3294 = vsub.f32 %v2954, %v3276
    %v3295 = vsub.f32 %v2959, %v3276
    %v3296 = vsub.f32 %v2962, %v3276
    %v3297 = vsub.f32 %v2967, %v3276
    %v3298 = vsub.f32 %v2970, %v3276
    %v3299 = vsub.f32 %v2975, %v3276
    %v3300 = vsub.f32 %v2978, %v3276
    %v3301 = vsub.f32 %v2983, %v3276
    %v3302 = vsub.f32 %v2986, %v3276
    %v3303 = vsub.f32 %v2991, %v3276
    %v3304 = vsub.f32 %v2994, %v3276
    %v3305 = vsub.f32 %v2999, %v3276
    %v3306 = vsub.f32 %v3002, %v3276
    %v3307 = vsub.f32 %v3007, %v3276
    %v3308 = vsub.f32 %v3010, %v3276
    %v3309 = vsub.f32 %v3015, %v3276
    %v3310 = vsub.f32 %v3018, %v3276
    %v3311 = vsub.f32 %v3023, %v3276
    %v3312 = vsub.f32 %v3026, %v3276
    %v3313 = vsub.f32 %v3031, %v3276
    %v3314 = vsub.f32 %v3034, %v3276
    %v3315 = vsub.f32 %v3039, %v3276
    %v3316 = vsub.f32 %v3042, %v3276
    %v3317 = vsub.f32 %v3047, %v3276
    %v3318 = vsub.f32 %v3050, %v3276
    %v3319 = vsub.f32 %v3055, %v3276
    %v3320 = vsub.f32 %v3058, %v3276
    %v3321 = vsub.f32 %v3063, %v3276
    %v3322 = vsub.f32 %v3066, %v3276
    %v3323 = vsub.f32 %v3071, %v3276
    %v3324 = vsub.f32 %v3074, %v3276
    %v3325 = vsub.f32 %v3079, %v3276
    %v3326 = vsub.f32 %v3082, %v3276
    %v3327 = vsub.f32 %v3087, %v3276
    %v3328 = vsub.f32 %v3090, %v3276
    %v3329 = vsub.f32 %v3095, %v3276
    %v3330 = vsub.f32 %v3098, %v3276
    %v3331 = vsub.f32 %v3103, %v3276
    %v3332 = vsub.f32 %v3106, %v3276
    %v3333 = vsub.f32 %v3111, %v3276
    %v3334 = vsub.f32 %v3114, %v3276
    %v3335 = vsub.f32 %v3119, %v3276
    %v3336 = vsub.f32 %v3122, %v3276
    %v3337 = vsub.f32 %v3127, %v3276
    %v3338 = vsub.f32 %v3130, %v3276
    %v3339 = vsub.f32 %v3135, %v3276
    %v3340 = vsub.f32 %v3138, %v3276
    %v3341 = vmul.f32 %v3277, %v3277
    %v3342 = vmul.f32 %v3278, %v3278
    %v3343 = vmul.f32 %v3279, %v3279
    %v3344 = vmul.f32 %v3280, %v3280
    %v3345 = vmul.f32 %v3281, %v3281
    %v3346 = vmul.f32 %v3282, %v3282
    %v3347 = vmul.f32 %v3283, %v3283
    %v3348 = vmul.f32 %v3284, %v3284
    %v3349 = vmul.f32 %v3285, %v3285
    %v3350 = vmul.f32 %v3286, %v3286
    %v3351 = vmul.f32 %v3287, %v3287
    %v3352 = vmul.f32 %v3288, %v3288
    %v3353 = vmul.f32 %v3289, %v3289
    %v3354 = vmul.f32 %v3290, %v3290
    %v3355 = vmul.f32 %v3291, %v3291
    %v3356 = vmul.f32 %v3292, %v3292
    %v3357 = vmul.f32 %v3293, %v3293
    %v3358 = vmul.f32 %v3294, %v3294
    %v3359 = vmul.f32 %v3295, %v3295
    %v3360 = vmul.f32 %v3296, %v3296
    %v3361 = vmul.f32 %v3297, %v3297
    %v3362 = vmul.f32 %v3298, %v3298
    %v3363 = vmul.f32 %v3299, %v3299
    %v3364 = vmul.f32 %v3300, %v3300
    %v3365 = vmul.f32 %v3301, %v3301
    %v3366 = vmul.f32 %v3302, %v3302
    %v3367 = vmul.f32 %v3303, %v3303
    %v3368 = vmul.f32 %v3304, %v3304
    %v3369 = vmul.f32 %v3305, %v3305
    %v3370 = vmul.f32 %v3306, %v3306
    %v3371 = vmul.f32 %v3307, %v3307
    %v3372 = vmul.f32 %v3308, %v3308
    %v3373 = vmul.f32 %v3309, %v3309
    %v3374 = vmul.f32 %v3310, %v3310
    %v3375 = vmul.f32 %v3311, %v3311
    %v3376 = vmul.f32 %v3312, %v3312
    %v3377 = vmul.f32 %v3313, %v3313
    %v3378 = vmul.f32 %v3314, %v3314
    %v3379 = vmul.f32 %v3315, %v3315
    %v3380 = vmul.f32 %v3316, %v3316
    %v3381 = vmul.f32 %v3317, %v3317
    %v3382 = vmul.f32 %v3318, %v3318
    %v3383 = vmul.f32 %v3319, %v3319
    %v3384 = vmul.f32 %v3320, %v3320
    %v3385 = vmul.f32 %v3321, %v3321
    %v3386 = vmul.f32 %v3322, %v3322
    %v3387 = vmul.f32 %v3323, %v3323
    %v3388 = vmul.f32 %v3324, %v3324
    %v3389 = vmul.f32 %v3325, %v3325
    %v3390 = vmul.f32 %v3326, %v3326
    %v3391 = vmul.f32 %v3327, %v3327
    %v3392 = vmul.f32 %v3328, %v3328
    %v3393 = vmul.f32 %v3329, %v3329
    %v3394 = vmul.f32 %v3330, %v3330
    %v3395 = vmul.f32 %v3331, %v3331
    %v3396 = vmul.f32 %v3332, %v3332
    %v3397 = vmul.f32 %v3333, %v3333
    %v3398 = vmul.f32 %v3334, %v3334
    %v3399 = vmul.f32 %v3335, %v3335
    %v3400 = vmul.f32 %v3336, %v3336
    %v3401 = vmul.f32 %v3337, %v3337
    %v3402 = vmul.f32 %v3338, %v3338
    %v3403 = vmul.f32 %v3339, %v3339
    %v3404 = vmul.f32 %v3340, %v3340
    %v3405 = vsel %vm46, %v3341, 0.0
    %v3406 = vsel %vm46, %v3342, 0.0
    %v3407 = vadd.f32 %v3405, %v3406
    %v3408 = vsel %vm46, %v3343, 0.0
    %v3409 = vadd.f32 %v3407, %v3408
    %v3410 = vsel %vm46, %v3344, 0.0
    %v3411 = vadd.f32 %v3409, %v3410
    %v3412 = vsel %vm46, %v3345, 0.0
    %v3413 = vadd.f32 %v3411, %v3412
    %v3414 = vsel %vm46, %v3346, 0.0
    %v3415 = vadd.f32 %v3413, %v3414
    %v3416 = vsel %vm46, %v3347, 0.0
    %v3417 = vadd.f32 %v3415, %v3416
    %v3418 = vsel %vm46, %v3348, 0.0
    %v3419 = vadd.f32 %v3417, %v3418
    %v3420 = vsel %vm46, %v3349, 0.0
    %v3421 = vadd.f32 %v3419, %v3420
    %v3422 = vsel %vm46, %v3350, 0.0
    %v3423 = vadd.f32 %v3421, %v3422
    %v3424 = vsel %vm46, %v3351, 0.0
    %v3425 = vadd.f32 %v3423, %v3424
    %v3426 = vsel %vm46, %v3352, 0.0
    %v3427 = vadd.f32 %v3425, %v3426
    %v3428 = vsel %vm46, %v3353, 0.0
    %v3429 = vadd.f32 %v3427, %v3428
    %v3430 = vsel %vm46, %v3354, 0.0
    %v3431 = vadd.f32 %v3429, %v3430
    %v3432 = vsel %vm46, %v3355, 0.0
    %v3433 = vadd.f32 %v3431, %v3432
    %v3434 = vsel %vm46, %v3356, 0.0
    %v3435 = vadd.f32 %v3433, %v3434
    %v3436 = vsel %vm46, %v3357, 0.0
    %v3437 = vadd.f32 %v3435, %v3436
    %v3438 = vsel %vm46, %v3358, 0.0
    %v3439 = vadd.f32 %v3437, %v3438
    %v3440 = vsel %vm46, %v3359, 0.0
    %v3441 = vadd.f32 %v3439, %v3440
    %v3442 = vsel %vm46, %v3360, 0.0
    %v3443 = vadd.f32 %v3441, %v3442
    %v3444 = vsel %vm46, %v3361, 0.0
    %v3445 = vadd.f32 %v3443, %v3444
    %v3446 = vsel %vm46, %v3362, 0.0
    %v3447 = vadd.f32 %v3445, %v3446
    %v3448 = vsel %vm46, %v3363, 0.0
    %v3449 = vadd.f32 %v3447, %v3448
    %v3450 = vsel %vm46, %v3364, 0.0
    %v3451 = vadd.f32 %v3449, %v3450
    %v3452 = vsel %vm46, %v3365, 0.0
    %v3453 = vadd.f32 %v3451, %v3452
    %v3454 = vsel %vm46, %v3366, 0.0
    %v3455 = vadd.f32 %v3453, %v3454
    %v3456 = vsel %vm46, %v3367, 0.0
    %v3457 = vadd.f32 %v3455, %v3456
    %v3458 = vsel %vm46, %v3368, 0.0
    %v3459 = vadd.f32 %v3457, %v3458
    %v3460 = vsel %vm46, %v3369, 0.0
    %v3461 = vadd.f32 %v3459, %v3460
    %v3462 = vsel %vm46, %v3370, 0.0
    %v3463 = vadd.f32 %v3461, %v3462
    %v3464 = vsel %vm46, %v3371, 0.0
    %v3465 = vadd.f32 %v3463, %v3464
    %v3466 = vsel %vm46, %v3372, 0.0
    %v3467 = vadd.f32 %v3465, %v3466
    %v3468 = vsel %vm46, %v3373, 0.0
    %v3469 = vadd.f32 %v3467, %v3468
    %v3470 = vsel %vm46, %v3374, 0.0
    %v3471 = vadd.f32 %v3469, %v3470
    %v3472 = vsel %vm46, %v3375, 0.0
    %v3473 = vadd.f32 %v3471, %v3472
    %v3474 = vsel %vm46, %v3376, 0.0
    %v3475 = vadd.f32 %v3473, %v3474
    %v3476 = vsel %vm46, %v3377, 0.0
    %v3477 = vadd.f32 %v3475, %v3476
    %v3478 = vsel %vm46, %v3378, 0.0
    %v3479 = vadd.f32 %v3477, %v3478
    %v3480 = vsel %vm46, %v3379, 0.0
    %v3481 = vadd.f32 %v3479, %v3480
    %v3482 = vsel %vm46, %v3380, 0.0
    %v3483 = vadd.f32 %v3481, %v3482
    %v3484 = vsel %vm46, %v3381, 0.0
    %v3485 = vadd.f32 %v3483, %v3484
    %v3486 = vsel %vm46, %v3382, 0.0
    %v3487 = vadd.f32 %v3485, %v3486
    %v3488 = vsel %vm46, %v3383, 0.0
    %v3489 = vadd.f32 %v3487, %v3488
    %v3490 = vsel %vm46, %v3384, 0.0
    %v3491 = vadd.f32 %v3489, %v3490
    %v3492 = vsel %vm46, %v3385, 0.0
    %v3493 = vadd.f32 %v3491, %v3492
    %v3494 = vsel %vm46, %v3386, 0.0
    %v3495 = vadd.f32 %v3493, %v3494
    %v3496 = vsel %vm46, %v3387, 0.0
    %v3497 = vadd.f32 %v3495, %v3496
    %v3498 = vsel %vm46, %v3388, 0.0
    %v3499 = vadd.f32 %v3497, %v3498
    %v3500 = vsel %vm46, %v3389, 0.0
    %v3501 = vadd.f32 %v3499, %v3500
    %v3502 = vsel %vm46, %v3390, 0.0
    %v3503 = vadd.f32 %v3501, %v3502
    %v3504 = vsel %vm46, %v3391, 0.0
    %v3505 = vadd.f32 %v3503, %v3504
    %v3506 = vsel %vm46, %v3392, 0.0
    %v3507 = vadd.f32 %v3505, %v3506
    %v3508 = vsel %vm46, %v3393, 0.0
    %v3509 = vadd.f32 %v3507, %v3508
    %v3510 = vsel %vm46, %v3394, 0.0
    %v3511 = vadd.f32 %v3509, %v3510
    %v3512 = vsel %vm46, %v3395, 0.0
    %v3513 = vadd.f32 %v3511, %v3512
    %v3514 = vsel %vm46, %v3396, 0.0
    %v3515 = vadd.f32 %v3513, %v3514
    %v3516 = vsel %vm46, %v3397, 0.0
    %v3517 = vadd.f32 %v3515, %v3516
    %v3518 = vsel %vm46, %v3398, 0.0
    %v3519 = vadd.f32 %v3517, %v3518
    %v3520 = vsel %vm46, %v3399, 0.0
    %v3521 = vadd.f32 %v3519, %v3520
    %v3522 = vsel %vm46, %v3400, 0.0
    %v3523 = vadd.f32 %v3521, %v3522
    %v3524 = vsel %vm46, %v3401, 0.0
    %v3525 = vadd.f32 %v3523, %v3524
    %v3526 = vsel %vm46, %v3402, 0.0
    %v3527 = vadd.f32 %v3525, %v3526
    %v3528 = vsel %vm46, %v3403, 0.0
    %v3529 = vadd.f32 %v3527, %v3528
    %v3530 = vsel %vm46, %v3404, 0.0
    %v3531 = vadd.f32 %v3529, %v3530
    %v3532 = vrot.slane %v3531, 4
    %v3533 = vadd.f32 %v3531, %v3532
    %v3534 = vrot.slane %v3533, 2
    %v3535 = vadd.f32 %v3533, %v3534
    %v3536 = vrot.slane %v3535, 1
    %v3537 = vadd.f32 %v3535, %v3536
    %v3538 = vmul.f32 %v3537, 0.001953125
    %v3539 = vadd.f32 %v3538, 1e-05
    %v3540 = vrsqrt.pop %v3539
    %v3541 = vmul.f32 %v3141, %v3540
    %v3543 = vlaneseq
    %v3544 = vshrl.u32 %v3543, 7
    %v3545 = vsub.s32 0, %v3544
    %v3546 = vrot.slane %v3541, %v3545
    %v3548 = vmul.f32 %v3277, %v3546
    %v3549 = vmul.f32 %v3278, %v3546
    %v3550 = vmul.f32 %v3279, %v3546
    %v3551 = vmul.f32 %v3280, %v3546
    %v3552 = vmul.f32 %v3281, %v3546
    %v3553 = vmul.f32 %v3282, %v3546
    %v3554 = vmul.f32 %v3283, %v3546
    %v3555 = vmul.f32 %v3284, %v3546
    %v3556 = vmul.f32 %v3285, %v3546
    %v3557 = vmul.f32 %v3286, %v3546
    %v3558 = vmul.f32 %v3287, %v3546
    %v3559 = vmul.f32 %v3288, %v3546
    %v3560 = vmul.f32 %v3289, %v3546
    %v3561 = vmul.f32 %v3290, %v3546
    %v3562 = vmul.f32 %v3291, %v3546
    %v3563 = vmul.f32 %v3292, %v3546
    %v3564 = vmul.f32 %v3293, %v3546
    %v3565 = vmul.f32 %v3294, %v3546
    %v3566 = vmul.f32 %v3295, %v3546
    %v3567 = vmul.f32 %v3296, %v3546
    %v3568 = vmul.f32 %v3297, %v3546
    %v3569 = vmul.f32 %v3298, %v3546
    %v3570 = vmul.f32 %v3299, %v3546
    %v3571 = vmul.f32 %v3300, %v3546
    %v3572 = vmul.f32 %v3301, %v3546
    %v3573 = vmul.f32 %v3302, %v3546
    %v3574 = vmul.f32 %v3303, %v3546
    %v3575 = vmul.f32 %v3304, %v3546
    %v3576 = vmul.f32 %v3305, %v3546
    %v3577 = vmul.f32 %v3306, %v3546
    %v3578 = vmul.f32 %v3307, %v3546
    %v3579 = vmul.f32 %v3308, %v3546
    %v3580 = vmul.f32 %v3309, %v3546
    %v3581 = vmul.f32 %v3310, %v3546
    %v3582 = vmul.f32 %v3311, %v3546
    %v3583 = vmul.f32 %v3312, %v3546
    %v3584 = vmul.f32 %v3313, %v3546
    %v3585 = vmul.f32 %v3314, %v3546
    %v3586 = vmul.f32 %v3315, %v3546
    %v3587 = vmul.f32 %v3316, %v3546
    %v3588 = vmul.f32 %v3317, %v3546
    %v3589 = vmul.f32 %v3318, %v3546
    %v3590 = vmul.f32 %v3319, %v3546
    %v3591 = vmul.f32 %v3320, %v3546
    %v3592 = vmul.f32 %v3321, %v3546
    %v3593 = vmul.f32 %v3322, %v3546
    %v3594 = vmul.f32 %v3323, %v3546
    %v3595 = vmul.f32 %v3324, %v3546
    %v3596 = vmul.f32 %v3325, %v3546
    %v3597 = vmul.f32 %v3326, %v3546
    %v3598 = vmul.f32 %v3327, %v3546
    %v3599 = vmul.f32 %v3328, %v3546
    %v3600 = vmul.f32 %v3329, %v3546
    %v3601 = vmul.f32 %v3330, %v3546
    %v3602 = vmul.f32 %v3331, %v3546
    %v3603 = vmul.f32 %v3332, %v3546
    %v3604 = vmul.f32 %v3333, %v3546
    %v3605 = vmul.f32 %v3334, %v3546
    %v3606 = vmul.f32 %v3335, %v3546
    %v3607 = vmul.f32 %v3336, %v3546
    %v3608 = vmul.f32 %v3337, %v3546
    %v3609 = vmul.f32 %v3338, %v3546
    %v3610 = vmul.f32 %v3339, %v3546
    %v3611 = vmul.f32 %v3340, %v3546
    %v3613 = vlaneseq
    %v3614 = vshrl.u32 %v3613, 7
    %v3615 = vsub.s32 0, %v3614
    %v3616 = vrot.slane %v3142, %v3615
    %v3618 = vadd.f32 %v3548, %v3616
    %v3619 = vadd.f32 %v3549, %v3616
    %v3620 = vadd.f32 %v3550, %v3616
    %v3621 = vadd.f32 %v3551, %v3616
    %v3622 = vadd.f32 %v3552, %v3616
    %v3623 = vadd.f32 %v3553, %v3616
    %v3624 = vadd.f32 %v3554, %v3616
    %v3625 = vadd.f32 %v3555, %v3616
    %v3626 = vadd.f32 %v3556, %v3616
    %v3627 = vadd.f32 %v3557, %v3616
    %v3628 = vadd.f32 %v3558, %v3616
    %v3629 = vadd.f32 %v3559, %v3616
    %v3630 = vadd.f32 %v3560, %v3616
    %v3631 = vadd.f32 %v3561, %v3616
    %v3632 = vadd.f32 %v3562, %v3616
    %v3633 = vadd.f32 %v3563, %v3616
    %v3634 = vadd.f32 %v3564, %v3616
    %v3635 = vadd.f32 %v3565, %v3616
    %v3636 = vadd.f32 %v3566, %v3616
    %v3637 = vadd.f32 %v3567, %v3616
    %v3638 = vadd.f32 %v3568, %v3616
    %v3639 = vadd.f32 %v3569, %v3616
    %v3640 = vadd.f32 %v3570, %v3616
    %v3641 = vadd.f32 %v3571, %v3616
    %v3642 = vadd.f32 %v3572, %v3616
    %v3643 = vadd.f32 %v3573, %v3616
    %v3644 = vadd.f32 %v3574, %v3616
    %v3645 = vadd.f32 %v3575, %v3616
    %v3646 = vadd.f32 %v3576, %v3616
    %v3647 = vadd.f32 %v3577, %v3616
    %v3648 = vadd.f32 %v3578, %v3616
    %v3649 = vadd.f32 %v3579, %v3616
    %v3650 = vadd.f32 %v3580, %v3616
    %v3651 = vadd.f32 %v3581, %v3616
    %v3652 = vadd.f32 %v3582, %v3616
    %v3653 = vadd.f32 %v3583, %v3616
    %v3654 = vadd.f32 %v3584, %v3616
    %v3655 = vadd.f32 %v3585, %v3616
    %v3656 = vadd.f32 %v3586, %v3616
    %v3657 = vadd.f32 %v3587, %v3616
    %v3658 = vadd.f32 %v3588, %v3616
    %v3659 = vadd.f32 %v3589, %v3616
    %v3660 = vadd.f32 %v3590, %v3616
    %v3661 = vadd.f32 %v3591, %v3616
    %v3662 = vadd.f32 %v3592, %v3616
    %v3663 = vadd.f32 %v3593, %v3616
    %v3664 = vadd.f32 %v3594, %v3616
    %v3665 = vadd.f32 %v3595, %v3616
    %v3666 = vadd.f32 %v3596, %v3616
    %v3667 = vadd.f32 %v3597, %v3616
    %v3668 = vadd.f32 %v3598, %v3616
    %v3669 = vadd.f32 %v3599, %v3616
    %v3670 = vadd.f32 %v3600, %v3616
    %v3671 = vadd.f32 %v3601, %v3616
    %v3672 = vadd.f32 %v3602, %v3616
    %v3673 = vadd.f32 %v3603, %v3616
    %v3674 = vadd.f32 %v3604, %v3616
    %v3675 = vadd.f32 %v3605, %v3616
    %v3676 = vadd.f32 %v3606, %v3616
    %v3677 = vadd.f32 %v3607, %v3616
    %v3678 = vadd.f32 %v3608, %v3616
    %v3679 = vadd.f32 %v3609, %v3616
    %v3680 = vadd.f32 %v3610, %v3616
    %v3681 = vadd.f32 %v3611, %v3616
    %v3682 = vmax.f32 %v3618, 0.0
    %v3683 = vmax.f32 %v3619, 0.0
    %v3684 = vmax.f32 %v3620, 0.0
    %v3685 = vmax.f32 %v3621, 0.0
    %v3686 = vmax.f32 %v3622, 0.0
    %v3687 = vmax.f32 %v3623, 0.0
    %v3688 = vmax.f32 %v3624, 0.0
    %v3689 = vmax.f32 %v3625, 0.0
    %v3690 = vmax.f32 %v3626, 0.0
    %v3691 = vmax.f32 %v3627, 0.0
    %v3692 = vmax.f32 %v3628, 0.0
    %v3693 = vmax.f32 %v3629, 0.0
    %v3694 = vmax.f32 %v3630, 0.0
    %v3695 = vmax.f32 %v3631, 0.0
    %v3696 = vmax.f32 %v3632, 0.0
    %v3697 = vmax.f32 %v3633, 0.0
    %v3698 = vmax.f32 %v3634, 0.0
    %v3699 = vmax.f32 %v3635, 0.0
    %v3700 = vmax.f32 %v3636, 0.0
    %v3701 = vmax.f32 %v3637, 0.0
    %v3702 = vmax.f32 %v3638, 0.0
    %v3703 = vmax.f32 %v3639, 0.0
    %v3704 = vmax.f32 %v3640, 0.0
    %v3705 = vmax.f32 %v3641, 0.0
    %v3706 = vmax.f32 %v3642, 0.0
    %v3707 = vmax.f32 %v3643, 0.0
    %v3708 = vmax.f32 %v3644, 0.0
    %v3709 = vmax.f32 %v3645, 0.0
    %v3710 = vmax.f32 %v3646, 0.0
    %v3711 = vmax.f32 %v3647, 0.0
    %v3712 = vmax.f32 %v3648, 0.0
    %v3713 = vmax.f32 %v3649, 0.0
    %v3714 = vmax.f32 %v3650, 0.0
    %v3715 = vmax.f32 %v3651, 0.0
    %v3716 = vmax.f32 %v3652, 0.0
    %v3717 = vmax.f32 %v3653, 0.0
    %v3718 = vmax.f32 %v3654, 0.0
    %v3719 = vmax.f32 %v3655, 0.0
    %v3720 = vmax.f32 %v3656, 0.0
    %v3721 = vmax.f32 %v3657, 0.0
    %v3722 = vmax.f32 %v3658, 0.0
    %v3723 = vmax.f32 %v3659, 0.0
    %v3724 = vmax.f32 %v3660, 0.0
    %v3725 = vmax.f32 %v3661, 0.0
    %v3726 = vmax.f32 %v3662, 0.0
    %v3727 = vmax.f32 %v3663, 0.0
    %v3728 = vmax.f32 %v3664, 0.0
    %v3729 = vmax.f32 %v3665, 0.0
    %v3730 = vmax.f32 %v3666, 0.0
    %v3731 = vmax.f32 %v3667, 0.0
    %v3732 = vmax.f32 %v3668, 0.0
    %v3733 = vmax.f32 %v3669, 0.0
    %v3734 = vmax.f32 %v3670, 0.0
    %v3735 = vmax.f32 %v3671, 0.0
    %v3736 = vmax.f32 %v3672, 0.0
    %v3737 = vmax.f32 %v3673, 0.0
    %v3738 = vmax.f32 %v3674, 0.0
    %v3739 = vmax.f32 %v3675, 0.0
    %v3740 = vmax.f32 %v3676, 0.0
    %v3741 = vmax.f32 %v3677, 0.0
    %v3742 = vmax.f32 %v3678, 0.0
    %v3743 = vmax.f32 %v3679, 0.0
    %v3744 = vmax.f32 %v3680, 0.0
    %v3745 = vmax.f32 %v3681, 0.0
    %3746 = vst.msk [vmem:[%s122] sm:$0xff] %vm46, %v3682
    %3747 = vst.msk [vmem:[%s122 + $0x10] sm:$0xff] %vm46, %v3683
    %3748 = vst.msk [vmem:[%s122 + $0x20] sm:$0xff] %vm46, %v3684
    %3749 = vst.msk [vmem:[%s122 + $0x30] sm:$0xff] %vm46, %v3685
    %3750 = vst.msk [vmem:[%s122 + $0x40] sm:$0xff] %vm46, %v3686
    %3751 = vst.msk [vmem:[%s122 + $0x50] sm:$0xff] %vm46, %v3687
    %3752 = vst.msk [vmem:[%s122 + $0x60] sm:$0xff] %vm46, %v3688
    %3753 = vst.msk [vmem:[%s122 + $0x70] sm:$0xff] %vm46, %v3689
    %3754 = vst.msk [vmem:[%s122 + $0x90] sm:$0xff] %vm46, %v3690
    %3755 = vst.msk [vmem:[%s122 + $0xa0] sm:$0xff] %vm46, %v3691
    %3756 = vst.msk [vmem:[%s122 + $0xb0] sm:$0xff] %vm46, %v3692
    %3757 = vst.msk [vmem:[%s122 + $0xc0] sm:$0xff] %vm46, %v3693
    %3758 = vst.msk [vmem:[%s122 + $0xd0] sm:$0xff] %vm46, %v3694
    %3759 = vst.msk [vmem:[%s122 + $0xe0] sm:$0xff] %vm46, %v3695
    %3760 = vst.msk [vmem:[%s122 + $0xf0] sm:$0xff] %vm46, %v3696
    %3761 = vst.msk [vmem:[%s122 + $0x100] sm:$0xff] %vm46, %v3697
    %3762 = vst.msk [vmem:[%s98 + $0x1] sm:$0xff] %vm46, %v3698
    %3763 = vst.msk [vmem:[%s98 + $0x11] sm:$0xff] %vm46, %v3699
    %3764 = vst.msk [vmem:[%s98 + $0x21] sm:$0xff] %vm46, %v3700
    %3765 = vst.msk [vmem:[%s98 + $0x31] sm:$0xff] %vm46, %v3701
    %3766 = vst.msk [vmem:[%s98 + $0x41] sm:$0xff] %vm46, %v3702
    %3767 = vst.msk [vmem:[%s98 + $0x51] sm:$0xff] %vm46, %v3703
    %3768 = vst.msk [vmem:[%s98 + $0x61] sm:$0xff] %vm46, %v3704
    %3769 = vst.msk [vmem:[%s98 + $0x71] sm:$0xff] %vm46, %v3705
    %3770 = vst.msk [vmem:[%s98 + $0x91] sm:$0xff] %vm46, %v3706
    %3771 = vst.msk [vmem:[%s98 + $0xa1] sm:$0xff] %vm46, %v3707
    %3772 = vst.msk [vmem:[%s98 + $0xb1] sm:$0xff] %vm46, %v3708
    %3773 = vst.msk [vmem:[%s98 + $0xc1] sm:$0xff] %vm46, %v3709
    %3774 = vst.msk [vmem:[%s98 + $0xd1] sm:$0xff] %vm46, %v3710
    %3775 = vst.msk [vmem:[%s98 + $0xe1] sm:$0xff] %vm46, %v3711
    %3776 = vst.msk [vmem:[%s98 + $0xf1] sm:$0xff] %vm46, %v3712
    %3777 = vst.msk [vmem:[%s98 + $0x101] sm:$0xff] %vm46, %v3713
    %s3778 = scalar_lea.vmem [#allocation2], 304
    %3779 = vst.msk [vmem:[%s3778] sm:$0xff] %vm46, %v3714
    %3780 = vst.msk [vmem:[%s3778 + $0x10] sm:$0xff] %vm46, %v3715
    %3781 = vst.msk [vmem:[%s3778 + $0x20] sm:$0xff] %vm46, %v3716
    %3782 = vst.msk [vmem:[%s3778 + $0x30] sm:$0xff] %vm46, %v3717
    %3783 = vst.msk [vmem:[%s3778 + $0x40] sm:$0xff] %vm46, %v3718
    %3784 = vst.msk [vmem:[%s3778 + $0x50] sm:$0xff] %vm46, %v3719
    %3785 = vst.msk [vmem:[%s3778 + $0x60] sm:$0xff] %vm46, %v3720
    %3786 = vst.msk [vmem:[%s3778 + $0x70] sm:$0xff] %vm46, %v3721
    %3787 = vst.msk [vmem:[%s3778 + $0x90] sm:$0xff] %vm46, %v3722
    %3788 = vst.msk [vmem:[%s3778 + $0xa0] sm:$0xff] %vm46, %v3723
    %3789 = vst.msk [vmem:[%s3778 + $0xb0] sm:$0xff] %vm46, %v3724
    %3790 = vst.msk [vmem:[%s3778 + $0xc0] sm:$0xff] %vm46, %v3725
    %3791 = vst.msk [vmem:[%s3778 + $0xd0] sm:$0xff] %vm46, %v3726
    %3792 = vst.msk [vmem:[%s3778 + $0xe0] sm:$0xff] %vm46, %v3727
    %3793 = vst.msk [vmem:[%s3778 + $0xf0] sm:$0xff] %vm46, %v3728
    %3794 = vst.msk [vmem:[%s3778 + $0x100] sm:$0xff] %vm46, %v3729
    %s3795 = scalar_lea.vmem [#allocation2], 16
    %3796 = vst.msk [vmem:[%s3795 + $0x1] sm:$0xff] %vm46, %v3730
    %3797 = vst.msk [vmem:[%s3795 + $0x11] sm:$0xff] %vm46, %v3731
    %3798 = vst.msk [vmem:[%s3795 + $0x21] sm:$0xff] %vm46, %v3732
    %3799 = vst.msk [vmem:[%s3795 + $0x31] sm:$0xff] %vm46, %v3733
    %3800 = vst.msk [vmem:[%s3795 + $0x41] sm:$0xff] %vm46, %v3734
    %3801 = vst.msk [vmem:[%s3795 + $0x51] sm:$0xff] %vm46, %v3735
    %3802 = vst.msk [vmem:[%s3795 + $0x61] sm:$0xff] %vm46, %v3736
    %3803 = vst.msk [vmem:[%s3795 + $0x71] sm:$0xff] %vm46, %v3737
    %3804 = vst.msk [vmem:[%s3795 + $0x91] sm:$0xff] %vm46, %v3738
    %3805 = vst.msk [vmem:[%s3795 + $0xa1] sm:$0xff] %vm46, %v3739
    %3806 = vst.msk [vmem:[%s3795 + $0xb1] sm:$0xff] %vm46, %v3740
    %3807 = vst.msk [vmem:[%s3795 + $0xc1] sm:$0xff] %vm46, %v3741
    %3808 = vst.msk [vmem:[%s3795 + $0xd1] sm:$0xff] %vm46, %v3742
    %3809 = vst.msk [vmem:[%s3795 + $0xe1] sm:$0xff] %vm46, %v3743
    %3810 = vst.msk [vmem:[%s3795 + $0xf1] sm:$0xff] %vm46, %v3744
    %3811 = vst.msk [vmem:[%s3795 + $0x101] sm:$0xff] %vm46, %v3745
    %v3812 = vld [vmem:[#allocation2] sm:$0xff]
    %v3813 = vld [vmem:[#allocation2 + $0x10] sm:$0xff]
    %v3814 = vld [vmem:[#allocation2 + $0x20] sm:$0xff]
    %v3815 = vld [vmem:[#allocation2 + $0x30] sm:$0xff]
    %v3816 = vld [vmem:[#allocation2 + $0x40] sm:$0xff]
    %v3817 = vld [vmem:[#allocation2 + $0x50] sm:$0xff]
    %v3818 = vld [vmem:[#allocation2 + $0x60] sm:$0xff]
    %v3819 = vld [vmem:[#allocation2 + $0x70] sm:$0xff]
    %v3820 = vld [vmem:[#allocation2 + $0x90] sm:$0xff]
    %v3821 = vld [vmem:[#allocation2 + $0xa0] sm:$0xff]
    %v3822 = vld [vmem:[#allocation2 + $0xb0] sm:$0xff]
    %v3823 = vld [vmem:[#allocation2 + $0xc0] sm:$0xff]
    %v3824 = vld [vmem:[#allocation2 + $0xd0] sm:$0xff]
    %v3825 = vld [vmem:[#allocation2 + $0xe0] sm:$0xff]
    %v3826 = vld [vmem:[#allocation2 + $0xf0] sm:$0xff]
    %v3827 = vld [vmem:[#allocation2 + $0x100] sm:$0xff]
    %v3828 = vld [vmem:[%s70] sm:$0xff]
    %v3829 = vld [vmem:[%s70 + $0x10] sm:$0xff]
    %v3830 = vld [vmem:[%s70 + $0x20] sm:$0xff]
    %v3831 = vld [vmem:[%s70 + $0x30] sm:$0xff]
    %v3832 = vld [vmem:[%s70 + $0x40] sm:$0xff]
    %v3833 = vld [vmem:[%s70 + $0x50] sm:$0xff]
    %v3834 = vld [vmem:[%s70 + $0x60] sm:$0xff]
    %v3835 = vld [vmem:[%s70 + $0x70] sm:$0xff]
    %v3836 = vld [vmem:[%s70 + $0x90] sm:$0xff]
    %v3837 = vld [vmem:[%s70 + $0xa0] sm:$0xff]
    %v3838 = vld [vmem:[%s70 + $0xb0] sm:$0xff]
    %v3839 = vld [vmem:[%s70 + $0xc0] sm:$0xff]
    %v3840 = vld [vmem:[%s70 + $0xd0] sm:$0xff]
    %v3841 = vld [vmem:[%s70 + $0xe0] sm:$0xff]
    %v3842 = vld [vmem:[%s70 + $0xf0] sm:$0xff]
    %v3843 = vld [vmem:[%s70 + $0x100] sm:$0xff]
    %v3844 = vld [vmem:[#allocation2 + $0x1] sm:$0xff]
    %v3845 = vld [vmem:[#allocation2 + $0x11] sm:$0xff]
    %v3846 = vld [vmem:[#allocation2 + $0x21] sm:$0xff]
    %v3847 = vld [vmem:[#allocation2 + $0x31] sm:$0xff]
    %v3848 = vld [vmem:[#allocation2 + $0x41] sm:$0xff]
    %v3849 = vld [vmem:[#allocation2 + $0x51] sm:$0xff]
    %v3850 = vld [vmem:[#allocation2 + $0x61] sm:$0xff]
    %v3851 = vld [vmem:[#allocation2 + $0x71] sm:$0xff]
    %v3852 = vld [vmem:[#allocation2 + $0x91] sm:$0xff]
    %v3853 = vld [vmem:[#allocation2 + $0xa1] sm:$0xff]
    %v3854 = vld [vmem:[#allocation2 + $0xb1] sm:$0xff]
    %v3855 = vld [vmem:[#allocation2 + $0xc1] sm:$0xff]
    %v3856 = vld [vmem:[#allocation2 + $0xd1] sm:$0xff]
    %v3857 = vld [vmem:[#allocation2 + $0xe1] sm:$0xff]
    %v3858 = vld [vmem:[#allocation2 + $0xf1] sm:$0xff]
    %v3859 = vld [vmem:[#allocation2 + $0x101] sm:$0xff]
    %v3860 = vld [vmem:[%s98] sm:$0xff]
    %v3861 = vld [vmem:[%s98 + $0x10] sm:$0xff]
    %v3862 = vld [vmem:[%s98 + $0x20] sm:$0xff]
    %v3863 = vld [vmem:[%s98 + $0x30] sm:$0xff]
    %v3864 = vld [vmem:[%s98 + $0x40] sm:$0xff]
    %v3865 = vld [vmem:[%s98 + $0x50] sm:$0xff]
    %v3866 = vld [vmem:[%s98 + $0x60] sm:$0xff]
    %v3867 = vld [vmem:[%s98 + $0x70] sm:$0xff]
    %v3868 = vld [vmem:[%s98 + $0x90] sm:$0xff]
    %v3869 = vld [vmem:[%s98 + $0xa0] sm:$0xff]
    %v3870 = vld [vmem:[%s98 + $0xb0] sm:$0xff]
    %v3871 = vld [vmem:[%s98 + $0xc0] sm:$0xff]
    %v3872 = vld [vmem:[%s98 + $0xd0] sm:$0xff]
    %v3873 = vld [vmem:[%s98 + $0xe0] sm:$0xff]
    %v3874 = vld [vmem:[%s98 + $0xf0] sm:$0xff]
    %v3875 = vld [vmem:[%s98 + $0x100] sm:$0xff]
    %v3876 = vld [vmem:[%s122] sm:$0xff]
    %v3877 = vld [vmem:[%s122 + $0x10] sm:$0xff]
    %v3878 = vld [vmem:[%s122 + $0x20] sm:$0xff]
    %v3879 = vld [vmem:[%s122 + $0x30] sm:$0xff]
    %v3880 = vld [vmem:[%s122 + $0x40] sm:$0xff]
    %v3881 = vld [vmem:[%s122 + $0x50] sm:$0xff]
    %v3882 = vld [vmem:[%s122 + $0x60] sm:$0xff]
    %v3883 = vld [vmem:[%s122 + $0x70] sm:$0xff]
    %v3884 = vld [vmem:[%s122 + $0x90] sm:$0xff]
    %v3885 = vld [vmem:[%s122 + $0xa0] sm:$0xff]
    %v3886 = vld [vmem:[%s122 + $0xb0] sm:$0xff]
    %v3887 = vld [vmem:[%s122 + $0xc0] sm:$0xff]
    %v3888 = vld [vmem:[%s122 + $0xd0] sm:$0xff]
    %v3889 = vld [vmem:[%s122 + $0xe0] sm:$0xff]
    %v3890 = vld [vmem:[%s122 + $0xf0] sm:$0xff]
    %v3891 = vld [vmem:[%s122 + $0x100] sm:$0xff]
    %v3892 = vld [vmem:[%s98 + $0x1] sm:$0xff]
    %v3893 = vld [vmem:[%s98 + $0x11] sm:$0xff]
    %v3894 = vld [vmem:[%s98 + $0x21] sm:$0xff]
    %v3895 = vld [vmem:[%s98 + $0x31] sm:$0xff]
    %v3896 = vld [vmem:[%s98 + $0x41] sm:$0xff]
    %v3897 = vld [vmem:[%s98 + $0x51] sm:$0xff]
    %v3898 = vld [vmem:[%s98 + $0x61] sm:$0xff]
    %v3899 = vld [vmem:[%s98 + $0x71] sm:$0xff]
    %v3900 = vld [vmem:[%s98 + $0x91] sm:$0xff]
    %v3901 = vld [vmem:[%s98 + $0xa1] sm:$0xff]
    %v3902 = vld [vmem:[%s98 + $0xb1] sm:$0xff]
    %v3903 = vld [vmem:[%s98 + $0xc1] sm:$0xff]
    %v3904 = vld [vmem:[%s98 + $0xd1] sm:$0xff]
    %v3905 = vld [vmem:[%s98 + $0xe1] sm:$0xff]
    %v3906 = vld [vmem:[%s98 + $0xf1] sm:$0xff]
    %v3907 = vld [vmem:[%s98 + $0x101] sm:$0xff]
    %v3908 = vld [vmem:[%s3795] sm:$0xff]
    %v3909 = vld [vmem:[%s3795 + $0x10] sm:$0xff]
    %v3910 = vld [vmem:[%s3795 + $0x20] sm:$0xff]
    %v3911 = vld [vmem:[%s3795 + $0x30] sm:$0xff]
    %v3912 = vld [vmem:[%s3795 + $0x40] sm:$0xff]
    %v3913 = vld [vmem:[%s3795 + $0x50] sm:$0xff]
    %v3914 = vld [vmem:[%s3795 + $0x60] sm:$0xff]
    %v3915 = vld [vmem:[%s3795 + $0x70] sm:$0xff]
    %v3916 = vld [vmem:[%s3795 + $0x90] sm:$0xff]
    %v3917 = vld [vmem:[%s3795 + $0xa0] sm:$0xff]
    %v3918 = vld [vmem:[%s3795 + $0xb0] sm:$0xff]
    %v3919 = vld [vmem:[%s3795 + $0xc0] sm:$0xff]
    %v3920 = vld [vmem:[%s3795 + $0xd0] sm:$0xff]
    %v3921 = vld [vmem:[%s3795 + $0xe0] sm:$0xff]
    %v3922 = vld [vmem:[%s3795 + $0xf0] sm:$0xff]
    %v3923 = vld [vmem:[%s3795 + $0x100] sm:$0xff]
    %v3924 = vld [vmem:[%s3778] sm:$0xff]
    %v3925 = vld [vmem:[%s3778 + $0x10] sm:$0xff]
    %v3926 = vld [vmem:[%s3778 + $0x20] sm:$0xff]
    %v3927 = vld [vmem:[%s3778 + $0x30] sm:$0xff]
    %v3928 = vld [vmem:[%s3778 + $0x40] sm:$0xff]
    %v3929 = vld [vmem:[%s3778 + $0x50] sm:$0xff]
    %v3930 = vld [vmem:[%s3778 + $0x60] sm:$0xff]
    %v3931 = vld [vmem:[%s3778 + $0x70] sm:$0xff]
    %v3932 = vld [vmem:[%s3778 + $0x90] sm:$0xff]
    %v3933 = vld [vmem:[%s3778 + $0xa0] sm:$0xff]
    %v3934 = vld [vmem:[%s3778 + $0xb0] sm:$0xff]
    %v3935 = vld [vmem:[%s3778 + $0xc0] sm:$0xff]
    %v3936 = vld [vmem:[%s3778 + $0xd0] sm:$0xff]
    %v3937 = vld [vmem:[%s3778 + $0xe0] sm:$0xff]
    %v3938 = vld [vmem:[%s3778 + $0xf0] sm:$0xff]
    %v3939 = vld [vmem:[%s3778 + $0x100] sm:$0xff]
    %v3940 = vld [vmem:[%s3795 + $0x1] sm:$0xff]
    %v3941 = vld [vmem:[%s3795 + $0x11] sm:$0xff]
    %v3942 = vld [vmem:[%s3795 + $0x21] sm:$0xff]
    %v3943 = vld [vmem:[%s3795 + $0x31] sm:$0xff]
    %v3944 = vld [vmem:[%s3795 + $0x41] sm:$0xff]
    %v3945 = vld [vmem:[%s3795 + $0x51] sm:$0xff]
    %v3946 = vld [vmem:[%s3795 + $0x61] sm:$0xff]
    %v3947 = vld [vmem:[%s3795 + $0x71] sm:$0xff]
    %v3948 = vld [vmem:[%s3795 + $0x91] sm:$0xff]
    %v3949 = vld [vmem:[%s3795 + $0xa1] sm:$0xff]
    %v3950 = vld [vmem:[%s3795 + $0xb1] sm:$0xff]
    %v3951 = vld [vmem:[%s3795 + $0xc1] sm:$0xff]
    %v3952 = vld [vmem:[%s3795 + $0xd1] sm:$0xff]
    %v3953 = vld [vmem:[%s3795 + $0xe1] sm:$0xff]
    %v3954 = vld [vmem:[%s3795 + $0xf1] sm:$0xff]
    %v3955 = vld [vmem:[%s3795 + $0x101] sm:$0xff]
    %3972 = vrot.lane.b32.xlu0 %v3828, 8
    %v3973 = vpop.permute.xlu0 %3972
    %3974 = vrot.lane.b32.xlu0 %v3829, 8
    %v3975 = vpop.permute.xlu0 %3974
    %3976 = vrot.lane.b32.xlu0 %v3830, 8
    %v3977 = vpop.permute.xlu0 %3976
    %3978 = vrot.lane.b32.xlu0 %v3831, 8
    %v3979 = vpop.permute.xlu0 %3978
    %3980 = vrot.lane.b32.xlu0 %v3832, 8
    %v3981 = vpop.permute.xlu0 %3980
    %3982 = vrot.lane.b32.xlu0 %v3833, 8
    %v3983 = vpop.permute.xlu0 %3982
    %3984 = vrot.lane.b32.xlu0 %v3834, 8
    %v3985 = vpop.permute.xlu0 %3984
    %3986 = vrot.lane.b32.xlu0 %v3835, 8
    %v3987 = vpop.permute.xlu0 %3986
    %3988 = vrot.lane.b32.xlu0 %v3836, 8
    %v3989 = vpop.permute.xlu0 %3988
    %3990 = vrot.lane.b32.xlu0 %v3837, 8
    %v3991 = vpop.permute.xlu0 %3990
    %3992 = vrot.lane.b32.xlu0 %v3838, 8
    %v3993 = vpop.permute.xlu0 %3992
    %3994 = vrot.lane.b32.xlu0 %v3839, 8
    %v3995 = vpop.permute.xlu0 %3994
    %3996 = vrot.lane.b32.xlu0 %v3840, 8
    %v3997 = vpop.permute.xlu0 %3996
    %3998 = vrot.lane.b32.xlu0 %v3841, 8
    %v3999 = vpop.permute.xlu0 %3998
    %4000 = vrot.lane.b32.xlu0 %v3842, 8
    %v4001 = vpop.permute.xlu0 %4000
    %4002 = vrot.lane.b32.xlu0 %v3843, 8
    %v4003 = vpop.permute.xlu0 %4002
    %4036 = vrot.lane.b32.xlu0 %v3844, 16
    %v4037 = vpop.permute.xlu0 %4036
    %4038 = vrot.lane.b32.xlu0 %v3845, 16
    %v4039 = vpop.permute.xlu0 %4038
    %4040 = vrot.lane.b32.xlu0 %v3846, 16
    %v4041 = vpop.permute.xlu0 %4040
    %4042 = vrot.lane.b32.xlu0 %v3847, 16
    %v4043 = vpop.permute.xlu0 %4042
    %4044 = vrot.lane.b32.xlu0 %v3848, 16
    %v4045 = vpop.permute.xlu0 %4044
    %4046 = vrot.lane.b32.xlu0 %v3849, 16
    %v4047 = vpop.permute.xlu0 %4046
    %4048 = vrot.lane.b32.xlu0 %v3850, 16
    %v4049 = vpop.permute.xlu0 %4048
    %4050 = vrot.lane.b32.xlu0 %v3851, 16
    %v4051 = vpop.permute.xlu0 %4050
    %4052 = vrot.lane.b32.xlu0 %v3852, 16
    %v4053 = vpop.permute.xlu0 %4052
    %4054 = vrot.lane.b32.xlu0 %v3853, 16
    %v4055 = vpop.permute.xlu0 %4054
    %4056 = vrot.lane.b32.xlu0 %v3854, 16
    %v4057 = vpop.permute.xlu0 %4056
    %4058 = vrot.lane.b32.xlu0 %v3855, 16
    %v4059 = vpop.permute.xlu0 %4058
    %4060 = vrot.lane.b32.xlu0 %v3856, 16
    %v4061 = vpop.permute.xlu0 %4060
    %4062 = vrot.lane.b32.xlu0 %v3857, 16
    %v4063 = vpop.permute.xlu0 %4062
    %4064 = vrot.lane.b32.xlu0 %v3858, 16
    %v4065 = vpop.permute.xlu0 %4064
    %4066 = vrot.lane.b32.xlu0 %v3859, 16
    %v4067 = vpop.permute.xlu0 %4066
    %4100 = vrot.lane.b32.xlu0 %v3860, 24
    %v4101 = vpop.permute.xlu0 %4100
    %4102 = vrot.lane.b32.xlu0 %v3861, 24
    %v4103 = vpop.permute.xlu0 %4102
    %4104 = vrot.lane.b32.xlu0 %v3862, 24
    %v4105 = vpop.permute.xlu0 %4104
    %4106 = vrot.lane.b32.xlu0 %v3863, 24
    %v4107 = vpop.permute.xlu0 %4106
    %4108 = vrot.lane.b32.xlu0 %v3864, 24
    %v4109 = vpop.permute.xlu0 %4108
    %4110 = vrot.lane.b32.xlu0 %v3865, 24
    %v4111 = vpop.permute.xlu0 %4110
    %4112 = vrot.lane.b32.xlu0 %v3866, 24
    %v4113 = vpop.permute.xlu0 %4112
    %4114 = vrot.lane.b32.xlu0 %v3867, 24
    %v4115 = vpop.permute.xlu0 %4114
    %4116 = vrot.lane.b32.xlu0 %v3868, 24
    %v4117 = vpop.permute.xlu0 %4116
    %4118 = vrot.lane.b32.xlu0 %v3869, 24
    %v4119 = vpop.permute.xlu0 %4118
    %4120 = vrot.lane.b32.xlu0 %v3870, 24
    %v4121 = vpop.permute.xlu0 %4120
    %4122 = vrot.lane.b32.xlu0 %v3871, 24
    %v4123 = vpop.permute.xlu0 %4122
    %4124 = vrot.lane.b32.xlu0 %v3872, 24
    %v4125 = vpop.permute.xlu0 %4124
    %4126 = vrot.lane.b32.xlu0 %v3873, 24
    %v4127 = vpop.permute.xlu0 %4126
    %4128 = vrot.lane.b32.xlu0 %v3874, 24
    %v4129 = vpop.permute.xlu0 %4128
    %4130 = vrot.lane.b32.xlu0 %v3875, 24
    %v4131 = vpop.permute.xlu0 %4130
    %4164 = vrot.lane.b32.xlu0 %v3876, 32
    %v4165 = vpop.permute.xlu0 %4164
    %4166 = vrot.lane.b32.xlu0 %v3877, 32
    %v4167 = vpop.permute.xlu0 %4166
    %4168 = vrot.lane.b32.xlu0 %v3878, 32
    %v4169 = vpop.permute.xlu0 %4168
    %4170 = vrot.lane.b32.xlu0 %v3879, 32
    %v4171 = vpop.permute.xlu0 %4170
    %4172 = vrot.lane.b32.xlu0 %v3880, 32
    %v4173 = vpop.permute.xlu0 %4172
    %4174 = vrot.lane.b32.xlu0 %v3881, 32
    %v4175 = vpop.permute.xlu0 %4174
    %4176 = vrot.lane.b32.xlu0 %v3882, 32
    %v4177 = vpop.permute.xlu0 %4176
    %4178 = vrot.lane.b32.xlu0 %v3883, 32
    %v4179 = vpop.permute.xlu0 %4178
    %4180 = vrot.lane.b32.xlu0 %v3884, 32
    %v4181 = vpop.permute.xlu0 %4180
    %4182 = vrot.lane.b32.xlu0 %v3885, 32
    %v4183 = vpop.permute.xlu0 %4182
    %4184 = vrot.lane.b32.xlu0 %v3886, 32
    %v4185 = vpop.permute.xlu0 %4184
    %4186 = vrot.lane.b32.xlu0 %v3887, 32
    %v4187 = vpop.permute.xlu0 %4186
    %4188 = vrot.lane.b32.xlu0 %v3888, 32
    %v4189 = vpop.permute.xlu0 %4188
    %4190 = vrot.lane.b32.xlu0 %v3889, 32
    %v4191 = vpop.permute.xlu0 %4190
    %4192 = vrot.lane.b32.xlu0 %v3890, 32
    %v4193 = vpop.permute.xlu0 %4192
    %4194 = vrot.lane.b32.xlu0 %v3891, 32
    %v4195 = vpop.permute.xlu0 %4194
    %4228 = vrot.lane.b32.xlu0 %v3892, 40
    %v4229 = vpop.permute.xlu0 %4228
    %4230 = vrot.lane.b32.xlu0 %v3893, 40
    %v4231 = vpop.permute.xlu0 %4230
    %4232 = vrot.lane.b32.xlu0 %v3894, 40
    %v4233 = vpop.permute.xlu0 %4232
    %4234 = vrot.lane.b32.xlu0 %v3895, 40
    %v4235 = vpop.permute.xlu0 %4234
    %4236 = vrot.lane.b32.xlu0 %v3896, 40
    %v4237 = vpop.permute.xlu0 %4236
    %4238 = vrot.lane.b32.xlu0 %v3897, 40
    %v4239 = vpop.permute.xlu0 %4238
    %4240 = vrot.lane.b32.xlu0 %v3898, 40
    %v4241 = vpop.permute.xlu0 %4240
    %4242 = vrot.lane.b32.xlu0 %v3899, 40
    %v4243 = vpop.permute.xlu0 %4242
    %4244 = vrot.lane.b32.xlu0 %v3900, 40
    %v4245 = vpop.permute.xlu0 %4244
    %4246 = vrot.lane.b32.xlu0 %v3901, 40
    %v4247 = vpop.permute.xlu0 %4246
    %4248 = vrot.lane.b32.xlu0 %v3902, 40
    %v4249 = vpop.permute.xlu0 %4248
    %4250 = vrot.lane.b32.xlu0 %v3903, 40
    %v4251 = vpop.permute.xlu0 %4250
    %4252 = vrot.lane.b32.xlu0 %v3904, 40
    %v4253 = vpop.permute.xlu0 %4252
    %4254 = vrot.lane.b32.xlu0 %v3905, 40
    %v4255 = vpop.permute.xlu0 %4254
    %4256 = vrot.lane.b32.xlu0 %v3906, 40
    %v4257 = vpop.permute.xlu0 %4256
    %4258 = vrot.lane.b32.xlu0 %v3907, 40
    %v4259 = vpop.permute.xlu0 %4258
    %4292 = vrot.lane.b32.xlu0 %v3908, 48
    %v4293 = vpop.permute.xlu0 %4292
    %4294 = vrot.lane.b32.xlu0 %v3909, 48
    %v4295 = vpop.permute.xlu0 %4294
    %4296 = vrot.lane.b32.xlu0 %v3910, 48
    %v4297 = vpop.permute.xlu0 %4296
    %4298 = vrot.lane.b32.xlu0 %v3911, 48
    %v4299 = vpop.permute.xlu0 %4298
    %4300 = vrot.lane.b32.xlu0 %v3912, 48
    %v4301 = vpop.permute.xlu0 %4300
    %4302 = vrot.lane.b32.xlu0 %v3913, 48
    %v4303 = vpop.permute.xlu0 %4302
    %4304 = vrot.lane.b32.xlu0 %v3914, 48
    %v4305 = vpop.permute.xlu0 %4304
    %4306 = vrot.lane.b32.xlu0 %v3915, 48
    %v4307 = vpop.permute.xlu0 %4306
    %4308 = vrot.lane.b32.xlu0 %v3916, 48
    %v4309 = vpop.permute.xlu0 %4308
    %4310 = vrot.lane.b32.xlu0 %v3917, 48
    %v4311 = vpop.permute.xlu0 %4310
    %4312 = vrot.lane.b32.xlu0 %v3918, 48
    %v4313 = vpop.permute.xlu0 %4312
    %4314 = vrot.lane.b32.xlu0 %v3919, 48
    %v4315 = vpop.permute.xlu0 %4314
    %4316 = vrot.lane.b32.xlu0 %v3920, 48
    %v4317 = vpop.permute.xlu0 %4316
    %4318 = vrot.lane.b32.xlu0 %v3921, 48
    %v4319 = vpop.permute.xlu0 %4318
    %4320 = vrot.lane.b32.xlu0 %v3922, 48
    %v4321 = vpop.permute.xlu0 %4320
    %4322 = vrot.lane.b32.xlu0 %v3923, 48
    %v4323 = vpop.permute.xlu0 %4322
    %4356 = vrot.lane.b32.xlu0 %v3924, 56
    %v4357 = vpop.permute.xlu0 %4356
    %4358 = vrot.lane.b32.xlu0 %v3925, 56
    %v4359 = vpop.permute.xlu0 %4358
    %4360 = vrot.lane.b32.xlu0 %v3926, 56
    %v4361 = vpop.permute.xlu0 %4360
    %4362 = vrot.lane.b32.xlu0 %v3927, 56
    %v4363 = vpop.permute.xlu0 %4362
    %4364 = vrot.lane.b32.xlu0 %v3928, 56
    %v4365 = vpop.permute.xlu0 %4364
    %4366 = vrot.lane.b32.xlu0 %v3929, 56
    %v4367 = vpop.permute.xlu0 %4366
    %4368 = vrot.lane.b32.xlu0 %v3930, 56
    %v4369 = vpop.permute.xlu0 %4368
    %4370 = vrot.lane.b32.xlu0 %v3931, 56
    %v4371 = vpop.permute.xlu0 %4370
    %4372 = vrot.lane.b32.xlu0 %v3932, 56
    %v4373 = vpop.permute.xlu0 %4372
    %4374 = vrot.lane.b32.xlu0 %v3933, 56
    %v4375 = vpop.permute.xlu0 %4374
    %4376 = vrot.lane.b32.xlu0 %v3934, 56
    %v4377 = vpop.permute.xlu0 %4376
    %4378 = vrot.lane.b32.xlu0 %v3935, 56
    %v4379 = vpop.permute.xlu0 %4378
    %4380 = vrot.lane.b32.xlu0 %v3936, 56
    %v4381 = vpop.permute.xlu0 %4380
    %4382 = vrot.lane.b32.xlu0 %v3937, 56
    %v4383 = vpop.permute.xlu0 %4382
    %4384 = vrot.lane.b32.xlu0 %v3938, 56
    %v4385 = vpop.permute.xlu0 %4384
    %4386 = vrot.lane.b32.xlu0 %v3939, 56
    %v4387 = vpop.permute.xlu0 %4386
    %4420 = vrot.lane.b32.xlu0 %v3940, 64
    %v4421 = vpop.permute.xlu0 %4420
    %4422 = vrot.lane.b32.xlu0 %v3941, 64
    %v4423 = vpop.permute.xlu0 %4422
    %4424 = vrot.lane.b32.xlu0 %v3942, 64
    %v4425 = vpop.permute.xlu0 %4424
    %4426 = vrot.lane.b32.xlu0 %v3943, 64
    %v4427 = vpop.permute.xlu0 %4426
    %4428 = vrot.lane.b32.xlu0 %v3944, 64
    %v4429 = vpop.permute.xlu0 %4428
    %4430 = vrot.lane.b32.xlu0 %v3945, 64
    %v4431 = vpop.permute.xlu0 %4430
    %4432 = vrot.lane.b32.xlu0 %v3946, 64
    %v4433 = vpop.permute.xlu0 %4432
    %4434 = vrot.lane.b32.xlu0 %v3947, 64
    %v4435 = vpop.permute.xlu0 %4434
    %4436 = vrot.lane.b32.xlu0 %v3948, 64
    %v4437 = vpop.permute.xlu0 %4436
    %4438 = vrot.lane.b32.xlu0 %v3949, 64
    %v4439 = vpop.permute.xlu0 %4438
    %4440 = vrot.lane.b32.xlu0 %v3950, 64
    %v4441 = vpop.permute.xlu0 %4440
    %4442 = vrot.lane.b32.xlu0 %v3951, 64
    %v4443 = vpop.permute.xlu0 %4442
    %4444 = vrot.lane.b32.xlu0 %v3952, 64
    %v4445 = vpop.permute.xlu0 %4444
    %4446 = vrot.lane.b32.xlu0 %v3953, 64
    %v4447 = vpop.permute.xlu0 %4446
    %4448 = vrot.lane.b32.xlu0 %v3954, 64
    %v4449 = vpop.permute.xlu0 %4448
    %4450 = vrot.lane.b32.xlu0 %v3955, 64
    %v4451 = vpop.permute.xlu0 %4450
    %v4468 = vsel %vm46, %v3812, %v3973
    %v4469 = vsel %vm46, %v3813, %v3975
    %v4470 = vsel %vm46, %v3814, %v3977
    %v4471 = vsel %vm46, %v3815, %v3979
    %v4472 = vsel %vm46, %v3816, %v3981
    %v4473 = vsel %vm46, %v3817, %v3983
    %v4474 = vsel %vm46, %v3818, %v3985
    %v4475 = vsel %vm46, %v3819, %v3987
    %v4476 = vsel %vm46, %v3820, %v3989
    %v4477 = vsel %vm46, %v3821, %v3991
    %v4478 = vsel %vm46, %v3822, %v3993
    %v4479 = vsel %vm46, %v3823, %v3995
    %v4480 = vsel %vm46, %v3824, %v3997
    %v4481 = vsel %vm46, %v3825, %v3999
    %v4482 = vsel %vm46, %v3826, %v4001
    %v4483 = vsel %vm46, %v3827, %v4003
    %v4484 = vsel %vm852, %v4468, %v4037
    %v4485 = vsel %vm852, %v4469, %v4039
    %v4486 = vsel %vm852, %v4470, %v4041
    %v4487 = vsel %vm852, %v4471, %v4043
    %v4488 = vsel %vm852, %v4472, %v4045
    %v4489 = vsel %vm852, %v4473, %v4047
    %v4490 = vsel %vm852, %v4474, %v4049
    %v4491 = vsel %vm852, %v4475, %v4051
    %v4492 = vsel %vm852, %v4476, %v4053
    %v4493 = vsel %vm852, %v4477, %v4055
    %v4494 = vsel %vm852, %v4478, %v4057
    %v4495 = vsel %vm852, %v4479, %v4059
    %v4496 = vsel %vm852, %v4480, %v4061
    %v4497 = vsel %vm852, %v4481, %v4063
    %v4498 = vsel %vm852, %v4482, %v4065
    %v4499 = vsel %vm852, %v4483, %v4067
    %v4500 = vsel %vm886, %v4484, %v4101
    %v4501 = vsel %vm886, %v4485, %v4103
    %v4502 = vsel %vm886, %v4486, %v4105
    %v4503 = vsel %vm886, %v4487, %v4107
    %v4504 = vsel %vm886, %v4488, %v4109
    %v4505 = vsel %vm886, %v4489, %v4111
    %v4506 = vsel %vm886, %v4490, %v4113
    %v4507 = vsel %vm886, %v4491, %v4115
    %v4508 = vsel %vm886, %v4492, %v4117
    %v4509 = vsel %vm886, %v4493, %v4119
    %v4510 = vsel %vm886, %v4494, %v4121
    %v4511 = vsel %vm886, %v4495, %v4123
    %v4512 = vsel %vm886, %v4496, %v4125
    %v4513 = vsel %vm886, %v4497, %v4127
    %v4514 = vsel %vm886, %v4498, %v4129
    %v4515 = vsel %vm886, %v4499, %v4131
    %v4516 = vsel %vm920, %v4500, %v4165
    %v4517 = vsel %vm920, %v4501, %v4167
    %v4518 = vsel %vm920, %v4502, %v4169
    %v4519 = vsel %vm920, %v4503, %v4171
    %v4520 = vsel %vm920, %v4504, %v4173
    %v4521 = vsel %vm920, %v4505, %v4175
    %v4522 = vsel %vm920, %v4506, %v4177
    %v4523 = vsel %vm920, %v4507, %v4179
    %v4524 = vsel %vm920, %v4508, %v4181
    %v4525 = vsel %vm920, %v4509, %v4183
    %v4526 = vsel %vm920, %v4510, %v4185
    %v4527 = vsel %vm920, %v4511, %v4187
    %v4528 = vsel %vm920, %v4512, %v4189
    %v4529 = vsel %vm920, %v4513, %v4191
    %v4530 = vsel %vm920, %v4514, %v4193
    %v4531 = vsel %vm920, %v4515, %v4195
    %vm4532 = vcmask 326656
    %v4533 = vsel %vm4532, %v4516, %v4229
    %v4534 = vsel %vm4532, %v4517, %v4231
    %v4535 = vsel %vm4532, %v4518, %v4233
    %v4536 = vsel %vm4532, %v4519, %v4235
    %v4537 = vsel %vm4532, %v4520, %v4237
    %v4538 = vsel %vm4532, %v4521, %v4239
    %v4539 = vsel %vm4532, %v4522, %v4241
    %v4540 = vsel %vm4532, %v4523, %v4243
    %v4541 = vsel %vm4532, %v4524, %v4245
    %v4542 = vsel %vm4532, %v4525, %v4247
    %v4543 = vsel %vm4532, %v4526, %v4249
    %v4544 = vsel %vm4532, %v4527, %v4251
    %v4545 = vsel %vm4532, %v4528, %v4253
    %v4546 = vsel %vm4532, %v4529, %v4255
    %v4547 = vsel %vm4532, %v4530, %v4257
    %v4548 = vsel %vm4532, %v4531, %v4259
    %vm4549 = vcmask 392192
    %v4550 = vsel %vm4549, %v4533, %v4293
    %v4551 = vsel %vm4549, %v4534, %v4295
    %v4552 = vsel %vm4549, %v4535, %v4297
    %v4553 = vsel %vm4549, %v4536, %v4299
    %v4554 = vsel %vm4549, %v4537, %v4301
    %v4555 = vsel %vm4549, %v4538, %v4303
    %v4556 = vsel %vm4549, %v4539, %v4305
    %v4557 = vsel %vm4549, %v4540, %v4307
    %v4558 = vsel %vm4549, %v4541, %v4309
    %v4559 = vsel %vm4549, %v4542, %v4311
    %v4560 = vsel %vm4549, %v4543, %v4313
    %v4561 = vsel %vm4549, %v4544, %v4315
    %v4562 = vsel %vm4549, %v4545, %v4317
    %v4563 = vsel %vm4549, %v4546, %v4319
    %v4564 = vsel %vm4549, %v4547, %v4321
    %v4565 = vsel %vm4549, %v4548, %v4323
    %vm4566 = vcmask 457728
    %v4567 = vsel %vm4566, %v4550, %v4357
    %v4568 = vsel %vm4566, %v4551, %v4359
    %v4569 = vsel %vm4566, %v4552, %v4361
    %v4570 = vsel %vm4566, %v4553, %v4363
    %v4571 = vsel %vm4566, %v4554, %v4365
    %v4572 = vsel %vm4566, %v4555, %v4367
    %v4573 = vsel %vm4566, %v4556, %v4369
    %v4574 = vsel %vm4566, %v4557, %v4371
    %v4575 = vsel %vm4566, %v4558, %v4373
    %v4576 = vsel %vm4566, %v4559, %v4375
    %v4577 = vsel %vm4566, %v4560, %v4377
    %v4578 = vsel %vm4566, %v4561, %v4379
    %v4579 = vsel %vm4566, %v4562, %v4381
    %v4580 = vsel %vm4566, %v4563, %v4383
    %v4581 = vsel %vm4566, %v4564, %v4385
    %v4582 = vsel %vm4566, %v4565, %v4387
    %vm4583 = vcmask 523264
    %v4584 = vsel %vm4583, %v4567, %v4421
    %v4585 = vsel %vm4583, %v4568, %v4423
    %v4586 = vsel %vm4583, %v4569, %v4425
    %v4587 = vsel %vm4583, %v4570, %v4427
    %v4588 = vsel %vm4583, %v4571, %v4429
    %v4589 = vsel %vm4583, %v4572, %v4431
    %v4590 = vsel %vm4583, %v4573, %v4433
    %v4591 = vsel %vm4583, %v4574, %v4435
    %v4592 = vsel %vm4583, %v4575, %v4437
    %v4593 = vsel %vm4583, %v4576, %v4439
    %v4594 = vsel %vm4583, %v4577, %v4441
    %v4595 = vsel %vm4583, %v4578, %v4443
    %v4596 = vsel %vm4583, %v4579, %v4445
    %v4597 = vsel %vm4583, %v4580, %v4447
    %v4598 = vsel %vm4583, %v4581, %v4449
    %v4599 = vsel %vm4583, %v4582, %v4451
    %v4600 = vpack.c.bf16 %v4585, %v4584
    %v4601 = vpack.c.bf16 %v4587, %v4586
    %v4602 = vpack.c.bf16 %v4589, %v4588
    %v4603 = vpack.c.bf16 %v4591, %v4590
    %v4604 = vpack.c.bf16 %v4593, %v4592
    %v4605 = vpack.c.bf16 %v4595, %v4594
    %v4606 = vpack.c.bf16 %v4597, %v4596
    %v4607 = vpack.c.bf16 %v4599, %v4598
    %v4608 = vld [vmem:[%s4] sm:$0xf]
    %v4609 = vld [vmem:[%s4 + $0x4] sm:$0xf]
    %v4610 = vld [vmem:[%s4 + $0x8] sm:$0xf]
    %v4611 = vld [vmem:[%s4 + $0xc] sm:$0xf]
    %v4612 = vld [vmem:[%s4 + $0x10] sm:$0xf]
    %v4613 = vld [vmem:[%s4 + $0x14] sm:$0xf]
    %v4614 = vld [vmem:[%s4 + $0x18] sm:$0xf]
    %v4615 = vld [vmem:[%s4 + $0x1c] sm:$0xf]
    %v4616 = vld [vmem:[%s4 + $0x20] sm:$0xf]
    %v4626 = vunpack.c.l.b16 %v4608
    %v4627 = vunpack.c.l.b16 %v4609
    %v4628 = vunpack.c.l.b16 %v4610
    %v4629 = vunpack.c.l.b16 %v4611
    %v4630 = vunpack.c.l.b16 %v4612
    %v4631 = vunpack.c.l.b16 %v4613
    %v4632 = vunpack.c.l.b16 %v4614
    %v4633 = vunpack.c.l.b16 %v4615
    %v4634 = vunpack.c.l.b16 %v4616
    %v4635 = vpack.c.b16 %v4627, %v4626
    %v4636 = vpack.c.b16 %v4629, %v4628
    %v4637 = vpack.c.b16 %v4631, %v4630
    %v4638 = vpack.c.b16 %v4633, %v4632
    %v4639 = vpack.c.b16 %v4634, %v4634
    %vm4644 = vcmask 588800
    %v4646 = vsel %vm4644, %v4600, 0
    %v4649 = vsel %vm4644, %v4601, 0
    %v4652 = vsel %vm4644, %v4602, 0
    %v4655 = vsel %vm4644, %v4603, 0
    %v4658 = vsel %vm4644, %v4604, 0
    %v4661 = vsel %vm4644, %v4605, 0
    %v4664 = vsel %vm4644, %v4606, 0
    %v4667 = vsel %vm4644, %v4607, 0
    %vm4669 = vcmask 1043456
    %v4671 = vsel %vm4669, %v4639, 0
    %4673 = vmatprep.subr.bf16.mxu0 0
    %4674 = vmatpush1.bf16.msra.mxu0 0
    %4675 = vmatprep.subr.bf16.mxu0 0
    %4676 = vmatpush1.bf16.msra.mxu0 0
    %4677 = vmatprep.subr.bf16.mxu0 0
    %4678 = vmatpush1.bf16.msra.mxu0 0
    %4679 = vmatprep.subr.bf16.mxu0 0
    %4680 = vmatpush1.bf16.msra.mxu0 %v4671
    %4681 = vmatprep.subr.bf16.mxu0 0
    %4682 = vmatpush1.bf16.msra.mxu0 %v4638
    %4683 = vmatprep.subr.bf16.mxu0 0
    %4684 = vmatpush1.bf16.msra.mxu0 %v4637
    %4685 = vmatprep.subr.bf16.mxu0 0
    %4686 = vmatpush1.bf16.msra.mxu0 %v4636
    %4687 = vmatprep.subr.bf16.mxu0 0
    %4688 = vmatpush1.bf16.msra.mxu0 %v4635
    %4689 = vmatprep.subr.bf16.mxu0 0
    %4690 = vmatpush2.bf16.msra.mxu0 0
    %4691 = vmatprep.subr.bf16.mxu0 0
    %4692 = vmatpush2.bf16.msra.mxu0 0
    %4693 = vmatprep.subr.bf16.mxu0 0
    %4694 = vmatpush2.bf16.msra.mxu0 0
    %4695 = vmatprep.subr.bf16.mxu0 0
    %4696 = vmatpush2.bf16.msra.mxu0 0
    %4697 = vmatprep.subr.bf16.mxu0 0
    %4698 = vmatpush2.bf16.msra.mxu0 0
    %4699 = vmatprep.subr.bf16.mxu0 0
    %4700 = vmatpush2.bf16.msra.mxu0 0
    %4701 = vmatprep.subr.bf16.mxu0 0
    %4702 = vmatpush2.bf16.msra.mxu0 0
    %4703 = vmatprep.subr.bf16.mxu0 0
    %4704 = vmatpush2.bf16.msra.mxu0 0
    %4705 = vmatprep.mubr.bf16.mxu0 0
    %4706 = vmatmul.mubr.bf16.gmra.mxu0 %v4646
    %v4707 = vpop.f32.mrf.mxu0
    %v4708 = vadd.f32 0.0, %v4707
    %v4709 = vpop.f32.mrf.mxu0
    %v4710 = vpop.f32.mrf.mxu0
    %v4711 = vadd.f32 0.0, %v4710
    %v4712 = vpop.f32.mrf.mxu0
    %4713 = vmatprep.mubr.bf16.mxu0 0
    %4714 = vmatmul.mubr.bf16.gmra.mxu0 %v4649
    %v4715 = vpop.f32.mrf.mxu0
    %v4716 = vadd.f32 0.0, %v4715
    %v4717 = vpop.f32.mrf.mxu0
    %v4718 = vpop.f32.mrf.mxu0
    %v4719 = vadd.f32 0.0, %v4718
    %v4720 = vpop.f32.mrf.mxu0
    %4721 = vmatprep.mubr.bf16.mxu0 0
    %4722 = vmatmul.mubr.bf16.gmra.mxu0 %v4652
    %v4723 = vpop.f32.mrf.mxu0
    %v4724 = vadd.f32 0.0, %v4723
    %v4725 = vpop.f32.mrf.mxu0
    %v4726 = vpop.f32.mrf.mxu0
    %v4727 = vadd.f32 0.0, %v4726
    %v4728 = vpop.f32.mrf.mxu0
    %4729 = vmatprep.mubr.bf16.mxu0 0
    %4730 = vmatmul.mubr.bf16.gmra.mxu0 %v4655
    %v4731 = vpop.f32.mrf.mxu0
    %v4732 = vadd.f32 0.0, %v4731
    %v4733 = vpop.f32.mrf.mxu0
    %v4734 = vpop.f32.mrf.mxu0
    %v4735 = vadd.f32 0.0, %v4734
    %v4736 = vpop.f32.mrf.mxu0
    %4737 = vmatprep.mubr.bf16.mxu0 0
    %4738 = vmatmul.mubr.bf16.gmra.mxu0 %v4658
    %v4739 = vpop.f32.mrf.mxu0
    %v4740 = vadd.f32 0.0, %v4739
    %v4741 = vpop.f32.mrf.mxu0
    %v4742 = vpop.f32.mrf.mxu0
    %v4743 = vadd.f32 0.0, %v4742
    %v4744 = vpop.f32.mrf.mxu0
    %4745 = vmatprep.mubr.bf16.mxu0 0
    %4746 = vmatmul.mubr.bf16.gmra.mxu0 %v4661
    %v4747 = vpop.f32.mrf.mxu0
    %v4748 = vadd.f32 0.0, %v4747
    %v4749 = vpop.f32.mrf.mxu0
    %v4750 = vpop.f32.mrf.mxu0
    %v4751 = vadd.f32 0.0, %v4750
    %v4752 = vpop.f32.mrf.mxu0
    %4753 = vmatprep.mubr.bf16.mxu0 0
    %4754 = vmatmul.mubr.bf16.gmra.mxu0 %v4664
    %v4755 = vpop.f32.mrf.mxu0
    %v4756 = vadd.f32 0.0, %v4755
    %v4757 = vpop.f32.mrf.mxu0
    %v4758 = vpop.f32.mrf.mxu0
    %v4759 = vadd.f32 0.0, %v4758
    %v4760 = vpop.f32.mrf.mxu0
    %4761 = vmatprep.mubr.bf16.mxu0 0
    %4762 = vmatmul.mubr.bf16.gmra.mxu0 %v4667
    %v4763 = vpop.f32.mrf.mxu0
    %v4764 = vadd.f32 0.0, %v4763
    %v4765 = vpop.f32.mrf.mxu0
    %v4766 = vpop.f32.mrf.mxu0
    %v4767 = vadd.f32 0.0, %v4766
    %v4768 = vpop.f32.mrf.mxu0
    %4769 = vdwg.mxu0
    %v4770 = vld [vmem:[%s5] sm:$0x1]
    %v4771 = vld [vmem:[%s6] sm:$0x1]
    %v4772 = vsel %vm852, %v4708, 0.0
    %v4773 = vsel %vm852, %v4711, 0.0
    %v4774 = vadd.f32 %v4772, %v4773
    %v4775 = vsel %vm852, %v4716, 0.0
    %v4776 = vadd.f32 %v4774, %v4775
    %v4777 = vsel %vm852, %v4719, 0.0
    %v4778 = vadd.f32 %v4776, %v4777
    %v4779 = vsel %vm852, %v4724, 0.0
    %v4780 = vadd.f32 %v4778, %v4779
    %v4781 = vsel %vm852, %v4727, 0.0
    %v4782 = vadd.f32 %v4780, %v4781
    %v4783 = vsel %vm852, %v4732, 0.0
    %v4784 = vadd.f32 %v4782, %v4783
    %v4785 = vsel %vm852, %v4735, 0.0
    %v4786 = vadd.f32 %v4784, %v4785
    %v4787 = vsel %vm852, %v4740, 0.0
    %v4788 = vadd.f32 %v4786, %v4787
    %v4789 = vsel %vm852, %v4743, 0.0
    %v4790 = vadd.f32 %v4788, %v4789
    %v4791 = vsel %vm852, %v4748, 0.0
    %v4792 = vadd.f32 %v4790, %v4791
    %v4793 = vsel %vm852, %v4751, 0.0
    %v4794 = vadd.f32 %v4792, %v4793
    %v4795 = vsel %vm852, %v4756, 0.0
    %v4796 = vadd.f32 %v4794, %v4795
    %v4797 = vsel %vm852, %v4759, 0.0
    %v4798 = vadd.f32 %v4796, %v4797
    %v4799 = vsel %vm852, %v4764, 0.0
    %v4800 = vadd.f32 %v4798, %v4799
    %v4801 = vsel %vm852, %v4767, 0.0
    %v4802 = vadd.f32 %v4800, %v4801
    %v4803 = vrot.slane %v4802, 4
    %v4804 = vadd.f32 %v4802, %v4803
    %v4805 = vrot.slane %v4804, 2
    %v4806 = vadd.f32 %v4804, %v4805
    %v4807 = vrot.slane %v4806, 1
    %v4808 = vadd.f32 %v4806, %v4807
    %v4809 = vmul.f32 %v4808, 0.0078125
    %v4810 = vsub.f32 %v4708, %v4809
    %v4811 = vsub.f32 %v4711, %v4809
    %v4812 = vsub.f32 %v4716, %v4809
    %v4813 = vsub.f32 %v4719, %v4809
    %v4814 = vsub.f32 %v4724, %v4809
    %v4815 = vsub.f32 %v4727, %v4809
    %v4816 = vsub.f32 %v4732, %v4809
    %v4817 = vsub.f32 %v4735, %v4809
    %v4818 = vsub.f32 %v4740, %v4809
    %v4819 = vsub.f32 %v4743, %v4809
    %v4820 = vsub.f32 %v4748, %v4809
    %v4821 = vsub.f32 %v4751, %v4809
    %v4822 = vsub.f32 %v4756, %v4809
    %v4823 = vsub.f32 %v4759, %v4809
    %v4824 = vsub.f32 %v4764, %v4809
    %v4825 = vsub.f32 %v4767, %v4809
    %v4826 = vmul.f32 %v4810, %v4810
    %v4827 = vmul.f32 %v4811, %v4811
    %v4828 = vmul.f32 %v4812, %v4812
    %v4829 = vmul.f32 %v4813, %v4813
    %v4830 = vmul.f32 %v4814, %v4814
    %v4831 = vmul.f32 %v4815, %v4815
    %v4832 = vmul.f32 %v4816, %v4816
    %v4833 = vmul.f32 %v4817, %v4817
    %v4834 = vmul.f32 %v4818, %v4818
    %v4835 = vmul.f32 %v4819, %v4819
    %v4836 = vmul.f32 %v4820, %v4820
    %v4837 = vmul.f32 %v4821, %v4821
    %v4838 = vmul.f32 %v4822, %v4822
    %v4839 = vmul.f32 %v4823, %v4823
    %v4840 = vmul.f32 %v4824, %v4824
    %v4841 = vmul.f32 %v4825, %v4825
    %v4842 = vsel %vm852, %v4826, 0.0
    %v4843 = vsel %vm852, %v4827, 0.0
    %v4844 = vadd.f32 %v4842, %v4843
    %v4845 = vsel %vm852, %v4828, 0.0
    %v4846 = vadd.f32 %v4844, %v4845
    %v4847 = vsel %vm852, %v4829, 0.0
    %v4848 = vadd.f32 %v4846, %v4847
    %v4849 = vsel %vm852, %v4830, 0.0
    %v4850 = vadd.f32 %v4848, %v4849
    %v4851 = vsel %vm852, %v4831, 0.0
    %v4852 = vadd.f32 %v4850, %v4851
    %v4853 = vsel %vm852, %v4832, 0.0
    %v4854 = vadd.f32 %v4852, %v4853
    %v4855 = vsel %vm852, %v4833, 0.0
    %v4856 = vadd.f32 %v4854, %v4855
    %v4857 = vsel %vm852, %v4834, 0.0
    %v4858 = vadd.f32 %v4856, %v4857
    %v4859 = vsel %vm852, %v4835, 0.0
    %v4860 = vadd.f32 %v4858, %v4859
    %v4861 = vsel %vm852, %v4836, 0.0
    %v4862 = vadd.f32 %v4860, %v4861
    %v4863 = vsel %vm852, %v4837, 0.0
    %v4864 = vadd.f32 %v4862, %v4863
    %v4865 = vsel %vm852, %v4838, 0.0
    %v4866 = vadd.f32 %v4864, %v4865
    %v4867 = vsel %vm852, %v4839, 0.0
    %v4868 = vadd.f32 %v4866, %v4867
    %v4869 = vsel %vm852, %v4840, 0.0
    %v4870 = vadd.f32 %v4868, %v4869
    %v4871 = vsel %vm852, %v4841, 0.0
    %v4872 = vadd.f32 %v4870, %v4871
    %v4873 = vrot.slane %v4872, 4
    %v4874 = vadd.f32 %v4872, %v4873
    %v4875 = vrot.slane %v4874, 2
    %v4876 = vadd.f32 %v4874, %v4875
    %v4877 = vrot.slane %v4876, 1
    %v4878 = vadd.f32 %v4876, %v4877
    %v4879 = vmul.f32 %v4878, 0.0078125
    %v4880 = vadd.f32 %v4879, 1e-05
    %v4881 = vrsqrt.pop %v4880
    %v4882 = vmul.f32 %v4770, %v4881
    %v4884 = vlaneseq
    %v4885 = vshrl.u32 %v4884, 7
    %v4886 = vsub.s32 0, %v4885
    %v4887 = vrot.slane %v4882, %v4886
    %v4889 = vmul.f32 %v4810, %v4887
    %v4890 = vmul.f32 %v4811, %v4887
    %v4891 = vmul.f32 %v4812, %v4887
    %v4892 = vmul.f32 %v4813, %v4887
    %v4893 = vmul.f32 %v4814, %v4887
    %v4894 = vmul.f32 %v4815, %v4887
    %v4895 = vmul.f32 %v4816, %v4887
    %v4896 = vmul.f32 %v4817, %v4887
    %v4897 = vmul.f32 %v4818, %v4887
    %v4898 = vmul.f32 %v4819, %v4887
    %v4899 = vmul.f32 %v4820, %v4887
    %v4900 = vmul.f32 %v4821, %v4887
    %v4901 = vmul.f32 %v4822, %v4887
    %v4902 = vmul.f32 %v4823, %v4887
    %v4903 = vmul.f32 %v4824, %v4887
    %v4904 = vmul.f32 %v4825, %v4887
    %v4906 = vlaneseq
    %v4907 = vshrl.u32 %v4906, 7
    %v4908 = vsub.s32 0, %v4907
    %v4909 = vrot.slane %v4771, %v4908
    %v4911 = vadd.f32 %v4889, %v4909
    %v4912 = vadd.f32 %v4890, %v4909
    %v4913 = vadd.f32 %v4891, %v4909
    %v4914 = vadd.f32 %v4892, %v4909
    %v4915 = vadd.f32 %v4893, %v4909
    %v4916 = vadd.f32 %v4894, %v4909
    %v4917 = vadd.f32 %v4895, %v4909
    %v4918 = vadd.f32 %v4896, %v4909
    %v4919 = vadd.f32 %v4897, %v4909
    %v4920 = vadd.f32 %v4898, %v4909
    %v4921 = vadd.f32 %v4899, %v4909
    %v4922 = vadd.f32 %v4900, %v4909
    %v4923 = vadd.f32 %v4901, %v4909
    %v4924 = vadd.f32 %v4902, %v4909
    %v4925 = vadd.f32 %v4903, %v4909
    %v4926 = vadd.f32 %v4904, %v4909
    %v4929 = vrot.slane %v4919, 7
    %vm4930 = vcmask 1041409
    %v4931 = vsel %vm4930, %v4929, %v4911
    %v4933 = vrot.slane %v4911, 1
    %v4934 = vsel %vm4930, %v4919, %v4933
    %4935 = vrot.lane.b32.xlu0 %v4934, 16
    %v4936 = vpop.permute.xlu0 %4935
    %v4938 = vrot.slane %v4911, 2
    %v4939 = vrot.slane %v4919, 1
    %v4940 = vsel %vm4930, %v4939, %v4938
    %4941 = vrot.lane.b32.xlu0 %v4940, 32
    %v4942 = vpop.permute.xlu0 %4941
    %v4944 = vrot.slane %v4911, 3
    %v4945 = vrot.slane %v4919, 2
    %v4946 = vsel %vm4930, %v4945, %v4944
    %4947 = vrot.lane.b32.xlu0 %v4946, 48
    %v4948 = vpop.permute.xlu0 %4947
    %v4950 = vrot.slane %v4911, 4
    %v4951 = vrot.slane %v4919, 3
    %v4952 = vsel %vm4930, %v4951, %v4950
    %4953 = vrot.lane.b32.xlu0 %v4952, 64
    %v4954 = vpop.permute.xlu0 %4953
    %v4956 = vrot.slane %v4911, 5
    %v4957 = vrot.slane %v4919, 4
    %v4958 = vsel %vm4930, %v4957, %v4956
    %4959 = vrot.lane.b32.xlu0 %v4958, 80
    %v4960 = vpop.permute.xlu0 %4959
    %v4962 = vrot.slane %v4911, 6
    %v4963 = vrot.slane %v4919, 5
    %v4964 = vsel %vm4930, %v4963, %v4962
    %4965 = vrot.lane.b32.xlu0 %v4964, 96
    %v4966 = vpop.permute.xlu0 %4965
    %v4968 = vrot.slane %v4911, 7
    %v4969 = vrot.slane %v4919, 6
    %v4970 = vsel %vm4930, %v4969, %v4968
    %4971 = vrot.lane.b32.xlu0 %v4970, 112
    %v4972 = vpop.permute.xlu0 %4971
    %v4976 = vrot.slane %v4920, 7
    %v4977 = vsel %vm4930, %v4976, %v4912
    %v4979 = vrot.slane %v4912, 1
    %v4980 = vsel %vm4930, %v4920, %v4979
    %4981 = vrot.lane.b32.xlu0 %v4980, 16
    %v4982 = vpop.permute.xlu0 %4981
    %v4984 = vrot.slane %v4912, 2
    %v4985 = vrot.slane %v4920, 1
    %v4986 = vsel %vm4930, %v4985, %v4984
    %4987 = vrot.lane.b32.xlu0 %v4986, 32
    %v4988 = vpop.permute.xlu0 %4987
    %v4990 = vrot.slane %v4912, 3
    %v4991 = vrot.slane %v4920, 2
    %v4992 = vsel %vm4930, %v4991, %v4990
    %4993 = vrot.lane.b32.xlu0 %v4992, 48
    %v4994 = vpop.permute.xlu0 %4993
    %v4996 = vrot.slane %v4912, 4
    %v4997 = vrot.slane %v4920, 3
    %v4998 = vsel %vm4930, %v4997, %v4996
    %4999 = vrot.lane.b32.xlu0 %v4998, 64
    %v5000 = vpop.permute.xlu0 %4999
    %v5002 = vrot.slane %v4912, 5
    %v5003 = vrot.slane %v4920, 4
    %v5004 = vsel %vm4930, %v5003, %v5002
    %5005 = vrot.lane.b32.xlu0 %v5004, 80
    %v5006 = vpop.permute.xlu0 %5005
    %v5008 = vrot.slane %v4912, 6
    %v5009 = vrot.slane %v4920, 5
    %v5010 = vsel %vm4930, %v5009, %v5008
    %5011 = vrot.lane.b32.xlu0 %v5010, 96
    %v5012 = vpop.permute.xlu0 %5011
    %v5014 = vrot.slane %v4912, 7
    %v5015 = vrot.slane %v4920, 6
    %v5016 = vsel %vm4930, %v5015, %v5014
    %5017 = vrot.lane.b32.xlu0 %v5016, 112
    %v5018 = vpop.permute.xlu0 %5017
    %v5020 = vsel %vm852, %v4931, %v4936
    %v5021 = vsel %vm920, %v5020, %v4942
    %v5022 = vsel %vm4549, %v5021, %v4948
    %v5023 = vsel %vm4583, %v5022, %v4954
    %vm5024 = vcmask 654336
    %v5025 = vsel %vm5024, %v5023, %v4960
    %vm5026 = vcmask 785408
    %v5027 = vsel %vm5026, %v5025, %v4966
    %vm5028 = vcmask 916480
    %v5029 = vsel %vm5028, %v5027, %v4972
    %v5030 = vsel %vm852, %v4977, %v4982
    %v5031 = vsel %vm920, %v5030, %v4988
    %v5032 = vsel %vm4549, %v5031, %v4994
    %v5033 = vsel %vm4583, %v5032, %v5000
    %v5034 = vsel %vm5024, %v5033, %v5006
    %v5035 = vsel %vm5026, %v5034, %v5012
    %v5036 = vsel %vm5028, %v5035, %v5018
    %v5039 = vrot.slane %v4921, 7
    %v5040 = vsel %vm4930, %v5039, %v4913
    %v5042 = vrot.slane %v4913, 1
    %v5043 = vsel %vm4930, %v4921, %v5042
    %5044 = vrot.lane.b32.xlu0 %v5043, 16
    %v5045 = vpop.permute.xlu0 %5044
    %v5047 = vrot.slane %v4913, 2
    %v5048 = vrot.slane %v4921, 1
    %v5049 = vsel %vm4930, %v5048, %v5047
    %5050 = vrot.lane.b32.xlu0 %v5049, 32
    %v5051 = vpop.permute.xlu0 %5050
    %v5053 = vrot.slane %v4913, 3
    %v5054 = vrot.slane %v4921, 2
    %v5055 = vsel %vm4930, %v5054, %v5053
    %5056 = vrot.lane.b32.xlu0 %v5055, 48
    %v5057 = vpop.permute.xlu0 %5056
    %v5059 = vrot.slane %v4913, 4
    %v5060 = vrot.slane %v4921, 3
    %v5061 = vsel %vm4930, %v5060, %v5059
    %5062 = vrot.lane.b32.xlu0 %v5061, 64
    %v5063 = vpop.permute.xlu0 %5062
    %v5065 = vrot.slane %v4913, 5
    %v5066 = vrot.slane %v4921, 4
    %v5067 = vsel %vm4930, %v5066, %v5065
    %5068 = vrot.lane.b32.xlu0 %v5067, 80
    %v5069 = vpop.permute.xlu0 %5068
    %v5071 = vrot.slane %v4913, 6
    %v5072 = vrot.slane %v4921, 5
    %v5073 = vsel %vm4930, %v5072, %v5071
    %5074 = vrot.lane.b32.xlu0 %v5073, 96
    %v5075 = vpop.permute.xlu0 %5074
    %v5077 = vrot.slane %v4913, 7
    %v5078 = vrot.slane %v4921, 6
    %v5079 = vsel %vm4930, %v5078, %v5077
    %5080 = vrot.lane.b32.xlu0 %v5079, 112
    %v5081 = vpop.permute.xlu0 %5080
    %v5085 = vrot.slane %v4922, 7
    %v5086 = vsel %vm4930, %v5085, %v4914
    %v5088 = vrot.slane %v4914, 1
    %v5089 = vsel %vm4930, %v4922, %v5088
    %5090 = vrot.lane.b32.xlu0 %v5089, 16
    %v5091 = vpop.permute.xlu0 %5090
    %v5093 = vrot.slane %v4914, 2
    %v5094 = vrot.slane %v4922, 1
    %v5095 = vsel %vm4930, %v5094, %v5093
    %5096 = vrot.lane.b32.xlu0 %v5095, 32
    %v5097 = vpop.permute.xlu0 %5096
    %v5099 = vrot.slane %v4914, 3
    %v5100 = vrot.slane %v4922, 2
    %v5101 = vsel %vm4930, %v5100, %v5099
    %5102 = vrot.lane.b32.xlu0 %v5101, 48
    %v5103 = vpop.permute.xlu0 %5102
    %v5105 = vrot.slane %v4914, 4
    %v5106 = vrot.slane %v4922, 3
    %v5107 = vsel %vm4930, %v5106, %v5105
    %5108 = vrot.lane.b32.xlu0 %v5107, 64
    %v5109 = vpop.permute.xlu0 %5108
    %v5111 = vrot.slane %v4914, 5
    %v5112 = vrot.slane %v4922, 4
    %v5113 = vsel %vm4930, %v5112, %v5111
    %5114 = vrot.lane.b32.xlu0 %v5113, 80
    %v5115 = vpop.permute.xlu0 %5114
    %v5117 = vrot.slane %v4914, 6
    %v5118 = vrot.slane %v4922, 5
    %v5119 = vsel %vm4930, %v5118, %v5117
    %5120 = vrot.lane.b32.xlu0 %v5119, 96
    %v5121 = vpop.permute.xlu0 %5120
    %v5123 = vrot.slane %v4914, 7
    %v5124 = vrot.slane %v4922, 6
    %v5125 = vsel %vm4930, %v5124, %v5123
    %5126 = vrot.lane.b32.xlu0 %v5125, 112
    %v5127 = vpop.permute.xlu0 %5126
    %v5129 = vsel %vm852, %v5040, %v5045
    %v5130 = vsel %vm920, %v5129, %v5051
    %v5131 = vsel %vm4549, %v5130, %v5057
    %v5132 = vsel %vm4583, %v5131, %v5063
    %v5133 = vsel %vm5024, %v5132, %v5069
    %v5134 = vsel %vm5026, %v5133, %v5075
    %v5135 = vsel %vm5028, %v5134, %v5081
    %v5136 = vsel %vm852, %v5086, %v5091
    %v5137 = vsel %vm920, %v5136, %v5097
    %v5138 = vsel %vm4549, %v5137, %v5103
    %v5139 = vsel %vm4583, %v5138, %v5109
    %v5140 = vsel %vm5024, %v5139, %v5115
    %v5141 = vsel %vm5026, %v5140, %v5121
    %v5142 = vsel %vm5028, %v5141, %v5127
    %v5145 = vrot.slane %v4923, 7
    %v5146 = vsel %vm4930, %v5145, %v4915
    %v5148 = vrot.slane %v4915, 1
    %v5149 = vsel %vm4930, %v4923, %v5148
    %5150 = vrot.lane.b32.xlu0 %v5149, 16
    %v5151 = vpop.permute.xlu0 %5150
    %v5153 = vrot.slane %v4915, 2
    %v5154 = vrot.slane %v4923, 1
    %v5155 = vsel %vm4930, %v5154, %v5153
    %5156 = vrot.lane.b32.xlu0 %v5155, 32
    %v5157 = vpop.permute.xlu0 %5156
    %v5159 = vrot.slane %v4915, 3
    %v5160 = vrot.slane %v4923, 2
    %v5161 = vsel %vm4930, %v5160, %v5159
    %5162 = vrot.lane.b32.xlu0 %v5161, 48
    %v5163 = vpop.permute.xlu0 %5162
    %v5165 = vrot.slane %v4915, 4
    %v5166 = vrot.slane %v4923, 3
    %v5167 = vsel %vm4930, %v5166, %v5165
    %5168 = vrot.lane.b32.xlu0 %v5167, 64
    %v5169 = vpop.permute.xlu0 %5168
    %v5171 = vrot.slane %v4915, 5
    %v5172 = vrot.slane %v4923, 4
    %v5173 = vsel %vm4930, %v5172, %v5171
    %5174 = vrot.lane.b32.xlu0 %v5173, 80
    %v5175 = vpop.permute.xlu0 %5174
    %v5177 = vrot.slane %v4915, 6
    %v5178 = vrot.slane %v4923, 5
    %v5179 = vsel %vm4930, %v5178, %v5177
    %5180 = vrot.lane.b32.xlu0 %v5179, 96
    %v5181 = vpop.permute.xlu0 %5180
    %v5183 = vrot.slane %v4915, 7
    %v5184 = vrot.slane %v4923, 6
    %v5185 = vsel %vm4930, %v5184, %v5183
    %5186 = vrot.lane.b32.xlu0 %v5185, 112
    %v5187 = vpop.permute.xlu0 %5186
    %v5191 = vrot.slane %v4924, 7
    %v5192 = vsel %vm4930, %v5191, %v4916
    %v5194 = vrot.slane %v4916, 1
    %v5195 = vsel %vm4930, %v4924, %v5194
    %5196 = vrot.lane.b32.xlu0 %v5195, 16
    %v5197 = vpop.permute.xlu0 %5196
    %v5199 = vrot.slane %v4916, 2
    %v5200 = vrot.slane %v4924, 1
    %v5201 = vsel %vm4930, %v5200, %v5199
    %5202 = vrot.lane.b32.xlu0 %v5201, 32
    %v5203 = vpop.permute.xlu0 %5202
    %v5205 = vrot.slane %v4916, 3
    %v5206 = vrot.slane %v4924, 2
    %v5207 = vsel %vm4930, %v5206, %v5205
    %5208 = vrot.lane.b32.xlu0 %v5207, 48
    %v5209 = vpop.permute.xlu0 %5208
    %v5211 = vrot.slane %v4916, 4
    %v5212 = vrot.slane %v4924, 3
    %v5213 = vsel %vm4930, %v5212, %v5211
    %5214 = vrot.lane.b32.xlu0 %v5213, 64
    %v5215 = vpop.permute.xlu0 %5214
    %v5217 = vrot.slane %v4916, 5
    %v5218 = vrot.slane %v4924, 4
    %v5219 = vsel %vm4930, %v5218, %v5217
    %5220 = vrot.lane.b32.xlu0 %v5219, 80
    %v5221 = vpop.permute.xlu0 %5220
    %v5223 = vrot.slane %v4916, 6
    %v5224 = vrot.slane %v4924, 5
    %v5225 = vsel %vm4930, %v5224, %v5223
    %5226 = vrot.lane.b32.xlu0 %v5225, 96
    %v5227 = vpop.permute.xlu0 %5226
    %v5229 = vrot.slane %v4916, 7
    %v5230 = vrot.slane %v4924, 6
    %v5231 = vsel %vm4930, %v5230, %v5229
    %5232 = vrot.lane.b32.xlu0 %v5231, 112
    %v5233 = vpop.permute.xlu0 %5232
    %v5235 = vsel %vm852, %v5146, %v5151
    %v5236 = vsel %vm920, %v5235, %v5157
    %v5237 = vsel %vm4549, %v5236, %v5163
    %v5238 = vsel %vm4583, %v5237, %v5169
    %v5239 = vsel %vm5024, %v5238, %v5175
    %v5240 = vsel %vm5026, %v5239, %v5181
    %v5241 = vsel %vm5028, %v5240, %v5187
    %v5242 = vsel %vm852, %v5192, %v5197
    %v5243 = vsel %vm920, %v5242, %v5203
    %v5244 = vsel %vm4549, %v5243, %v5209
    %v5245 = vsel %vm4583, %v5244, %v5215
    %v5246 = vsel %vm5024, %v5245, %v5221
    %v5247 = vsel %vm5026, %v5246, %v5227
    %v5248 = vsel %vm5028, %v5247, %v5233
    %v5251 = vrot.slane %v4925, 7
    %v5252 = vsel %vm4930, %v5251, %v4917
    %v5254 = vrot.slane %v4917, 1
    %v5255 = vsel %vm4930, %v4925, %v5254
    %5256 = vrot.lane.b32.xlu0 %v5255, 16
    %v5257 = vpop.permute.xlu0 %5256
    %v5259 = vrot.slane %v4917, 2
    %v5260 = vrot.slane %v4925, 1
    %v5261 = vsel %vm4930, %v5260, %v5259
    %5262 = vrot.lane.b32.xlu0 %v5261, 32
    %v5263 = vpop.permute.xlu0 %5262
    %v5265 = vrot.slane %v4917, 3
    %v5266 = vrot.slane %v4925, 2
    %v5267 = vsel %vm4930, %v5266, %v5265
    %5268 = vrot.lane.b32.xlu0 %v5267, 48
    %v5269 = vpop.permute.xlu0 %5268
    %v5271 = vrot.slane %v4917, 4
    %v5272 = vrot.slane %v4925, 3
    %v5273 = vsel %vm4930, %v5272, %v5271
    %5274 = vrot.lane.b32.xlu0 %v5273, 64
    %v5275 = vpop.permute.xlu0 %5274
    %v5277 = vrot.slane %v4917, 5
    %v5278 = vrot.slane %v4925, 4
    %v5279 = vsel %vm4930, %v5278, %v5277
    %5280 = vrot.lane.b32.xlu0 %v5279, 80
    %v5281 = vpop.permute.xlu0 %5280
    %v5283 = vrot.slane %v4917, 6
    %v5284 = vrot.slane %v4925, 5
    %v5285 = vsel %vm4930, %v5284, %v5283
    %5286 = vrot.lane.b32.xlu0 %v5285, 96
    %v5287 = vpop.permute.xlu0 %5286
    %v5289 = vrot.slane %v4917, 7
    %v5290 = vrot.slane %v4925, 6
    %v5291 = vsel %vm4930, %v5290, %v5289
    %5292 = vrot.lane.b32.xlu0 %v5291, 112
    %v5293 = vpop.permute.xlu0 %5292
    %v5297 = vrot.slane %v4926, 7
    %v5298 = vsel %vm4930, %v5297, %v4918
    %v5300 = vrot.slane %v4918, 1
    %v5301 = vsel %vm4930, %v4926, %v5300
    %5302 = vrot.lane.b32.xlu0 %v5301, 16
    %v5303 = vpop.permute.xlu0 %5302
    %v5305 = vrot.slane %v4918, 2
    %v5306 = vrot.slane %v4926, 1
    %v5307 = vsel %vm4930, %v5306, %v5305
    %5308 = vrot.lane.b32.xlu0 %v5307, 32
    %v5309 = vpop.permute.xlu0 %5308
    %v5311 = vrot.slane %v4918, 3
    %v5312 = vrot.slane %v4926, 2
    %v5313 = vsel %vm4930, %v5312, %v5311
    %5314 = vrot.lane.b32.xlu0 %v5313, 48
    %v5315 = vpop.permute.xlu0 %5314
    %v5317 = vrot.slane %v4918, 4
    %v5318 = vrot.slane %v4926, 3
    %v5319 = vsel %vm4930, %v5318, %v5317
    %5320 = vrot.lane.b32.xlu0 %v5319, 64
    %v5321 = vpop.permute.xlu0 %5320
    %v5323 = vrot.slane %v4918, 5
    %v5324 = vrot.slane %v4926, 4
    %v5325 = vsel %vm4930, %v5324, %v5323
    %5326 = vrot.lane.b32.xlu0 %v5325, 80
    %v5327 = vpop.permute.xlu0 %5326
    %v5329 = vrot.slane %v4918, 6
    %v5330 = vrot.slane %v4926, 5
    %v5331 = vsel %vm4930, %v5330, %v5329
    %5332 = vrot.lane.b32.xlu0 %v5331, 96
    %v5333 = vpop.permute.xlu0 %5332
    %v5335 = vrot.slane %v4918, 7
    %v5336 = vrot.slane %v4926, 6
    %v5337 = vsel %vm4930, %v5336, %v5335
    %5338 = vrot.lane.b32.xlu0 %v5337, 112
    %v5339 = vpop.permute.xlu0 %5338
    %v5341 = vsel %vm852, %v5252, %v5257
    %v5342 = vsel %vm920, %v5341, %v5263
    %v5343 = vsel %vm4549, %v5342, %v5269
    %v5344 = vsel %vm4583, %v5343, %v5275
    %v5345 = vsel %vm5024, %v5344, %v5281
    %v5346 = vsel %vm5026, %v5345, %v5287
    %v5347 = vsel %vm5028, %v5346, %v5293
    %v5348 = vsel %vm852, %v5298, %v5303
    %v5349 = vsel %vm920, %v5348, %v5309
    %v5350 = vsel %vm4549, %v5349, %v5315
    %v5351 = vsel %vm4583, %v5350, %v5321
    %v5352 = vsel %vm5024, %v5351, %v5327
    %v5353 = vsel %vm5026, %v5352, %v5333
    %v5354 = vsel %vm5028, %v5353, %v5339
    %v5355 = vpack.c.bf16 %v5029, %v5029
    %v5356 = vpack.c.bf16 %v5036, %v5036
    %v5357 = vpack.c.bf16 %v5135, %v5135
    %v5358 = vpack.c.bf16 %v5142, %v5142
    %v5359 = vpack.c.bf16 %v5241, %v5241
    %v5360 = vpack.c.bf16 %v5248, %v5248
    %v5361 = vpack.c.bf16 %v5347, %v5347
    %v5362 = vpack.c.bf16 %v5354, %v5354
    %v5363 = vld [vmem:[%s7] sm:$0xf]
    %v5364 = vld [vmem:[%s7 + $0x4] sm:$0xf]
    %v5365 = vld [vmem:[%s7 + $0x8] sm:$0xf]
    %v5366 = vld [vmem:[%s7 + $0xc] sm:$0xf]
    %v5367 = vld [vmem:[%s7 + $0x10] sm:$0xf]
    %v5368 = vld [vmem:[%s7 + $0x14] sm:$0xf]
    %v5369 = vld [vmem:[%s7 + $0x18] sm:$0xf]
    %v5370 = vld [vmem:[%s7 + $0x1c] sm:$0xf]
    %v5371 = vld [vmem:[%s7 + $0x20] sm:$0xf]
    %v5372 = vld [vmem:[%s7 + $0x24] sm:$0xf]
    %v5373 = vld [vmem:[%s7 + $0x28] sm:$0xf]
    %v5374 = vld [vmem:[%s7 + $0x2c] sm:$0xf]
    %v5375 = vld [vmem:[%s7 + $0x30] sm:$0xf]
    %v5376 = vld [vmem:[%s7 + $0x34] sm:$0xf]
    %v5377 = vld [vmem:[%s7 + $0x38] sm:$0xf]
    %v5378 = vld [vmem:[%s7 + $0x3c] sm:$0xf]
    %v5379 = vld [vmem:[%s7 + $0x40] sm:$0xf]
    %v5380 = vld [vmem:[%s7 + $0x44] sm:$0xf]
    %v5381 = vld [vmem:[%s7 + $0x48] sm:$0xf]
    %v5382 = vld [vmem:[%s7 + $0x4c] sm:$0xf]
    %v5383 = vld [vmem:[%s7 + $0x50] sm:$0xf]
    %v5384 = vld [vmem:[%s7 + $0x54] sm:$0xf]
    %v5385 = vld [vmem:[%s7 + $0x58] sm:$0xf]
    %v5386 = vld [vmem:[%s7 + $0x5c] sm:$0xf]
    %v5387 = vld [vmem:[%s7 + $0x60] sm:$0xf]
    %v5388 = vld [vmem:[%s7 + $0x64] sm:$0xf]
    %v5389 = vld [vmem:[%s7 + $0x68] sm:$0xf]
    %v5390 = vld [vmem:[%s7 + $0x6c] sm:$0xf]
    %v5391 = vld [vmem:[%s7 + $0x70] sm:$0xf]
    %v5392 = vld [vmem:[%s7 + $0x74] sm:$0xf]
    %v5393 = vld [vmem:[%s7 + $0x78] sm:$0xf]
    %v5394 = vld [vmem:[%s7 + $0x7c] sm:$0xf]
    %v5395 = vld [vmem:[%s7 + $0x80] sm:$0xf]
    %v5396 = vld [vmem:[%s7 + $0x84] sm:$0xf]
    %v5397 = vld [vmem:[%s7 + $0x88] sm:$0xf]
    %v5398 = vld [vmem:[%s7 + $0x8c] sm:$0xf]
    %v5399 = vld [vmem:[%s7 + $0x90] sm:$0xf]
    %v5400 = vld [vmem:[%s7 + $0x94] sm:$0xf]
    %v5401 = vld [vmem:[%s7 + $0x98] sm:$0xf]
    %v5402 = vld [vmem:[%s7 + $0x9c] sm:$0xf]
    %v5403 = vld [vmem:[%s7 + $0xa0] sm:$0xf]
    %v5404 = vld [vmem:[%s7 + $0xa4] sm:$0xf]
    %v5405 = vld [vmem:[%s7 + $0xa8] sm:$0xf]
    %v5406 = vld [vmem:[%s7 + $0xac] sm:$0xf]
    %v5407 = vld [vmem:[%s7 + $0xb0] sm:$0xf]
    %v5408 = vld [vmem:[%s7 + $0xb4] sm:$0xf]
    %v5409 = vld [vmem:[%s7 + $0xb8] sm:$0xf]
    %v5410 = vld [vmem:[%s7 + $0xbc] sm:$0xf]
    %v5411 = vld [vmem:[%s7 + $0xc0] sm:$0xf]
    %v5412 = vld [vmem:[%s7 + $0xc4] sm:$0xf]
    %v5413 = vld [vmem:[%s7 + $0xc8] sm:$0xf]
    %v5414 = vld [vmem:[%s7 + $0xcc] sm:$0xf]
    %v5415 = vld [vmem:[%s7 + $0xd0] sm:$0xf]
    %v5416 = vld [vmem:[%s7 + $0xd4] sm:$0xf]
    %v5417 = vld [vmem:[%s7 + $0xd8] sm:$0xf]
    %v5418 = vld [vmem:[%s7 + $0xdc] sm:$0xf]
    %v5419 = vld [vmem:[%s7 + $0xe0] sm:$0xf]
    %v5420 = vld [vmem:[%s7 + $0xe4] sm:$0xf]
    %v5421 = vld [vmem:[%s7 + $0xe8] sm:$0xf]
    %v5422 = vld [vmem:[%s7 + $0xec] sm:$0xf]
    %v5423 = vld [vmem:[%s7 + $0xf0] sm:$0xf]
    %v5424 = vld [vmem:[%s7 + $0xf4] sm:$0xf]
    %v5425 = vld [vmem:[%s7 + $0xf8] sm:$0xf]
    %v5426 = vld [vmem:[%s7 + $0xfc] sm:$0xf]
    %v5427 = vld [vmem:[%s7 + $0x100] sm:$0xf]
    %v5428 = vld [vmem:[%s7 + $0x104] sm:$0xf]
    %v5429 = vld [vmem:[%s7 + $0x108] sm:$0xf]
    %v5430 = vld [vmem:[%s7 + $0x10c] sm:$0xf]
    %v5431 = vld [vmem:[%s7 + $0x110] sm:$0xf]
    %v5432 = vld [vmem:[%s7 + $0x114] sm:$0xf]
    %v5433 = vld [vmem:[%s7 + $0x118] sm:$0xf]
    %v5434 = vld [vmem:[%s7 + $0x11c] sm:$0xf]
    %v5435 = vld [vmem:[%s7 + $0x120] sm:$0xf]
    %v5436 = vld [vmem:[%s7 + $0x124] sm:$0xf]
    %v5437 = vld [vmem:[%s7 + $0x128] sm:$0xf]
    %v5438 = vld [vmem:[%s7 + $0x12c] sm:$0xf]
    %v5439 = vld [vmem:[%s7 + $0x130] sm:$0xf]
    %v5440 = vld [vmem:[%s7 + $0x134] sm:$0xf]
    %v5441 = vld [vmem:[%s7 + $0x138] sm:$0xf]
    %v5442 = vld [vmem:[%s7 + $0x13c] sm:$0xf]
    %v5443 = vld [vmem:[%s7 + $0x140] sm:$0xf]
    %v5444 = vld [vmem:[%s7 + $0x144] sm:$0xf]
    %v5445 = vld [vmem:[%s7 + $0x148] sm:$0xf]
    %v5446 = vld [vmem:[%s7 + $0x14c] sm:$0xf]
    %v5447 = vld [vmem:[%s7 + $0x150] sm:$0xf]
    %v5448 = vld [vmem:[%s7 + $0x154] sm:$0xf]
    %v5449 = vld [vmem:[%s7 + $0x158] sm:$0xf]
    %v5450 = vld [vmem:[%s7 + $0x15c] sm:$0xf]
    %v5451 = vld [vmem:[%s7 + $0x160] sm:$0xf]
    %v5452 = vld [vmem:[%s7 + $0x164] sm:$0xf]
    %v5453 = vld [vmem:[%s7 + $0x168] sm:$0xf]
    %v5454 = vld [vmem:[%s7 + $0x16c] sm:$0xf]
    %v5455 = vld [vmem:[%s7 + $0x170] sm:$0xf]
    %v5456 = vld [vmem:[%s7 + $0x174] sm:$0xf]
    %v5457 = vld [vmem:[%s7 + $0x178] sm:$0xf]
    %v5458 = vld [vmem:[%s7 + $0x17c] sm:$0xf]
    %v5459 = vld [vmem:[%s7 + $0x180] sm:$0xf]
    %v5460 = vld [vmem:[%s7 + $0x184] sm:$0xf]
    %v5461 = vld [vmem:[%s7 + $0x188] sm:$0xf]
    %v5462 = vld [vmem:[%s7 + $0x18c] sm:$0xf]
    %v5463 = vld [vmem:[%s7 + $0x190] sm:$0xf]
    %v5464 = vld [vmem:[%s7 + $0x194] sm:$0xf]
    %v5465 = vld [vmem:[%s7 + $0x198] sm:$0xf]
    %v5466 = vld [vmem:[%s7 + $0x19c] sm:$0xf]
    %v5467 = vld [vmem:[%s7 + $0x1a0] sm:$0xf]
    %v5468 = vld [vmem:[%s7 + $0x1a4] sm:$0xf]
    %v5469 = vld [vmem:[%s7 + $0x1a8] sm:$0xf]
    %v5470 = vld [vmem:[%s7 + $0x1ac] sm:$0xf]
    %v5471 = vld [vmem:[%s7 + $0x1b0] sm:$0xf]
    %v5472 = vld [vmem:[%s7 + $0x1b4] sm:$0xf]
    %v5473 = vld [vmem:[%s7 + $0x1b8] sm:$0xf]
    %v5474 = vld [vmem:[%s7 + $0x1bc] sm:$0xf]
    %v5475 = vld [vmem:[%s7 + $0x1c0] sm:$0xf]
    %v5476 = vld [vmem:[%s7 + $0x1c4] sm:$0xf]
    %v5477 = vld [vmem:[%s7 + $0x1c8] sm:$0xf]
    %v5478 = vld [vmem:[%s7 + $0x1cc] sm:$0xf]
    %v5479 = vld [vmem:[%s7 + $0x1d0] sm:$0xf]
    %v5480 = vld [vmem:[%s7 + $0x1d4] sm:$0xf]
    %v5481 = vld [vmem:[%s7 + $0x1d8] sm:$0xf]
    %v5482 = vld [vmem:[%s7 + $0x1dc] sm:$0xf]
    %v5483 = vld [vmem:[%s7 + $0x1e0] sm:$0xf]
    %v5484 = vld [vmem:[%s7 + $0x1e4] sm:$0xf]
    %v5485 = vld [vmem:[%s7 + $0x1e8] sm:$0xf]
    %v5486 = vld [vmem:[%s7 + $0x1ec] sm:$0xf]
    %v5487 = vld [vmem:[%s7 + $0x1f0] sm:$0xf]
    %v5488 = vld [vmem:[%s7 + $0x1f4] sm:$0xf]
    %v5489 = vld [vmem:[%s7 + $0x1f8] sm:$0xf]
    %v5490 = vld [vmem:[%s7 + $0x1fc] sm:$0xf]
    %v5491 = vld [vmem:[%s8] sm:$0x1]
    %v5492 = vld [vmem:[%s9] sm:$0x1]
    %v5621 = vunpack.c.l.b16 %v5363
    %v5622 = vunpack.c.l.b16 %v5364
    %v5623 = vunpack.c.l.b16 %v5365
    %v5624 = vunpack.c.l.b16 %v5366
    %v5625 = vunpack.c.l.b16 %v5367
    %v5626 = vunpack.c.l.b16 %v5368
    %v5627 = vunpack.c.l.b16 %v5369
    %v5628 = vunpack.c.l.b16 %v5370
    %v5629 = vunpack.c.l.b16 %v5371
    %v5630 = vunpack.c.l.b16 %v5372
    %v5631 = vunpack.c.l.b16 %v5373
    %v5632 = vunpack.c.l.b16 %v5374
    %v5633 = vunpack.c.l.b16 %v5375
    %v5634 = vunpack.c.l.b16 %v5376
    %v5635 = vunpack.c.l.b16 %v5377
    %v5636 = vunpack.c.l.b16 %v5378
    %v5637 = vunpack.c.l.b16 %v5379
    %v5638 = vunpack.c.l.b16 %v5380
    %v5639 = vunpack.c.l.b16 %v5381
    %v5640 = vunpack.c.l.b16 %v5382
    %v5641 = vunpack.c.l.b16 %v5383
    %v5642 = vunpack.c.l.b16 %v5384
    %v5643 = vunpack.c.l.b16 %v5385
    %v5644 = vunpack.c.l.b16 %v5386
    %v5645 = vunpack.c.l.b16 %v5387
    %v5646 = vunpack.c.l.b16 %v5388
    %v5647 = vunpack.c.l.b16 %v5389
    %v5648 = vunpack.c.l.b16 %v5390
    %v5649 = vunpack.c.l.b16 %v5391
    %v5650 = vunpack.c.l.b16 %v5392
    %v5651 = vunpack.c.l.b16 %v5393
    %v5652 = vunpack.c.l.b16 %v5394
    %v5653 = vunpack.c.l.b16 %v5395
    %v5654 = vunpack.c.l.b16 %v5396
    %v5655 = vunpack.c.l.b16 %v5397
    %v5656 = vunpack.c.l.b16 %v5398
    %v5657 = vunpack.c.l.b16 %v5399
    %v5658 = vunpack.c.l.b16 %v5400
    %v5659 = vunpack.c.l.b16 %v5401
    %v5660 = vunpack.c.l.b16 %v5402
    %v5661 = vunpack.c.l.b16 %v5403
    %v5662 = vunpack.c.l.b16 %v5404
    %v5663 = vunpack.c.l.b16 %v5405
    %v5664 = vunpack.c.l.b16 %v5406
    %v5665 = vunpack.c.l.b16 %v5407
    %v5666 = vunpack.c.l.b16 %v5408
    %v5667 = vunpack.c.l.b16 %v5409
    %v5668 = vunpack.c.l.b16 %v5410
    %v5669 = vunpack.c.l.b16 %v5411
    %v5670 = vunpack.c.l.b16 %v5412
    %v5671 = vunpack.c.l.b16 %v5413
    %v5672 = vunpack.c.l.b16 %v5414
    %v5673 = vunpack.c.l.b16 %v5415
    %v5674 = vunpack.c.l.b16 %v5416
    %v5675 = vunpack.c.l.b16 %v5417
    %v5676 = vunpack.c.l.b16 %v5418
    %v5677 = vunpack.c.l.b16 %v5419
    %v5678 = vunpack.c.l.b16 %v5420
    %v5679 = vunpack.c.l.b16 %v5421
    %v5680 = vunpack.c.l.b16 %v5422
    %v5681 = vunpack.c.l.b16 %v5423
    %v5682 = vunpack.c.l.b16 %v5424
    %v5683 = vunpack.c.l.b16 %v5425
    %v5684 = vunpack.c.l.b16 %v5426
    %v5685 = vunpack.c.l.b16 %v5427
    %v5686 = vunpack.c.l.b16 %v5428
    %v5687 = vunpack.c.l.b16 %v5429
    %v5688 = vunpack.c.l.b16 %v5430
    %v5689 = vunpack.c.l.b16 %v5431
    %v5690 = vunpack.c.l.b16 %v5432
    %v5691 = vunpack.c.l.b16 %v5433
    %v5692 = vunpack.c.l.b16 %v5434
    %v5693 = vunpack.c.l.b16 %v5435
    %v5694 = vunpack.c.l.b16 %v5436
    %v5695 = vunpack.c.l.b16 %v5437
    %v5696 = vunpack.c.l.b16 %v5438
    %v5697 = vunpack.c.l.b16 %v5439
    %v5698 = vunpack.c.l.b16 %v5440
    %v5699 = vunpack.c.l.b16 %v5441
    %v5700 = vunpack.c.l.b16 %v5442
    %v5701 = vunpack.c.l.b16 %v5443
    %v5702 = vunpack.c.l.b16 %v5444
    %v5703 = vunpack.c.l.b16 %v5445
    %v5704 = vunpack.c.l.b16 %v5446
    %v5705 = vunpack.c.l.b16 %v5447
    %v5706 = vunpack.c.l.b16 %v5448
    %v5707 = vunpack.c.l.b16 %v5449
    %v5708 = vunpack.c.l.b16 %v5450
    %v5709 = vunpack.c.l.b16 %v5451
    %v5710 = vunpack.c.l.b16 %v5452
    %v5711 = vunpack.c.l.b16 %v5453
    %v5712 = vunpack.c.l.b16 %v5454
    %v5713 = vunpack.c.l.b16 %v5455
    %v5714 = vunpack.c.l.b16 %v5456
    %v5715 = vunpack.c.l.b16 %v5457
    %v5716 = vunpack.c.l.b16 %v5458
    %v5717 = vunpack.c.l.b16 %v5459
    %v5718 = vunpack.c.l.b16 %v5460
    %v5719 = vunpack.c.l.b16 %v5461
    %v5720 = vunpack.c.l.b16 %v5462
    %v5721 = vunpack.c.l.b16 %v5463
    %v5722 = vunpack.c.l.b16 %v5464
    %v5723 = vunpack.c.l.b16 %v5465
    %v5724 = vunpack.c.l.b16 %v5466
    %v5725 = vunpack.c.l.b16 %v5467
    %v5726 = vunpack.c.l.b16 %v5468
    %v5727 = vunpack.c.l.b16 %v5469
    %v5728 = vunpack.c.l.b16 %v5470
    %v5729 = vunpack.c.l.b16 %v5471
    %v5730 = vunpack.c.l.b16 %v5472
    %v5731 = vunpack.c.l.b16 %v5473
    %v5732 = vunpack.c.l.b16 %v5474
    %v5733 = vunpack.c.l.b16 %v5475
    %v5734 = vunpack.c.l.b16 %v5476
    %v5735 = vunpack.c.l.b16 %v5477
    %v5736 = vunpack.c.l.b16 %v5478
    %v5737 = vunpack.c.l.b16 %v5479
    %v5738 = vunpack.c.l.b16 %v5480
    %v5739 = vunpack.c.l.b16 %v5481
    %v5740 = vunpack.c.l.b16 %v5482
    %v5741 = vunpack.c.l.b16 %v5483
    %v5742 = vunpack.c.l.b16 %v5484
    %v5743 = vunpack.c.l.b16 %v5485
    %v5744 = vunpack.c.l.b16 %v5486
    %v5745 = vunpack.c.l.b16 %v5487
    %v5746 = vunpack.c.l.b16 %v5488
    %v5747 = vunpack.c.l.b16 %v5489
    %v5748 = vunpack.c.l.b16 %v5490
    %v5749 = vpack.c.b16 %v5622, %v5621
    %v5750 = vpack.c.b16 %v5624, %v5623
    %v5751 = vpack.c.b16 %v5626, %v5625
    %v5752 = vpack.c.b16 %v5628, %v5627
    %v5753 = vpack.c.b16 %v5630, %v5629
    %v5754 = vpack.c.b16 %v5632, %v5631
    %v5755 = vpack.c.b16 %v5634, %v5633
    %v5756 = vpack.c.b16 %v5636, %v5635
    %v5757 = vpack.c.b16 %v5638, %v5637
    %v5758 = vpack.c.b16 %v5640, %v5639
    %v5759 = vpack.c.b16 %v5642, %v5641
    %v5760 = vpack.c.b16 %v5644, %v5643
    %v5761 = vpack.c.b16 %v5646, %v5645
    %v5762 = vpack.c.b16 %v5648, %v5647
    %v5763 = vpack.c.b16 %v5650, %v5649
    %v5764 = vpack.c.b16 %v5652, %v5651
    %v5765 = vpack.c.b16 %v5654, %v5653
    %v5766 = vpack.c.b16 %v5656, %v5655
    %v5767 = vpack.c.b16 %v5658, %v5657
    %v5768 = vpack.c.b16 %v5660, %v5659
    %v5769 = vpack.c.b16 %v5662, %v5661
    %v5770 = vpack.c.b16 %v5664, %v5663
    %v5771 = vpack.c.b16 %v5666, %v5665
    %v5772 = vpack.c.b16 %v5668, %v5667
    %v5773 = vpack.c.b16 %v5670, %v5669
    %v5774 = vpack.c.b16 %v5672, %v5671
    %v5775 = vpack.c.b16 %v5674, %v5673
    %v5776 = vpack.c.b16 %v5676, %v5675
    %v5777 = vpack.c.b16 %v5678, %v5677
    %v5778 = vpack.c.b16 %v5680, %v5679
    %v5779 = vpack.c.b16 %v5682, %v5681
    %v5780 = vpack.c.b16 %v5684, %v5683
    %v5781 = vpack.c.b16 %v5686, %v5685
    %v5782 = vpack.c.b16 %v5688, %v5687
    %v5783 = vpack.c.b16 %v5690, %v5689
    %v5784 = vpack.c.b16 %v5692, %v5691
    %v5785 = vpack.c.b16 %v5694, %v5693
    %v5786 = vpack.c.b16 %v5696, %v5695
    %v5787 = vpack.c.b16 %v5698, %v5697
    %v5788 = vpack.c.b16 %v5700, %v5699
    %v5789 = vpack.c.b16 %v5702, %v5701
    %v5790 = vpack.c.b16 %v5704, %v5703
    %v5791 = vpack.c.b16 %v5706, %v5705
    %v5792 = vpack.c.b16 %v5708, %v5707
    %v5793 = vpack.c.b16 %v5710, %v5709
    %v5794 = vpack.c.b16 %v5712, %v5711
    %v5795 = vpack.c.b16 %v5714, %v5713
    %v5796 = vpack.c.b16 %v5716, %v5715
    %v5797 = vpack.c.b16 %v5718, %v5717
    %v5798 = vpack.c.b16 %v5720, %v5719
    %v5799 = vpack.c.b16 %v5722, %v5721
    %v5800 = vpack.c.b16 %v5724, %v5723
    %v5801 = vpack.c.b16 %v5726, %v5725
    %v5802 = vpack.c.b16 %v5728, %v5727
    %v5803 = vpack.c.b16 %v5730, %v5729
    %v5804 = vpack.c.b16 %v5732, %v5731
    %v5805 = vpack.c.b16 %v5734, %v5733
    %v5806 = vpack.c.b16 %v5736, %v5735
    %v5807 = vpack.c.b16 %v5738, %v5737
    %v5808 = vpack.c.b16 %v5740, %v5739
    %v5809 = vpack.c.b16 %v5742, %v5741
    %v5810 = vpack.c.b16 %v5744, %v5743
    %v5811 = vpack.c.b16 %v5746, %v5745
    %v5812 = vpack.c.b16 %v5748, %v5747
    %5877 = vmatprep.subr.bf16.mxu0 0
    %5878 = vmatpush1.bf16.msra.mxu0 %v5756
    %5879 = vmatprep.subr.bf16.mxu0 0
    %5880 = vmatpush1.bf16.msra.mxu0 %v5755
    %5881 = vmatprep.subr.bf16.mxu0 0
    %5882 = vmatpush1.bf16.msra.mxu0 %v5754
    %5883 = vmatprep.subr.bf16.mxu0 0
    %5884 = vmatpush1.bf16.msra.mxu0 %v5753
    %5885 = vmatprep.subr.bf16.mxu0 0
    %5886 = vmatpush1.bf16.msra.mxu0 %v5752
    %5887 = vmatprep.subr.bf16.mxu0 0
    %5888 = vmatpush1.bf16.msra.mxu0 %v5751
    %5889 = vmatprep.subr.bf16.mxu0 0
    %5890 = vmatpush1.bf16.msra.mxu0 %v5750
    %5891 = vmatprep.subr.bf16.mxu0 0
    %5892 = vmatpush1.bf16.msra.mxu0 %v5749
    %5893 = vmatprep.subr.bf16.mxu0 0
    %5894 = vmatpush2.bf16.msra.mxu0 %v5764
    %5895 = vmatprep.subr.bf16.mxu0 0
    %5896 = vmatpush2.bf16.msra.mxu0 %v5763
    %5897 = vmatprep.subr.bf16.mxu0 0
    %5898 = vmatpush2.bf16.msra.mxu0 %v5762
    %5899 = vmatprep.subr.bf16.mxu0 0
    %5900 = vmatpush2.bf16.msra.mxu0 %v5761
    %5901 = vmatprep.subr.bf16.mxu0 0
    %5902 = vmatpush2.bf16.msra.mxu0 %v5760
    %5903 = vmatprep.subr.bf16.mxu0 0
    %5904 = vmatpush2.bf16.msra.mxu0 %v5759
    %5905 = vmatprep.subr.bf16.mxu0 0
    %5906 = vmatpush2.bf16.msra.mxu0 %v5758
    %5907 = vmatprep.subr.bf16.mxu0 0
    %5908 = vmatpush2.bf16.msra.mxu0 %v5757
    %5909 = vmatprep.mubr.bf16.mxu0 %v5356
    %5910 = vmatmul.mubr.bf16.gmra.mxu0 %v5355
    %v5911 = vpop.f32.mrf.mxu0
    %v5912 = vadd.f32 0.0, %v5911
    %v5913 = vpop.f32.mrf.mxu0
    %v5914 = vpop.f32.mrf.mxu0
    %v5915 = vpop.f32.mrf.mxu0
    %5916 = vdwg.mxu0
    %5917 = vmatprep.subr.bf16.mxu0 0
    %5918 = vmatpush1.bf16.msra.mxu0 %v5772
    %5919 = vmatprep.subr.bf16.mxu0 0
    %5920 = vmatpush1.bf16.msra.mxu0 %v5771
    %5921 = vmatprep.subr.bf16.mxu0 0
    %5922 = vmatpush1.bf16.msra.mxu0 %v5770
    %5923 = vmatprep.subr.bf16.mxu0 0
    %5924 = vmatpush1.bf16.msra.mxu0 %v5769
    %5925 = vmatprep.subr.bf16.mxu0 0
    %5926 = vmatpush1.bf16.msra.mxu0 %v5768
    %5927 = vmatprep.subr.bf16.mxu0 0
    %5928 = vmatpush1.bf16.msra.mxu0 %v5767
    %5929 = vmatprep.subr.bf16.mxu0 0
    %5930 = vmatpush1.bf16.msra.mxu0 %v5766
    %5931 = vmatprep.subr.bf16.mxu0 0
    %5932 = vmatpush1.bf16.msra.mxu0 %v5765
    %5933 = vmatprep.subr.bf16.mxu0 0
    %5934 = vmatpush2.bf16.msra.mxu0 %v5780
    %5935 = vmatprep.subr.bf16.mxu0 0
    %5936 = vmatpush2.bf16.msra.mxu0 %v5779
    %5937 = vmatprep.subr.bf16.mxu0 0
    %5938 = vmatpush2.bf16.msra.mxu0 %v5778
    %5939 = vmatprep.subr.bf16.mxu0 0
    %5940 = vmatpush2.bf16.msra.mxu0 %v5777
    %5941 = vmatprep.subr.bf16.mxu0 0
    %5942 = vmatpush2.bf16.msra.mxu0 %v5776
    %5943 = vmatprep.subr.bf16.mxu0 0
    %5944 = vmatpush2.bf16.msra.mxu0 %v5775
    %5945 = vmatprep.subr.bf16.mxu0 0
    %5946 = vmatpush2.bf16.msra.mxu0 %v5774
    %5947 = vmatprep.subr.bf16.mxu0 0
    %5948 = vmatpush2.bf16.msra.mxu0 %v5773
    %5949 = vmatprep.mubr.bf16.mxu0 %v5358
    %5950 = vmatmul.mubr.bf16.gmra.mxu0 %v5357
    %v5951 = vpop.f32.mrf.mxu0
    %v5952 = vadd.f32 %v5912, %v5951
    %v5953 = vpop.f32.mrf.mxu0
    %v5954 = vpop.f32.mrf.mxu0
    %v5955 = vpop.f32.mrf.mxu0
    %5956 = vdwg.mxu0
    %5957 = vmatprep.subr.bf16.mxu0 0
    %5958 = vmatpush1.bf16.msra.mxu0 %v5788
    %5959 = vmatprep.subr.bf16.mxu0 0
    %5960 = vmatpush1.bf16.msra.mxu0 %v5787
    %5961 = vmatprep.subr.bf16.mxu0 0
    %5962 = vmatpush1.bf16.msra.mxu0 %v5786
    %5963 = vmatprep.subr.bf16.mxu0 0
    %5964 = vmatpush1.bf16.msra.mxu0 %v5785
    %5965 = vmatprep.subr.bf16.mxu0 0
    %5966 = vmatpush1.bf16.msra.mxu0 %v5784
    %5967 = vmatprep.subr.bf16.mxu0 0
    %5968 = vmatpush1.bf16.msra.mxu0 %v5783
    %5969 = vmatprep.subr.bf16.mxu0 0
    %5970 = vmatpush1.bf16.msra.mxu0 %v5782
    %5971 = vmatprep.subr.bf16.mxu0 0
    %5972 = vmatpush1.bf16.msra.mxu0 %v5781
    %5973 = vmatprep.subr.bf16.mxu0 0
    %5974 = vmatpush2.bf16.msra.mxu0 %v5796
    %5975 = vmatprep.subr.bf16.mxu0 0
    %5976 = vmatpush2.bf16.msra.mxu0 %v5795
    %5977 = vmatprep.subr.bf16.mxu0 0
    %5978 = vmatpush2.bf16.msra.mxu0 %v5794
    %5979 = vmatprep.subr.bf16.mxu0 0
    %5980 = vmatpush2.bf16.msra.mxu0 %v5793
    %5981 = vmatprep.subr.bf16.mxu0 0
    %5982 = vmatpush2.bf16.msra.mxu0 %v5792
    %5983 = vmatprep.subr.bf16.mxu0 0
    %5984 = vmatpush2.bf16.msra.mxu0 %v5791
    %5985 = vmatprep.subr.bf16.mxu0 0
    %5986 = vmatpush2.bf16.msra.mxu0 %v5790
    %5987 = vmatprep.subr.bf16.mxu0 0
    %5988 = vmatpush2.bf16.msra.mxu0 %v5789
    %5989 = vmatprep.mubr.bf16.mxu0 %v5360
    %5990 = vmatmul.mubr.bf16.gmra.mxu0 %v5359
    %v5991 = vpop.f32.mrf.mxu0
    %v5992 = vadd.f32 %v5952, %v5991
    %v5993 = vpop.f32.mrf.mxu0
    %v5994 = vpop.f32.mrf.mxu0
    %v5995 = vpop.f32.mrf.mxu0
    %5996 = vdwg.mxu0
    %5997 = vmatprep.subr.bf16.mxu0 0
    %5998 = vmatpush1.bf16.msra.mxu0 %v5804
    %5999 = vmatprep.subr.bf16.mxu0 0
    %6000 = vmatpush1.bf16.msra.mxu0 %v5803
    %6001 = vmatprep.subr.bf16.mxu0 0
    %6002 = vmatpush1.bf16.msra.mxu0 %v5802
    %6003 = vmatprep.subr.bf16.mxu0 0
    %6004 = vmatpush1.bf16.msra.mxu0 %v5801
    %6005 = vmatprep.subr.bf16.mxu0 0
    %6006 = vmatpush1.bf16.msra.mxu0 %v5800
    %6007 = vmatprep.subr.bf16.mxu0 0
    %6008 = vmatpush1.bf16.msra.mxu0 %v5799
    %6009 = vmatprep.subr.bf16.mxu0 0
    %6010 = vmatpush1.bf16.msra.mxu0 %v5798
    %6011 = vmatprep.subr.bf16.mxu0 0
    %6012 = vmatpush1.bf16.msra.mxu0 %v5797
    %6013 = vmatprep.subr.bf16.mxu0 0
    %6014 = vmatpush2.bf16.msra.mxu0 %v5812
    %6015 = vmatprep.subr.bf16.mxu0 0
    %6016 = vmatpush2.bf16.msra.mxu0 %v5811
    %6017 = vmatprep.subr.bf16.mxu0 0
    %6018 = vmatpush2.bf16.msra.mxu0 %v5810
    %6019 = vmatprep.subr.bf16.mxu0 0
    %6020 = vmatpush2.bf16.msra.mxu0 %v5809
    %6021 = vmatprep.subr.bf16.mxu0 0
    %6022 = vmatpush2.bf16.msra.mxu0 %v5808
    %6023 = vmatprep.subr.bf16.mxu0 0
    %6024 = vmatpush2.bf16.msra.mxu0 %v5807
    %6025 = vmatprep.subr.bf16.mxu0 0
    %6026 = vmatpush2.bf16.msra.mxu0 %v5806
    %6027 = vmatprep.subr.bf16.mxu0 0
    %6028 = vmatpush2.bf16.msra.mxu0 %v5805
    %6029 = vmatprep.mubr.bf16.mxu0 %v5362
    %6030 = vmatmul.mubr.bf16.gmra.mxu0 %v5361
    %v6031 = vpop.f32.mrf.mxu0
    %v6032 = vadd.f32 %v5992, %v6031
    %v6033 = vpop.f32.mrf.mxu0
    %v6034 = vpop.f32.mrf.mxu0
    %v6035 = vpop.f32.mrf.mxu0
    %6036 = vdwg.mxu0
    %vm6037 = vcmask 254976
    %v6038 = vsel %vm6037, %v6032, 0.0
    %v6039 = vrot.slane %v6038, 4
    %v6040 = vadd.f32 %v6038, %v6039
    %v6041 = vrot.slane %v6040, 2
    %v6042 = vadd.f32 %v6040, %v6041
    %v6043 = vrot.slane %v6042, 1
    %v6044 = vadd.f32 %v6042, %v6043
    %v6045 = vmul.f32 %v6044, 0.5
    %v6046 = vsub.f32 %v6032, %v6045
    %v6047 = vmul.f32 %v6046, %v6046
    %v6048 = vsel %vm6037, %v6047, 0.0
    %v6049 = vrot.slane %v6048, 4
    %v6050 = vadd.f32 %v6048, %v6049
    %v6051 = vrot.slane %v6050, 2
    %v6052 = vadd.f32 %v6050, %v6051
    %v6053 = vrot.slane %v6052, 1
    %v6054 = vadd.f32 %v6052, %v6053
    %v6055 = vmul.f32 %v6054, 0.5
    %v6056 = vadd.f32 %v6055, 1e-05
    %v6057 = vrsqrt.pop %v6056
    %v6058 = vmul.f32 %v5491, %v6057
    %v6060 = vlaneseq
    %v6061 = vshrl.u32 %v6060, 7
    %v6062 = vsub.s32 0, %v6061
    %v6063 = vrot.slane %v6058, %v6062
    %v6065 = vmul.f32 %v6046, %v6063
    %v6067 = vlaneseq
    %v6068 = vshrl.u32 %v6067, 7
    %v6069 = vsub.s32 0, %v6068
    %v6070 = vrot.slane %v5492, %v6069
    %v6072 = vadd.f32 %v6065, %v6070
    %v6073 = vmax.f32 %v6072, 0.0
    %v6074 = vpack.c.bf16 %v6073, %v6073
    %v6075 = vld [vmem:[%s10] sm:$0xf]
    %v6076 = vld [vmem:[%s10 + $0x4] sm:$0xf]
    %v6077 = vld [vmem:[%s10 + $0x8] sm:$0xf]
    %v6078 = vld [vmem:[%s10 + $0xc] sm:$0xf]
    %v6079 = vld [vmem:[%s11] sm:$0x1]
    %v6080 = vld [vmem:[%s12] sm:$0x1]
    %v6085 = vunpack.c.l.b16 %v6075
    %v6086 = vunpack.c.l.b16 %v6076
    %v6087 = vunpack.c.l.b16 %v6077
    %v6088 = vunpack.c.l.b16 %v6078
    %v6089 = vpack.c.b16 %v6086, %v6085
    %v6090 = vpack.c.b16 %v6088, %v6087
    %v6094 = vsel %vm920, %v6074, 0
    %6096 = vmatprep.subr.bf16.mxu0 0
    %6097 = vmatpush1.bf16.msra.mxu0 0
    %6098 = vmatprep.subr.bf16.mxu0 0
    %6099 = vmatpush1.bf16.msra.mxu0 0
    %6100 = vmatprep.subr.bf16.mxu0 0
    %6101 = vmatpush1.bf16.msra.mxu0 0
    %6102 = vmatprep.subr.bf16.mxu0 0
    %6103 = vmatpush1.bf16.msra.mxu0 0
    %6104 = vmatprep.subr.bf16.mxu0 0
    %6105 = vmatpush1.bf16.msra.mxu0 0
    %6106 = vmatprep.subr.bf16.mxu0 0
    %6107 = vmatpush1.bf16.msra.mxu0 0
    %6108 = vmatprep.subr.bf16.mxu0 0
    %6109 = vmatpush1.bf16.msra.mxu0 %v6090
    %6110 = vmatprep.subr.bf16.mxu0 0
    %6111 = vmatpush1.bf16.msra.mxu0 %v6089
    %6112 = vmatprep.subr.bf16.mxu0 0
    %6113 = vmatpush2.bf16.msra.mxu0 0
    %6114 = vmatprep.subr.bf16.mxu0 0
    %6115 = vmatpush2.bf16.msra.mxu0 0
    %6116 = vmatprep.subr.bf16.mxu0 0
    %6117 = vmatpush2.bf16.msra.mxu0 0
    %6118 = vmatprep.subr.bf16.mxu0 0
    %6119 = vmatpush2.bf16.msra.mxu0 0
    %6120 = vmatprep.subr.bf16.mxu0 0
    %6121 = vmatpush2.bf16.msra.mxu0 0
    %6122 = vmatprep.subr.bf16.mxu0 0
    %6123 = vmatpush2.bf16.msra.mxu0 0
    %6124 = vmatprep.subr.bf16.mxu0 0
    %6125 = vmatpush2.bf16.msra.mxu0 0
    %6126 = vmatprep.subr.bf16.mxu0 0
    %6127 = vmatpush2.bf16.msra.mxu0 0
    %6128 = vmatprep.mubr.bf16.mxu0 0
    %6129 = vmatmul.mubr.bf16.gmra.mxu0 %v6094
    %v6130 = vpop.f32.mrf.mxu0
    %v6131 = vadd.f32 0.0, %v6130
    %v6132 = vpop.f32.mrf.mxu0
    %v6133 = vpop.f32.mrf.mxu0
    %v6134 = vpop.f32.mrf.mxu0
    %6135 = vdwg.mxu0
    %vm6136 = vcmask 74752
    %v6137 = vsel %vm6136, %v6131, 0.0
    %v6138 = vrot.slane %v6137, 4
    %v6139 = vadd.f32 %v6137, %v6138
    %v6140 = vrot.slane %v6139, 2
    %v6141 = vadd.f32 %v6139, %v6140
    %v6142 = vrot.slane %v6141, 1
    %v6143 = vadd.f32 %v6141, %v6142
    %v6144 = vmul.f32 %v6143, 0.5
    %v6145 = vsub.f32 %v6131, %v6144
    %v6146 = vmul.f32 %v6145, %v6145
    %v6147 = vsel %vm6136, %v6146, 0.0
    %v6148 = vrot.slane %v6147, 4
    %v6149 = vadd.f32 %v6147, %v6148
    %v6150 = vrot.slane %v6149, 2
    %v6151 = vadd.f32 %v6149, %v6150
    %v6152 = vrot.slane %v6151, 1
    %v6153 = vadd.f32 %v6151, %v6152
    %v6154 = vmul.f32 %v6153, 0.5
    %v6155 = vadd.f32 %v6154, 1e-05
    %v6156 = vrsqrt.pop %v6155
    %v6157 = vmul.f32 %v6079, %v6156
    %v6159 = vlaneseq
    %v6160 = vshrl.u32 %v6159, 7
    %v6161 = vsub.s32 0, %v6160
    %v6162 = vrot.slane %v6157, %v6161
    %v6164 = vmul.f32 %v6145, %v6162
    %v6166 = vlaneseq
    %v6167 = vshrl.u32 %v6166, 7
    %v6168 = vsub.s32 0, %v6167
    %v6169 = vrot.slane %v6080, %v6168
    %v6171 = vadd.f32 %v6164, %v6169
    %6172 = vst.msk [vmem:[#allocation3] sm:$0x3] %vm6136, %v6171
    // Predicated region
    $region54: #{forward.1} parent=1 // pred_check
      _
    $region55: #{forward.1} parent=1 // pred_check_branch
      %6174 = sbr.rel (0) target = $region57
    $region56: #{forward.1} parent=1 // pred_region
      %s6176 = ssub.s32 32, 32
      %6177 = vsyncadd [#allocation4], %s6176
      %s6179 = sshll.u32 [#allocation3], 4
      %s6180 = int_to_ptr.vmem [resolvable:$true] %s6179
      %6182 = dma.vmem_to_hbm [thread:$0]  %s6180, 32, %s13, [#allocation4]
    $region57: #{forward.1} parent=1 // pred_fallthru
      _
    // Predicated region
    $region58: #{forward.1} parent=1 // pred_check
      _
    $region59: #{forward.1} parent=1 // pred_check_branch
      %6184 = sbr.rel (0) target = $region61
    $region60: #{forward.1} parent=1 // pred_region
      %6185 = dma.done [#allocation4], 32
    $region61: #{forward.1} parent=1 // pred_fallthru
      _
    %6186 = vsyncpa [#allocation4], 1

</llo_original>
